<compile_context>
chip_gen: v7x
topology: tpu7x:2x2x1
jax: 0.10.0
libtpu: 0.0.40
codegen_flags: <defaults>
</compile_context>

<pallas_src>
import jax
import jax.numpy as jnp
from jax.experimental import pallas as pl
from jax.experimental.pallas import tpu as pltpu

D = 32          # in_features = n_heads * head_out_feats
H = 4           # attention heads (GATConv heads == GTConv num_heads)
C = D // H      # per-head width (head_out_feats == hidden_dim // num_heads)
EPS_LN = 1e-5


# ----------------------------- in-kernel helpers -----------------------------
def _mm(a, b):
    return jnp.dot(a, b, preferred_element_type=jnp.float32)


def _scatter_add(seg, vals):
    # seg: (E, N) one-hot rows, vals: (E, F)  ->  (N, F) segment sum.
    # Contract on the edge axis so no transposed incidence matrix is needed.
    return jax.lax.dot_general(seg, vals, (((0,), (0,)), ((), ())),
                               preferred_element_type=jnp.float32)


def _elu(x):
    return jnp.where(x > 0, x, jnp.exp(x) - 1.0)


def _leaky_relu(x, slope):
    return jnp.where(x >= 0, x, slope * x)


def _layernorm(x, w, b):
    # torch.nn.LayerNorm over the feature dim, biased variance, eps=1e-5
    mu = jnp.mean(x, axis=-1, keepdims=True)
    xc = x - mu
    var = jnp.mean(xc * xc, axis=-1, keepdims=True)
    return xc / jnp.sqrt(var + EPS_LN) * w + b


def _segment_softmax(logits, sdst):
    # PyG-style softmax grouped by destination node, all heads at once.
    # logits: (E, H) per-edge / per-head scores, sdst: (E, N) one-hot dst.
    stab = jnp.max(logits, axis=0, keepdims=True)        # (1, H) per-head max
    ex = jnp.exp(logits - stab)                           # (E, H)
    node_sum = _scatter_add(sdst, ex)                     # (N, H) per-dst sums
    edge_sum = _mm(sdst, node_sum)                        # (E, H) gather at dst
    return ex / (edge_sum + 1e-16)


# --------------------------------- the kernel --------------------------------
def mvn_ddi_kernel(x_ref, ea_ref, ssrcg_ref, sdstg_ref, ssrc_ref, sdst_ref,
                   wqkvg_ref, wm_ref, hexp_ref, vv_ref,
                   node_out_ref, edge_out_ref):
    x = x_ref[...]                      # (N, D)
    ea = ea_ref[...]                    # (E, D)
    Ssrc_g = ssrcg_ref[...]             # (Eg, N) GAT edges (with self loops)
    Sdst_g = sdstg_ref[...]             # (Eg, N)
    Ssrc = ssrc_ref[...]                # (E, N)  GTConv edges
    Sdst = sdst_ref[...]                # (E, N)
    Wqkvg = wqkvg_ref[...]              # (D, 4D) fused [WQ | WK | WV | Wgate]
    hexp = hexp_ref[...]                # (H, D)  head-indicator matrix
    vv = vv_ref[...]                    # (20, D) biases / norm params, loaded once

    W = lambda i: wm_ref[i]             # (D, D) weight matrices, stored (in, out)
    V = lambda i: vv[i:i + 1, :]        # (1, D) register-level row select

    # --------------- GATConv(in=D, out=C, heads=H, concat) + ELU ---------------
    xg = _mm(x, W(0))                                     # lin(x), no bias
    a_sd = _mm(xg, W(8))                  # (N, D): cols [0:H]=a_src, [H:2H]=a_dst
    a_j = _mm(Ssrc_g, a_sd)                               # gather at src
    a_i = _mm(Sdst_g, a_sd)                               # gather at dst
    logits = _leaky_relu(a_j[:, 0:H] + a_i[:, H:2 * H], 0.2)
    alpha_g = _segment_softmax(logits, Sdst_g)            # (Eg, H)
    xj = _mm(Ssrc_g, xg)                                  # (Eg, D)
    msg = xj * _mm(alpha_g, hexp)                         # per-head alpha bcast
    x1 = _elu(_scatter_add(Sdst_g, msg) + V(0))           # sum-aggr + bias, ELU

    # ---------- GTConv(D, D, D, heads=4, gate=True, norm='ln', aggr=sum) -------
    inv_sqrt_dk = 1.0 / jnp.sqrt(jnp.float32(C))
    qkvg = _mm(x1, Wqkvg)                                 # (N, 4D) = [Q|K|V|G]
    qkvg_i = _mm(Sdst, qkvg)                              # (E, 4D) gather at dst
    qkvg_j = _mm(Ssrc, qkvg)                              # (E, 4D) gather at src
    Qi = qkvg_i[:, 0:D]
    Kj = qkvg_j[:, D:2 * D]
    Vj = qkvg_j[:, 2 * D:3 * D]
    Gj = qkvg_j[:, 3 * D:4 * D] + V(4)    # n_gate bias commutes with one-hot gather
    Eproj = _mm(ea, W(1)) + V(2)                          # WE(edge_attr)

    qk = Qi * Kj
    eij = Eproj * qk * inv_sqrt_dk                        # self._eij
    # NOTE: the reference's e_gate multiply on qijk is dead code (qijk is
    # overwritten right after), so no edge gate is applied here either.
    logits2 = jax.lax.dot_general(                        # per-head sum of qk
        qk, hexp, (((1,), (1,)), ((), ())),
        preferred_element_type=jnp.float32) * inv_sqrt_dk  # (E, H)
    alpha2 = _segment_softmax(logits2, Sdst)              # (E, H)
    msg2 = _mm(alpha2, hexp) * (Vj * jax.nn.sigmoid(Gj))  # (E, D)
    agg = _scatter_add(Sdst, msg2)                        # (N, D) sum-aggregate

    # atom_weights: scatter_add over src nodes of alpha.mean(heads)
    aw = jnp.mean(_scatter_add(Ssrc, alpha2), axis=1, keepdims=True)   # (N, 1)

    # node branch
    out = _mm(agg, W(2)) + V(1) + x1                      # WO + residual
    out = _layernorm(out, V(10), V(11))                   # norm1
    ffn_in = out
    hmid = jnp.maximum(_mm(out, W(4)) + V(6), 0.0)        # MLP hidden + ReLU
    out = _layernorm(ffn_in + _mm(hmid, W(5)) + V(7), V(12), V(13))   # norm2

    # edge branch
    oe = _mm(eij, W(3)) + V(3) + ea                       # WOe + residual
    oe = _layernorm(oe, V(14), V(15))                     # norm1e
    ffn_e_in = oe
    hmid_e = jnp.maximum(_mm(oe, W(6)) + V(8), 0.0)
    oe = _layernorm(ffn_e_in + _mm(hmid_e, W(7)) + V(9), V(16), V(17))  # norm2e
    edge_out_ref[...] = oe

    # ---- PyG graph-mode LayerNorm (batch == all zeros: one graph) + ELU -------
    # TODO(synk): multi-graph batches would need per-graph segment statistics.
    cnt = jnp.float32(out.shape[0] * out.shape[1])
    mean = jnp.sum(out, keepdims=True) / cnt              # (1, 1)
    xc = out - mean
    var = jnp.sum(xc * xc, keepdims=True) / cnt
    xn = xc / jnp.sqrt(var + EPS_LN)
    x_final = _elu(xn * V(18) + V(19))                    # (N, D)

    # single lane-dense 64-wide store: [node features | atom_weights broadcast]
    node_out_ref[...] = jnp.concatenate(
        [x_final, jnp.broadcast_to(aw, x_final.shape)], axis=-1)


# --------------------------------- glue / wrapper -----------------------------
def _incidence(edge_index, n_nodes):
    src, dst = edge_index[0], edge_index[1]
    loop = jnp.arange(n_nodes, dtype=src.dtype)
    src_g = jnp.concatenate([src, loop])      # GATConv adds one self loop/node
    dst_g = jnp.concatenate([dst, loop])
    oh = lambda idx: jax.nn.one_hot(idx, n_nodes, dtype=jnp.float32)
    return oh(src_g), oh(dst_g), oh(src), oh(dst)


def mvn_ddi_block_forward(params, h_graph, t_graph):
    (hx, hei, hea) = h_graph
    (tx, tei, tea) = t_graph
    assert hx.shape == tx.shape and hea.shape == tea.shape, \
        "head/tail graphs must be padded to the same (N, E) to fuse the call"
    N = hx.shape[0]
    E = hea.shape[0]

    xs = jnp.stack([hx, tx])                               # (2, N, D)
    eas = jnp.stack([hea, tea])                            # (2, E, D)
    h_mats = _incidence(hei, N)
    t_mats = _incidence(tei, N)
    Ssrc_g, Sdst_g, Ssrc, Sdst = [jnp.stack([hm, tm])
                                  for hm, tm in zip(h_mats, t_mats)]

    def graph_spec(shape):                 # per-graph input, squeeze graph axis
        n_rest = len(shape) - 1
        return pl.BlockSpec((None,) + tuple(shape[1:]),
                            lambda g, _n=n_rest: (g,) + (0,) * _n)

    def shared_spec(shape):                # parameters shared by both graphs
        return pl.BlockSpec(tuple(shape),
                            lambda g, _n=len(shape): (0,) * _n)

    args = (xs, eas, Ssrc_g, Sdst_g, Ssrc, Sdst,
            params["w_qkvg"], params["wm"], params["hexp"], params["vv"])

    out_shape = (jax.ShapeDtypeStruct((2, N, 2 * D), jnp.float32),
                 jax.ShapeDtypeStruct((2, E, D), jnp.float32))

    fn = pl.pallas_call(
        mvn_ddi_kernel,
        out_shape=out_shape,
        grid=(2,),
        in_specs=[graph_spec(xs.shape), graph_spec(eas.shape),
                  graph_spec(Ssrc_g.shape), graph_spec(Sdst_g.shape),
                  graph_spec(Ssrc.shape), graph_spec(Sdst.shape),
                  shared_spec(params["w_qkvg"].shape),
                  shared_spec(params["wm"].shape),
                  shared_spec(params["hexp"].shape),
                  shared_spec(params["vv"].shape)],
        out_specs=(graph_spec((2, N, 2 * D)), graph_spec((2, E, D))),
        compiler_params=pltpu.CompilerParams(
            dimension_semantics=("parallel",)),   # 2 TCs on v7x, serial elsewhere
    )
    node_slab, e_out = fn(*args)
    x_out = node_slab[:, :, :D]
    aw = node_slab[:, :, D]                               # any of cols D..2D-1
    return (x_out[0], e_out[0], aw[0]), (x_out[1], e_out[1], aw[1])


def make_params(key):
    ks = jax.random.split(key, 5)
    # 9 (D, D) weight matrices stored as (in, out):
    # 0 gat_lin | 1 WE | 2 WO | 3 WOe | 4 ffn.l0 | 5 ffn.l1 | 6 ffn_e.l0 | 7 ffn_e.l1
    # 8 fused GAT attention (padded): cols [0:H]=att_src/head, [H:2H]=att_dst/head
    wmats = jax.random.normal(ks[0], (8, D, D), jnp.float32) * 0.1
    att_src = jax.random.normal(ks[2], (H, C), jnp.float32) * 0.1
    att_dst = jax.random.normal(ks[3], (H, C), jnp.float32) * 0.1
    head_of = jnp.arange(D) // C
    head_mask = (head_of[:, None] == jnp.arange(H)[None, :]).astype(jnp.float32)
    att_pad = jnp.zeros((D, D), jnp.float32)
    att_pad = att_pad.at[:, 0:H].set(head_mask * att_src.reshape(-1)[:, None])
    att_pad = att_pad.at[:, H:2 * H].set(head_mask * att_dst.reshape(-1)[:, None])
    wm = jnp.concatenate([wmats, att_pad[None]], axis=0)          # (9, D, D)

    # fused GTConv projections [WQ | WK | WV | n_gate], stored (in, out)
    w_qkvg = jax.random.normal(ks[1], (D, 4 * D), jnp.float32) * 0.1

    # head indicator (H, D): hexp[h, d] = 1 if feature d belongs to head h
    hexp = head_mask.T

    # 20 bias / norm vectors:
    # 0 gat_b | 1 WO_b | 2 WE_b | 3 WOe_b | 4 ngate_b | 5 egate_b (dead in fwd)
    # 6 ffn0_b | 7 ffn1_b | 8 ffne0_b | 9 ffne1_b
    # 10/11 norm1 w,b | 12/13 norm2 w,b | 14/15 norm1e w,b | 16/17 norm2e w,b
    # 18/19 block graph-LayerNorm w,b
    vv = jnp.zeros((20, D), jnp.float32)
    vv = vv.at[0:10].set(jax.random.normal(ks[4], (10, D), jnp.float32) * 0.05)
    for i in (10, 12, 14, 16, 18):                # LayerNorm weights -> ones
        vv = vv.at[i].set(1.0)
    return dict(wm=wm, w_qkvg=w_qkvg, hexp=hexp, vv=vv)


if __name__ == "__main__":
    key = jax.random.PRNGKey(0)
    kp, kh, kt = jax.random.split(key, 3)
    params = make_params(kp)

    N, E = 10, 16   # small molecule-like graphs (same padded size for h and t)

    def make_graph(k):
        k1, k2, k3, k4 = jax.random.split(k, 4)
        x = jax.random.normal(k1, (N, D), jnp.float32)
        src = jax.random.randint(k2, (E,), 0, N)
        off = jax.random.randint(k3, (E,), 1, N)
        dst = (src + off) % N                     # guaranteed no self loops
        edge_index = jnp.stack([src, dst])
        edge_attr = jax.random.normal(k4, (E, D), jnp.float32)
        return x, edge_index, edge_attr

    h_graph = make_graph(kh)
    t_graph = make_graph(kt)

    (hx, he, haw), (tx, te, taw) = mvn_ddi_block_forward(params, h_graph, t_graph)
    jax.block_until_ready((hx, he, haw, tx, te, taw))
    print("KERNEL_OK")
</pallas_src>

<mosaic_0001>
module attributes {stable_mosaic.version = 11 : i64} {
  func.func @mvn_ddi_kernel(%arg0: i32, %arg1: memref<1x10x32xf32, #tpu.memory_space<vmem>>, %arg2: memref<1x16x32xf32, #tpu.memory_space<vmem>>, %arg3: memref<1x26x10xf32, #tpu.memory_space<vmem>>, %arg4: memref<1x26x10xf32, #tpu.memory_space<vmem>>, %arg5: memref<1x16x10xf32, #tpu.memory_space<vmem>>, %arg6: memref<1x16x10xf32, #tpu.memory_space<vmem>>, %arg7: memref<32x128xf32, #tpu.memory_space<vmem>>, %arg8: memref<9x32x32xf32, #tpu.memory_space<vmem>>, %arg9: memref<4x32xf32, #tpu.memory_space<vmem>>, %arg10: memref<20x32xf32, #tpu.memory_space<vmem>>, %arg11: memref<1x10x64xf32, #tpu.memory_space<vmem>>, %arg12: memref<1x16x32xf32, #tpu.memory_space<vmem>>) attributes {dimension_semantics = [#tpu.dimension_semantics<parallel>], iteration_bounds = array<i64: 2>, scalar_prefetch = 0 : i64, scratch_operands = 0 : i64, tpu.core_type = #tpu.core_type<tc>, window_params = [{transform_indices = @transform_0, window_bounds = array<i64: 1, 10, 32>}, {transform_indices = @transform_1, window_bounds = array<i64: 1, 16, 32>}, {transform_indices = @transform_2, window_bounds = array<i64: 1, 26, 10>}, {transform_indices = @transform_3, window_bounds = array<i64: 1, 26, 10>}, {transform_indices = @transform_4, window_bounds = array<i64: 1, 16, 10>}, {transform_indices = @transform_5, window_bounds = array<i64: 1, 16, 10>}, {pipeline_mode = #tpu.pipeline_mode<synchronous>, transform_indices = @transform_6, window_bounds = array<i64: 32, 128>}, {pipeline_mode = #tpu.pipeline_mode<synchronous>, transform_indices = @transform_7, window_bounds = array<i64: 9, 32, 32>}, {pipeline_mode = #tpu.pipeline_mode<synchronous>, transform_indices = @transform_8, window_bounds = array<i64: 4, 32>}, {pipeline_mode = #tpu.pipeline_mode<synchronous>, transform_indices = @transform_9, window_bounds = array<i64: 20, 32>}, {transform_indices = @transform_10, window_bounds = array<i64: 1, 10, 64>}, {transform_indices = @transform_11, window_bounds = array<i64: 1, 16, 32>}]} {
    %c0 = arith.constant 0 : index
    %c0_0 = arith.constant 0 : index
    %c0_1 = arith.constant 0 : index
    %0 = vector.load %arg1[%c0, %c0_0, %c0_1] : memref<1x10x32xf32, #tpu.memory_space<vmem>>, vector<1x10x32xf32>
    %1 = vector.shape_cast %0 : vector<1x10x32xf32> to vector<10x32xf32>
    %c0_2 = arith.constant 0 : index
    %c0_3 = arith.constant 0 : index
    %c0_4 = arith.constant 0 : index
    %2 = vector.load %arg2[%c0_2, %c0_3, %c0_4] : memref<1x16x32xf32, #tpu.memory_space<vmem>>, vector<1x16x32xf32>
    %3 = vector.shape_cast %2 : vector<1x16x32xf32> to vector<16x32xf32>
    %c0_5 = arith.constant 0 : index
    %c0_6 = arith.constant 0 : index
    %c0_7 = arith.constant 0 : index
    %4 = vector.load %arg3[%c0_5, %c0_6, %c0_7] : memref<1x26x10xf32, #tpu.memory_space<vmem>>, vector<1x26x10xf32>
    %5 = vector.shape_cast %4 : vector<1x26x10xf32> to vector<26x10xf32>
    %c0_8 = arith.constant 0 : index
    %c0_9 = arith.constant 0 : index
    %c0_10 = arith.constant 0 : index
    %6 = vector.load %arg4[%c0_8, %c0_9, %c0_10] : memref<1x26x10xf32, #tpu.memory_space<vmem>>, vector<1x26x10xf32>
    %7 = vector.shape_cast %6 : vector<1x26x10xf32> to vector<26x10xf32>
    %c0_11 = arith.constant 0 : index
    %c0_12 = arith.constant 0 : index
    %c0_13 = arith.constant 0 : index
    %8 = vector.load %arg5[%c0_11, %c0_12, %c0_13] : memref<1x16x10xf32, #tpu.memory_space<vmem>>, vector<1x16x10xf32>
    %9 = vector.shape_cast %8 : vector<1x16x10xf32> to vector<16x10xf32>
    %c0_14 = arith.constant 0 : index
    %c0_15 = arith.constant 0 : index
    %c0_16 = arith.constant 0 : index
    %10 = vector.load %arg6[%c0_14, %c0_15, %c0_16] : memref<1x16x10xf32, #tpu.memory_space<vmem>>, vector<1x16x10xf32>
    %11 = vector.shape_cast %10 : vector<1x16x10xf32> to vector<16x10xf32>
    %c0_17 = arith.constant 0 : index
    %c0_18 = arith.constant 0 : index
    %12 = vector.load %arg7[%c0_17, %c0_18] : memref<32x128xf32, #tpu.memory_space<vmem>>, vector<32x128xf32>
    %c0_19 = arith.constant 0 : index
    %c0_20 = arith.constant 0 : index
    %13 = vector.load %arg9[%c0_19, %c0_20] : memref<4x32xf32, #tpu.memory_space<vmem>>, vector<4x32xf32>
    %c0_21 = arith.constant 0 : index
    %c0_22 = arith.constant 0 : index
    %14 = vector.load %arg10[%c0_21, %c0_22] : memref<20x32xf32, #tpu.memory_space<vmem>>, vector<20x32xf32>
    %c0_23 = arith.constant 0 : index
    %c0_24 = arith.constant 0 : index
    %c0_25 = arith.constant 0 : index
    %15 = vector.load %arg8[%c0_23, %c0_24, %c0_25] : memref<9x32x32xf32, #tpu.memory_space<vmem>>, vector<1x32x32xf32>
    %16 = vector.shape_cast %15 : vector<1x32x32xf32> to vector<32x32xf32>
    %cst = arith.constant dense<0.000000e+00> : vector<10x32xf32>
    %17 = tpu.matmul %1, %16, %cst {dimension_numbers = #tpu.dot_dimension_numbers<[1], [0], [0], [1], [0, 0, 1, 1], [], []>} : vector<10x32xf32>, vector<32x32xf32>, vector<10x32xf32> -> vector<10x32xf32>
    %c8 = arith.constant 8 : index
    %c0_26 = arith.constant 0 : index
    %c0_27 = arith.constant 0 : index
    %18 = vector.load %arg8[%c8, %c0_26, %c0_27] : memref<9x32x32xf32, #tpu.memory_space<vmem>>, vector<1x32x32xf32>
    %19 = vector.shape_cast %18 : vector<1x32x32xf32> to vector<32x32xf32>
    %cst_28 = arith.constant dense<0.000000e+00> : vector<10x32xf32>
    %20 = tpu.matmul %17, %19, %cst_28 {dimension_numbers = #tpu.dot_dimension_numbers<[1], [0], [0], [1], [0, 0, 1, 1], [], []>} : vector<10x32xf32>, vector<32x32xf32>, vector<10x32xf32> -> vector<10x32xf32>
    %cst_29 = arith.constant dense<0.000000e+00> : vector<26x32xf32>
    %21 = tpu.matmul %5, %20, %cst_29 {dimension_numbers = #tpu.dot_dimension_numbers<[1], [0], [0], [1], [0, 0, 1, 1], [], []>} : vector<26x10xf32>, vector<10x32xf32>, vector<26x32xf32> -> vector<26x32xf32>
    %cst_30 = arith.constant dense<0.000000e+00> : vector<26x32xf32>
    %22 = tpu.matmul %7, %20, %cst_30 {dimension_numbers = #tpu.dot_dimension_numbers<[1], [0], [0], [1], [0, 0, 1, 1], [], []>} : vector<26x10xf32>, vector<10x32xf32>, vector<26x32xf32> -> vector<26x32xf32>
    %23 = vector.extract_strided_slice %21 {offsets = [0, 0], sizes = [26, 4], strides = [1, 1]} : vector<26x32xf32> to vector<26x4xf32>
    %24 = vector.extract_strided_slice %22 {offsets = [0, 4], sizes = [26, 4], strides = [1, 1]} : vector<26x32xf32> to vector<26x4xf32>
    %25 = arith.addf %23, %24 : vector<26x4xf32>
    %cst_31 = arith.constant 0.000000e+00 : f32
    %26 = vector.broadcast %cst_31 : f32 to vector<26x4xf32>
    %27 = arith.cmpf oge, %25, %26 : vector<26x4xf32>
    %cst_32 = arith.constant 2.000000e-01 : f32
    %28 = vector.broadcast %cst_32 : f32 to vector<26x4xf32>
    %29 = arith.mulf %28, %25 : vector<26x4xf32>
    %30 = arith.select %27, %25, %29 : vector<26x4xi1>, vector<26x4xf32>
    %cst_33 = arith.constant dense<0xFF800000> : vector<4xf32>
    %31 = vector.multi_reduction <maximumf>, %30, %cst_33 [0] : vector<26x4xf32> to vector<4xf32>
    %32 = vector.shape_cast %31 : vector<4xf32> to vector<1x4xf32>
    %33 = vector.broadcast %32 : vector<1x4xf32> to vector<26x4xf32>
    %34 = arith.subf %30, %33 : vector<26x4xf32>
    %35 = math.exp %34 : vector<26x4xf32>
    %cst_34 = arith.constant dense<0.000000e+00> : vector<10x4xf32>
    %36 = tpu.matmul %7, %35, %cst_34 {dimension_numbers = #tpu.dot_dimension_numbers<[0], [0], [1], [1], [0, 1, 1, 1], [], []>} : vector<26x10xf32>, vector<26x4xf32>, vector<10x4xf32> -> vector<10x4xf32>
    %cst_35 = arith.constant dense<0.000000e+00> : vector<26x4xf32>
    %37 = tpu.matmul %7, %36, %cst_35 {dimension_numbers = #tpu.dot_dimension_numbers<[1], [0], [0], [1], [0, 0, 1, 1], [], []>} : vector<26x10xf32>, vector<10x4xf32>, vector<26x4xf32> -> vector<26x4xf32>
    %cst_36 = arith.constant 1.000000e-16 : f32
    %38 = vector.broadcast %cst_36 : f32 to vector<26x4xf32>
    %39 = arith.addf %37, %38 : vector<26x4xf32>
    %40 = arith.divf %35, %39 : vector<26x4xf32>
    %cst_37 = arith.constant dense<0.000000e+00> : vector<26x32xf32>
    %41 = tpu.matmul %5, %17, %cst_37 {dimension_numbers = #tpu.dot_dimension_numbers<[1], [0], [0], [1], [0, 0, 1, 1], [], []>} : vector<26x10xf32>, vector<10x32xf32>, vector<26x32xf32> -> vector<26x32xf32>
    %cst_38 = arith.constant dense<0.000000e+00> : vector<26x32xf32>
    %42 = tpu.matmul %40, %13, %cst_38 {dimension_numbers = #tpu.dot_dimension_numbers<[1], [0], [0], [1], [0, 0, 1, 1], [], []>} : vector<26x4xf32>, vector<4x32xf32>, vector<26x32xf32> -> vector<26x32xf32>
    %43 = arith.mulf %41, %42 : vector<26x32xf32>
    %cst_39 = arith.constant dense<0.000000e+00> : vector<10x32xf32>
    %44 = tpu.matmul %7, %43, %cst_39 {dimension_numbers = #tpu.dot_dimension_numbers<[0], [0], [1], [1], [0, 1, 1, 1], [], []>} : vector<26x10xf32>, vector<26x32xf32>, vector<10x32xf32> -> vector<10x32xf32>
    %45 = vector.extract_strided_slice %14 {offsets = [0, 0], sizes = [1, 32], strides = [1, 1]} : vector<20x32xf32> to vector<1x32xf32>
    %46 = vector.broadcast %45 : vector<1x32xf32> to vector<10x32xf32>
    %47 = arith.addf %44, %46 : vector<10x32xf32>
    %cst_40 = arith.constant 0.000000e+00 : f32
    %48 = vector.broadcast %cst_40 : f32 to vector<10x32xf32>
    %49 = arith.cmpf ogt, %47, %48 : vector<10x32xf32>
    %50 = math.exp %47 : vector<10x32xf32>
    %cst_41 = arith.constant 1.000000e+00 : f32
    %51 = vector.broadcast %cst_41 : f32 to vector<10x32xf32>
    %52 = arith.subf %50, %51 : vector<10x32xf32>
    %53 = arith.select %49, %47, %52 : vector<10x32xi1>, vector<10x32xf32>
    %cst_42 = arith.constant 8.000000e+00 : f32
    %54 = math.sqrt %cst_42 : f32
    %cst_43 = arith.constant 1.000000e+00 : f32
    %55 = arith.divf %cst_43, %54 : f32
    %cst_44 = arith.constant dense<0.000000e+00> : vector<10x128xf32>
    %56 = tpu.matmul %53, %12, %cst_44 {dimension_numbers = #tpu.dot_dimension_numbers<[1], [0], [0], [1], [0, 0, 1, 1], [], []>} : vector<10x32xf32>, vector<32x128xf32>, vector<10x128xf32> -> vector<10x128xf32>
    %cst_45 = arith.constant dense<0.000000e+00> : vector<16x128xf32>
    %57 = tpu.matmul %11, %56, %cst_45 {dimension_numbers = #tpu.dot_dimension_numbers<[1], [0], [0], [1], [0, 0, 1, 1], [], []>} : vector<16x10xf32>, vector<10x128xf32>, vector<16x128xf32> -> vector<16x128xf32>
    %cst_46 = arith.constant dense<0.000000e+00> : vector<16x128xf32>
    %58 = tpu.matmul %9, %56, %cst_46 {dimension_numbers = #tpu.dot_dimension_numbers<[1], [0], [0], [1], [0, 0, 1, 1], [], []>} : vector<16x10xf32>, vector<10x128xf32>, vector<16x128xf32> -> vector<16x128xf32>
    %59 = vector.extract_strided_slice %57 {offsets = [0, 0], sizes = [16, 32], strides = [1, 1]} : vector<16x128xf32> to vector<16x32xf32>
    %60 = vector.extract_strided_slice %58 {offsets = [0, 32], sizes = [16, 32], strides = [1, 1]} : vector<16x128xf32> to vector<16x32xf32>
    %61 = vector.extract_strided_slice %58 {offsets = [0, 64], sizes = [16, 32], strides = [1, 1]} : vector<16x128xf32> to vector<16x32xf32>
    %62 = vector.extract_strided_slice %58 {offsets = [0, 96], sizes = [16, 32], strides = [1, 1]} : vector<16x128xf32> to vector<16x32xf32>
    %63 = vector.extract_strided_slice %14 {offsets = [4, 0], sizes = [1, 32], strides = [1, 1]} : vector<20x32xf32> to vector<1x32xf32>
    %64 = vector.broadcast %63 : vector<1x32xf32> to vector<16x32xf32>
    %65 = arith.addf %62, %64 : vector<16x32xf32>
    %c1 = arith.constant 1 : index
    %c0_47 = arith.constant 0 : index
    %c0_48 = arith.constant 0 : index
    %66 = vector.load %arg8[%c1, %c0_47, %c0_48] : memref<9x32x32xf32, #tpu.memory_space<vmem>>, vector<1x32x32xf32>
    %67 = vector.shape_cast %66 : vector<1x32x32xf32> to vector<32x32xf32>
    %cst_49 = arith.constant dense<0.000000e+00> : vector<16x32xf32>
    %68 = tpu.matmul %3, %67, %cst_49 {dimension_numbers = #tpu.dot_dimension_numbers<[1], [0], [0], [1], [0, 0, 1, 1], [], []>} : vector<16x32xf32>, vector<32x32xf32>, vector<16x32xf32> -> vector<16x32xf32>
    %69 = vector.extract_strided_slice %14 {offsets = [2, 0], sizes = [1, 32], strides = [1, 1]} : vector<20x32xf32> to vector<1x32xf32>
    %70 = vector.broadcast %69 : vector<1x32xf32> to vector<16x32xf32>
    %71 = arith.addf %68, %70 : vector<16x32xf32>
    %72 = arith.mulf %59, %60 : vector<16x32xf32>
    %73 = arith.mulf %71, %72 : vector<16x32xf32>
    %74 = vector.broadcast %55 : f32 to vector<16x32xf32>
    %75 = arith.mulf %73, %74 : vector<16x32xf32>
    %cst_50 = arith.constant dense<0.000000e+00> : vector<16x4xf32>
    %76 = tpu.matmul %72, %13, %cst_50 {dimension_numbers = #tpu.dot_dimension_numbers<[1], [1], [0], [0], [0, 0, 1, 0], [], []>} : vector<16x32xf32>, vector<4x32xf32>, vector<16x4xf32> -> vector<16x4xf32>
    %77 = vector.broadcast %55 : f32 to vector<16x4xf32>
    %78 = arith.mulf %76, %77 : vector<16x4xf32>
    %cst_51 = arith.constant dense<0xFF800000> : vector<4xf32>
    %79 = vector.multi_reduction <maximumf>, %78, %cst_51 [0] : vector<16x4xf32> to vector<4xf32>
    %80 = vector.shape_cast %79 : vector<4xf32> to vector<1x4xf32>
    %81 = vector.broadcast %80 : vector<1x4xf32> to vector<16x4xf32>
    %82 = arith.subf %78, %81 : vector<16x4xf32>
    %83 = math.exp %82 : vector<16x4xf32>
    %cst_52 = arith.constant dense<0.000000e+00> : vector<10x4xf32>
    %84 = tpu.matmul %11, %83, %cst_52 {dimension_numbers = #tpu.dot_dimension_numbers<[0], [0], [1], [1], [0, 1, 1, 1], [], []>} : vector<16x10xf32>, vector<16x4xf32>, vector<10x4xf32> -> vector<10x4xf32>
    %cst_53 = arith.constant dense<0.000000e+00> : vector<16x4xf32>
    %85 = tpu.matmul %11, %84, %cst_53 {dimension_numbers = #tpu.dot_dimension_numbers<[1], [0], [0], [1], [0, 0, 1, 1], [], []>} : vector<16x10xf32>, vector<10x4xf32>, vector<16x4xf32> -> vector<16x4xf32>
    %cst_54 = arith.constant 1.000000e-16 : f32
    %86 = vector.broadcast %cst_54 : f32 to vector<16x4xf32>
    %87 = arith.addf %85, %86 : vector<16x4xf32>
    %88 = arith.divf %83, %87 : vector<16x4xf32>
    %cst_55 = arith.constant dense<0.000000e+00> : vector<16x32xf32>
    %89 = tpu.matmul %88, %13, %cst_55 {dimension_numbers = #tpu.dot_dimension_numbers<[1], [0], [0], [1], [0, 0, 1, 1], [], []>} : vector<16x4xf32>, vector<4x32xf32>, vector<16x32xf32> -> vector<16x32xf32>
    %90 = arith.negf %65 : vector<16x32xf32>
    %91 = math.exp %90 : vector<16x32xf32>
    %cst_56 = arith.constant 1.000000e+00 : f32
    %92 = vector.broadcast %cst_56 : f32 to vector<16x32xf32>
    %93 = arith.addf %92, %91 : vector<16x32xf32>
    %94 = arith.divf %92, %93 : vector<16x32xf32>
    %95 = arith.mulf %61, %94 : vector<16x32xf32>
    %96 = arith.mulf %89, %95 : vector<16x32xf32>
    %cst_57 = arith.constant dense<0.000000e+00> : vector<10x32xf32>
    %97 = tpu.matmul %11, %96, %cst_57 {dimension_numbers = #tpu.dot_dimension_numbers<[0], [0], [1], [1], [0, 1, 1, 1], [], []>} : vector<16x10xf32>, vector<16x32xf32>, vector<10x32xf32> -> vector<10x32xf32>
    %cst_58 = arith.constant dense<0.000000e+00> : vector<10x4xf32>
    %98 = tpu.matmul %9, %88, %cst_58 {dimension_numbers = #tpu.dot_dimension_numbers<[0], [0], [1], [1], [0, 1, 1, 1], [], []>} : vector<16x10xf32>, vector<16x4xf32>, vector<10x4xf32> -> vector<10x4xf32>
    %cst_59 = arith.constant dense<0.000000e+00> : vector<10xf32>
    %99 = vector.multi_reduction <add>, %98, %cst_59 [1] : vector<10x4xf32> to vector<10xf32>
    %100 = vector.shape_cast %99 : vector<10xf32> to vector<10x1xf32>
    %cst_60 = arith.constant 4.000000e+00 : f32
    %101 = vector.broadcast %cst_60 : f32 to vector<10x1xf32>
    %102 = arith.divf %100, %101 : vector<10x1xf32>
    %c2 = arith.constant 2 : index
    %c0_61 = arith.constant 0 : index
    %c0_62 = arith.constant 0 : index
    %103 = vector.load %arg8[%c2, %c0_61, %c0_62] : memref<9x32x32xf32, #tpu.memory_space<vmem>>, vector<1x32x32xf32>
    %104 = vector.shape_cast %103 : vector<1x32x32xf32> to vector<32x32xf32>
    %cst_63 = arith.constant dense<0.000000e+00> : vector<10x32xf32>
    %105 = tpu.matmul %97, %104, %cst_63 {dimension_numbers = #tpu.dot_dimension_numbers<[1], [0], [0], [1], [0, 0, 1, 1], [], []>} : vector<10x32xf32>, vector<32x32xf32>, vector<10x32xf32> -> vector<10x32xf32>
    %106 = vector.extract_strided_slice %14 {offsets = [1, 0], sizes = [1, 32], strides = [1, 1]} : vector<20x32xf32> to vector<1x32xf32>
    %107 = vector.broadcast %106 : vector<1x32xf32> to vector<10x32xf32>
    %108 = arith.addf %105, %107 : vector<10x32xf32>
    %109 = arith.addf %108, %53 : vector<10x32xf32>
    %110 = vector.extract_strided_slice %14 {offsets = [10, 0], sizes = [1, 32], strides = [1, 1]} : vector<20x32xf32> to vector<1x32xf32>
    %111 = vector.extract_strided_slice %14 {offsets = [11, 0], sizes = [1, 32], strides = [1, 1]} : vector<20x32xf32> to vector<1x32xf32>
    %cst_64 = arith.constant dense<0.000000e+00> : vector<10xf32>
    %112 = vector.multi_reduction <add>, %109, %cst_64 [1] : vector<10x32xf32> to vector<10xf32>
    %113 = vector.shape_cast %112 : vector<10xf32> to vector<10x1xf32>
    %cst_65 = arith.constant 3.200000e+01 : f32
    %114 = vector.broadcast %cst_65 : f32 to vector<10x1xf32>
    %115 = arith.divf %113, %114 : vector<10x1xf32>
    %116 = vector.broadcast %115 : vector<10x1xf32> to vector<10x32xf32>
    %117 = arith.subf %109, %116 : vector<10x32xf32>
    %118 = arith.mulf %117, %117 : vector<10x32xf32>
    %cst_66 = arith.constant dense<0.000000e+00> : vector<10xf32>
    %119 = vector.multi_reduction <add>, %118, %cst_66 [1] : vector<10x32xf32> to vector<10xf32>
    %120 = vector.shape_cast %119 : vector<10xf32> to vector<10x1xf32>
    %cst_67 = arith.constant 3.200000e+01 : f32
    %121 = vector.broadcast %cst_67 : f32 to vector<10x1xf32>
    %122 = arith.divf %120, %121 : vector<10x1xf32>
    %cst_68 = arith.constant 9.99999974E-6 : f32
    %123 = vector.broadcast %cst_68 : f32 to vector<10x1xf32>
    %124 = arith.addf %122, %123 : vector<10x1xf32>
    %125 = math.sqrt %124 : vector<10x1xf32>
    %126 = vector.broadcast %125 : vector<10x1xf32> to vector<10x32xf32>
    %127 = arith.divf %117, %126 : vector<10x32xf32>
    %128 = vector.broadcast %110 : vector<1x32xf32> to vector<10x32xf32>
    %129 = arith.mulf %127, %128 : vector<10x32xf32>
    %130 = vector.broadcast %111 : vector<1x32xf32> to vector<10x32xf32>
    %131 = arith.addf %129, %130 : vector<10x32xf32>
    %c4 = arith.constant 4 : index
    %c0_69 = arith.constant 0 : index
    %c0_70 = arith.constant 0 : index
    %132 = vector.load %arg8[%c4, %c0_69, %c0_70] : memref<9x32x32xf32, #tpu.memory_space<vmem>>, vector<1x32x32xf32>
    %133 = vector.shape_cast %132 : vector<1x32x32xf32> to vector<32x32xf32>
    %cst_71 = arith.constant dense<0.000000e+00> : vector<10x32xf32>
    %134 = tpu.matmul %131, %133, %cst_71 {dimension_numbers = #tpu.dot_dimension_numbers<[1], [0], [0], [1], [0, 0, 1, 1], [], []>} : vector<10x32xf32>, vector<32x32xf32>, vector<10x32xf32> -> vector<10x32xf32>
    %135 = vector.extract_strided_slice %14 {offsets = [6, 0], sizes = [1, 32], strides = [1, 1]} : vector<20x32xf32> to vector<1x32xf32>
    %136 = vector.broadcast %135 : vector<1x32xf32> to vector<10x32xf32>
    %137 = arith.addf %134, %136 : vector<10x32xf32>
    %cst_72 = arith.constant 0.000000e+00 : f32
    %138 = vector.broadcast %cst_72 : f32 to vector<10x32xf32>
    %139 = arith.maximumf %137, %138 : vector<10x32xf32>
    %c5 = arith.constant 5 : index
    %c0_73 = arith.constant 0 : index
    %c0_74 = arith.constant 0 : index
    %140 = vector.load %arg8[%c5, %c0_73, %c0_74] : memref<9x32x32xf32, #tpu.memory_space<vmem>>, vector<1x32x32xf32>
    %141 = vector.shape_cast %140 : vector<1x32x32xf32> to vector<32x32xf32>
    %cst_75 = arith.constant dense<0.000000e+00> : vector<10x32xf32>
    %142 = tpu.matmul %139, %141, %cst_75 {dimension_numbers = #tpu.dot_dimension_numbers<[1], [0], [0], [1], [0, 0, 1, 1], [], []>} : vector<10x32xf32>, vector<32x32xf32>, vector<10x32xf32> -> vector<10x32xf32>
    %143 = arith.addf %131, %142 : vector<10x32xf32>
    %144 = vector.extract_strided_slice %14 {offsets = [7, 0], sizes = [1, 32], strides = [1, 1]} : vector<20x32xf32> to vector<1x32xf32>
    %145 = vector.broadcast %144 : vector<1x32xf32> to vector<10x32xf32>
    %146 = arith.addf %143, %145 : vector<10x32xf32>
    %147 = vector.extract_strided_slice %14 {offsets = [12, 0], sizes = [1, 32], strides = [1, 1]} : vector<20x32xf32> to vector<1x32xf32>
    %148 = vector.extract_strided_slice %14 {offsets = [13, 0], sizes = [1, 32], strides = [1, 1]} : vector<20x32xf32> to vector<1x32xf32>
    %cst_76 = arith.constant dense<0.000000e+00> : vector<10xf32>
    %149 = vector.multi_reduction <add>, %146, %cst_76 [1] : vector<10x32xf32> to vector<10xf32>
    %150 = vector.shape_cast %149 : vector<10xf32> to vector<10x1xf32>
    %cst_77 = arith.constant 3.200000e+01 : f32
    %151 = vector.broadcast %cst_77 : f32 to vector<10x1xf32>
    %152 = arith.divf %150, %151 : vector<10x1xf32>
    %153 = vector.broadcast %152 : vector<10x1xf32> to vector<10x32xf32>
    %154 = arith.subf %146, %153 : vector<10x32xf32>
    %155 = arith.mulf %154, %154 : vector<10x32xf32>
    %cst_78 = arith.constant dense<0.000000e+00> : vector<10xf32>
    %156 = vector.multi_reduction <add>, %155, %cst_78 [1] : vector<10x32xf32> to vector<10xf32>
    %157 = vector.shape_cast %156 : vector<10xf32> to vector<10x1xf32>
    %cst_79 = arith.constant 3.200000e+01 : f32
    %158 = vector.broadcast %cst_79 : f32 to vector<10x1xf32>
    %159 = arith.divf %157, %158 : vector<10x1xf32>
    %cst_80 = arith.constant 9.99999974E-6 : f32
    %160 = vector.broadcast %cst_80 : f32 to vector<10x1xf32>
    %161 = arith.addf %159, %160 : vector<10x1xf32>
    %162 = math.sqrt %161 : vector<10x1xf32>
    %163 = vector.broadcast %162 : vector<10x1xf32> to vector<10x32xf32>
    %164 = arith.divf %154, %163 : vector<10x32xf32>
    %165 = vector.broadcast %147 : vector<1x32xf32> to vector<10x32xf32>
    %166 = arith.mulf %164, %165 : vector<10x32xf32>
    %167 = vector.broadcast %148 : vector<1x32xf32> to vector<10x32xf32>
    %168 = arith.addf %166, %167 : vector<10x32xf32>
    %c3 = arith.constant 3 : index
    %c0_81 = arith.constant 0 : index
    %c0_82 = arith.constant 0 : index
    %169 = vector.load %arg8[%c3, %c0_81, %c0_82] : memref<9x32x32xf32, #tpu.memory_space<vmem>>, vector<1x32x32xf32>
    %170 = vector.shape_cast %169 : vector<1x32x32xf32> to vector<32x32xf32>
    %cst_83 = arith.constant dense<0.000000e+00> : vector<16x32xf32>
    %171 = tpu.matmul %75, %170, %cst_83 {dimension_numbers = #tpu.dot_dimension_numbers<[1], [0], [0], [1], [0, 0, 1, 1], [], []>} : vector<16x32xf32>, vector<32x32xf32>, vector<16x32xf32> -> vector<16x32xf32>
    %172 = vector.extract_strided_slice %14 {offsets = [3, 0], sizes = [1, 32], strides = [1, 1]} : vector<20x32xf32> to vector<1x32xf32>
    %173 = vector.broadcast %172 : vector<1x32xf32> to vector<16x32xf32>
    %174 = arith.addf %171, %173 : vector<16x32xf32>
    %175 = arith.addf %174, %3 : vector<16x32xf32>
    %176 = vector.extract_strided_slice %14 {offsets = [14, 0], sizes = [1, 32], strides = [1, 1]} : vector<20x32xf32> to vector<1x32xf32>
    %177 = vector.extract_strided_slice %14 {offsets = [15, 0], sizes = [1, 32], strides = [1, 1]} : vector<20x32xf32> to vector<1x32xf32>
    %cst_84 = arith.constant dense<0.000000e+00> : vector<16xf32>
    %178 = vector.multi_reduction <add>, %175, %cst_84 [1] : vector<16x32xf32> to vector<16xf32>
    %179 = vector.shape_cast %178 : vector<16xf32> to vector<16x1xf32>
    %cst_85 = arith.constant 3.200000e+01 : f32
    %180 = vector.broadcast %cst_85 : f32 to vector<16x1xf32>
    %181 = arith.divf %179, %180 : vector<16x1xf32>
    %182 = vector.broadcast %181 : vector<16x1xf32> to vector<16x32xf32>
    %183 = arith.subf %175, %182 : vector<16x32xf32>
    %184 = arith.mulf %183, %183 : vector<16x32xf32>
    %cst_86 = arith.constant dense<0.000000e+00> : vector<16xf32>
    %185 = vector.multi_reduction <add>, %184, %cst_86 [1] : vector<16x32xf32> to vector<16xf32>
    %186 = vector.shape_cast %185 : vector<16xf32> to vector<16x1xf32>
    %cst_87 = arith.constant 3.200000e+01 : f32
    %187 = vector.broadcast %cst_87 : f32 to vector<16x1xf32>
    %188 = arith.divf %186, %187 : vector<16x1xf32>
    %cst_88 = arith.constant 9.99999974E-6 : f32
    %189 = vector.broadcast %cst_88 : f32 to vector<16x1xf32>
    %190 = arith.addf %188, %189 : vector<16x1xf32>
    %191 = math.sqrt %190 : vector<16x1xf32>
    %192 = vector.broadcast %191 : vector<16x1xf32> to vector<16x32xf32>
    %193 = arith.divf %183, %192 : vector<16x32xf32>
    %194 = vector.broadcast %176 : vector<1x32xf32> to vector<16x32xf32>
    %195 = arith.mulf %193, %194 : vector<16x32xf32>
    %196 = vector.broadcast %177 : vector<1x32xf32> to vector<16x32xf32>
    %197 = arith.addf %195, %196 : vector<16x32xf32>
    %c6 = arith.constant 6 : index
    %c0_89 = arith.constant 0 : index
    %c0_90 = arith.constant 0 : index
    %198 = vector.load %arg8[%c6, %c0_89, %c0_90] : memref<9x32x32xf32, #tpu.memory_space<vmem>>, vector<1x32x32xf32>
    %199 = vector.shape_cast %198 : vector<1x32x32xf32> to vector<32x32xf32>
    %cst_91 = arith.constant dense<0.000000e+00> : vector<16x32xf32>
    %200 = tpu.matmul %197, %199, %cst_91 {dimension_numbers = #tpu.dot_dimension_numbers<[1], [0], [0], [1], [0, 0, 1, 1], [], []>} : vector<16x32xf32>, vector<32x32xf32>, vector<16x32xf32> -> vector<16x32xf32>
    %201 = vector.extract_strided_slice %14 {offsets = [8, 0], sizes = [1, 32], strides = [1, 1]} : vector<20x32xf32> to vector<1x32xf32>
    %202 = vector.broadcast %201 : vector<1x32xf32> to vector<16x32xf32>
    %203 = arith.addf %200, %202 : vector<16x32xf32>
    %cst_92 = arith.constant 0.000000e+00 : f32
    %204 = vector.broadcast %cst_92 : f32 to vector<16x32xf32>
    %205 = arith.maximumf %203, %204 : vector<16x32xf32>
    %c7 = arith.constant 7 : index
    %c0_93 = arith.constant 0 : index
    %c0_94 = arith.constant 0 : index
    %206 = vector.load %arg8[%c7, %c0_93, %c0_94] : memref<9x32x32xf32, #tpu.memory_space<vmem>>, vector<1x32x32xf32>
    %207 = vector.shape_cast %206 : vector<1x32x32xf32> to vector<32x32xf32>
    %cst_95 = arith.constant dense<0.000000e+00> : vector<16x32xf32>
    %208 = tpu.matmul %205, %207, %cst_95 {dimension_numbers = #tpu.dot_dimension_numbers<[1], [0], [0], [1], [0, 0, 1, 1], [], []>} : vector<16x32xf32>, vector<32x32xf32>, vector<16x32xf32> -> vector<16x32xf32>
    %209 = arith.addf %197, %208 : vector<16x32xf32>
    %210 = vector.extract_strided_slice %14 {offsets = [9, 0], sizes = [1, 32], strides = [1, 1]} : vector<20x32xf32> to vector<1x32xf32>
    %211 = vector.broadcast %210 : vector<1x32xf32> to vector<16x32xf32>
    %212 = arith.addf %209, %211 : vector<16x32xf32>
    %213 = vector.extract_strided_slice %14 {offsets = [16, 0], sizes = [1, 32], strides = [1, 1]} : vector<20x32xf32> to vector<1x32xf32>
    %214 = vector.extract_strided_slice %14 {offsets = [17, 0], sizes = [1, 32], strides = [1, 1]} : vector<20x32xf32> to vector<1x32xf32>
    %cst_96 = arith.constant dense<0.000000e+00> : vector<16xf32>
    %215 = vector.multi_reduction <add>, %212, %cst_96 [1] : vector<16x32xf32> to vector<16xf32>
    %216 = vector.shape_cast %215 : vector<16xf32> to vector<16x1xf32>
    %cst_97 = arith.constant 3.200000e+01 : f32
    %217 = vector.broadcast %cst_97 : f32 to vector<16x1xf32>
    %218 = arith.divf %216, %217 : vector<16x1xf32>
    %219 = vector.broadcast %218 : vector<16x1xf32> to vector<16x32xf32>
    %220 = arith.subf %212, %219 : vector<16x32xf32>
    %221 = arith.mulf %220, %220 : vector<16x32xf32>
    %cst_98 = arith.constant dense<0.000000e+00> : vector<16xf32>
    %222 = vector.multi_reduction <add>, %221, %cst_98 [1] : vector<16x32xf32> to vector<16xf32>
    %223 = vector.shape_cast %222 : vector<16xf32> to vector<16x1xf32>
    %cst_99 = arith.constant 3.200000e+01 : f32
    %224 = vector.broadcast %cst_99 : f32 to vector<16x1xf32>
    %225 = arith.divf %223, %224 : vector<16x1xf32>
    %cst_100 = arith.constant 9.99999974E-6 : f32
    %226 = vector.broadcast %cst_100 : f32 to vector<16x1xf32>
    %227 = arith.addf %225, %226 : vector<16x1xf32>
    %228 = math.sqrt %227 : vector<16x1xf32>
    %229 = vector.broadcast %228 : vector<16x1xf32> to vector<16x32xf32>
    %230 = arith.divf %220, %229 : vector<16x32xf32>
    %231 = vector.broadcast %213 : vector<1x32xf32> to vector<16x32xf32>
    %232 = arith.mulf %230, %231 : vector<16x32xf32>
    %233 = vector.broadcast %214 : vector<1x32xf32> to vector<16x32xf32>
    %234 = arith.addf %232, %233 : vector<16x32xf32>
    %c0_101 = arith.constant 0 : index
    %c0_102 = arith.constant 0 : index
    %c0_103 = arith.constant 0 : index
    %235 = vector.load %arg12[%c0_101, %c0_102, %c0_103] : memref<1x16x32xf32, #tpu.memory_space<vmem>>, vector<1x16x32xf32>
    %236 = vector.shape_cast %235 : vector<1x16x32xf32> to vector<16x32xf32>
    %237 = vector.shape_cast %234 : vector<16x32xf32> to vector<1x16x32xf32>
    tpu.vector_store %arg12[%c0_101, %c0_102, %c0_103], %237 {strides = array<i32>} : memref<1x16x32xf32, #tpu.memory_space<vmem>>, vector<1x16x32xf32>,
    %238 = vector.shape_cast %168 : vector<10x32xf32> to vector<1x10x32xf32>
    %cst_104 = arith.constant dense<0.000000e+00> : vector<1xf32>
    %239 = vector.multi_reduction <add>, %238, %cst_104 [1, 2] : vector<1x10x32xf32> to vector<1xf32>
    %240 = vector.shape_cast %239 : vector<1xf32> to vector<1x1x1xf32>
    %241 = vector.extract %240[0, 0, 0] : f32 from vector<1x1x1xf32>
    %242 = vector.broadcast %241 : f32 to vector<1x1xf32>
    %cst_105 = arith.constant 3.200000e+02 : f32
    %243 = vector.broadcast %cst_105 : f32 to vector<1x1xf32>
    %244 = arith.divf %242, %243 : vector<1x1xf32>
    %245 = vector.broadcast %244 : vector<1x1xf32> to vector<10x32xf32>
    %246 = arith.subf %168, %245 : vector<10x32xf32>
    %247 = arith.mulf %246, %246 : vector<10x32xf32>
    %248 = vector.shape_cast %247 : vector<10x32xf32> to vector<1x10x32xf32>
    %cst_106 = arith.constant dense<0.000000e+00> : vector<1xf32>
    %249 = vector.multi_reduction <add>, %248, %cst_106 [1, 2] : vector<1x10x32xf32> to vector<1xf32>
    %250 = vector.shape_cast %249 : vector<1xf32> to vector<1x1x1xf32>
    %251 = vector.extract %250[0, 0, 0] : f32 from vector<1x1x1xf32>
    %252 = vector.broadcast %251 : f32 to vector<1x1xf32>
    %cst_107 = arith.constant 3.200000e+02 : f32
    %253 = vector.broadcast %cst_107 : f32 to vector<1x1xf32>
    %254 = arith.divf %252, %253 : vector<1x1xf32>
    %cst_108 = arith.constant 9.99999974E-6 : f32
    %255 = vector.broadcast %cst_108 : f32 to vector<1x1xf32>
    %256 = arith.addf %254, %255 : vector<1x1xf32>
    %257 = math.sqrt %256 : vector<1x1xf32>
    %258 = vector.broadcast %257 : vector<1x1xf32> to vector<10x32xf32>
    %259 = arith.divf %246, %258 : vector<10x32xf32>
    %260 = vector.extract_strided_slice %14 {offsets = [18, 0], sizes = [1, 32], strides = [1, 1]} : vector<20x32xf32> to vector<1x32xf32>
    %261 = vector.broadcast %260 : vector<1x32xf32> to vector<10x32xf32>
    %262 = arith.mulf %259, %261 : vector<10x32xf32>
    %263 = vector.extract_strided_slice %14 {offsets = [19, 0], sizes = [1, 32], strides = [1, 1]} : vector<20x32xf32> to vector<1x32xf32>
    %264 = vector.broadcast %263 : vector<1x32xf32> to vector<10x32xf32>
    %265 = arith.addf %262, %264 : vector<10x32xf32>
    %cst_109 = arith.constant 0.000000e+00 : f32
    %266 = vector.broadcast %cst_109 : f32 to vector<10x32xf32>
    %267 = arith.cmpf ogt, %265, %266 : vector<10x32xf32>
    %268 = math.exp %265 : vector<10x32xf32>
    %cst_110 = arith.constant 1.000000e+00 : f32
    %269 = vector.broadcast %cst_110 : f32 to vector<10x32xf32>
    %270 = arith.subf %268, %269 : vector<10x32xf32>
    %271 = arith.select %267, %265, %270 : vector<10x32xi1>, vector<10x32xf32>
    %272 = vector.shape_cast %102 : vector<10x1xf32> to vector<10x1xf32>
    %273 = vector.broadcast %272 : vector<10x1xf32> to vector<10x32xf32>
    %274 = tpu.concatenate %271, %273 in 1 : vector<10x32xf32>, vector<10x32xf32> -> vector<10x64xf32>
    %c0_111 = arith.constant 0 : index
    %c0_112 = arith.constant 0 : index
    %c0_113 = arith.constant 0 : index
    %275 = vector.load %arg11[%c0_111, %c0_112, %c0_113] : memref<1x10x64xf32, #tpu.memory_space<vmem>>, vector<1x10x64xf32>
    %276 = vector.shape_cast %275 : vector<1x10x64xf32> to vector<10x64xf32>
    %277 = vector.shape_cast %274 : vector<10x64xf32> to vector<1x10x64xf32>
    tpu.vector_store %arg11[%c0_111, %c0_112, %c0_113], %277 {strides = array<i32>} : memref<1x10x64xf32, #tpu.memory_space<vmem>>, vector<1x10x64xf32>,
    return
  }
  func.func @transform_0(%arg0: i32) -> (i32, i32, i32) {
    %c0_i32 = arith.constant 0 : i32
    %c0_i32_0 = arith.constant 0 : i32
    %c0_i32_1 = arith.constant 0 : i32
    return %arg0, %c0_i32, %c0_i32_0 : i32, i32, i32
  }
  func.func @transform_1(%arg0: i32) -> (i32, i32, i32) {
    %c0_i32 = arith.constant 0 : i32
    %c0_i32_0 = arith.constant 0 : i32
    %c0_i32_1 = arith.constant 0 : i32
    return %arg0, %c0_i32, %c0_i32_0 : i32, i32, i32
  }
  func.func @transform_2(%arg0: i32) -> (i32, i32, i32) {
    %c0_i32 = arith.constant 0 : i32
    %c0_i32_0 = arith.constant 0 : i32
    %c0_i32_1 = arith.constant 0 : i32
    return %arg0, %c0_i32, %c0_i32_0 : i32, i32, i32
  }
  func.func @transform_3(%arg0: i32) -> (i32, i32, i32) {
    %c0_i32 = arith.constant 0 : i32
    %c0_i32_0 = arith.constant 0 : i32
    %c0_i32_1 = arith.constant 0 : i32
    return %arg0, %c0_i32, %c0_i32_0 : i32, i32, i32
  }
  func.func @transform_4(%arg0: i32) -> (i32, i32, i32) {
    %c0_i32 = arith.constant 0 : i32
    %c0_i32_0 = arith.constant 0 : i32
    %c0_i32_1 = arith.constant 0 : i32
    return %arg0, %c0_i32, %c0_i32_0 : i32, i32, i32
  }
  func.func @transform_5(%arg0: i32) -> (i32, i32, i32) {
    %c0_i32 = arith.constant 0 : i32
    %c0_i32_0 = arith.constant 0 : i32
    %c0_i32_1 = arith.constant 0 : i32
    return %arg0, %c0_i32, %c0_i32_0 : i32, i32, i32
  }
  func.func @transform_6(%arg0: i32) -> (i32, i32) {
    %c0_i32 = arith.constant 0 : i32
    %c0_i32_0 = arith.constant 0 : i32
    %c0_i32_1 = arith.constant 0 : i32
    return %c0_i32, %c0_i32_0 : i32, i32
  }
  func.func @transform_7(%arg0: i32) -> (i32, i32, i32) {
    %c0_i32 = arith.constant 0 : i32
    %c0_i32_0 = arith.constant 0 : i32
    %c0_i32_1 = arith.constant 0 : i32
    %c0_i32_2 = arith.constant 0 : i32
    return %c0_i32, %c0_i32_0, %c0_i32_1 : i32, i32, i32
  }
  func.func @transform_8(%arg0: i32) -> (i32, i32) {
    %c0_i32 = arith.constant 0 : i32
    %c0_i32_0 = arith.constant 0 : i32
    %c0_i32_1 = arith.constant 0 : i32
    return %c0_i32, %c0_i32_0 : i32, i32
  }
  func.func @transform_9(%arg0: i32) -> (i32, i32) {
    %c0_i32 = arith.constant 0 : i32
    %c0_i32_0 = arith.constant 0 : i32
    %c0_i32_1 = arith.constant 0 : i32
    return %c0_i32, %c0_i32_0 : i32, i32
  }
  func.func @transform_10(%arg0: i32) -> (i32, i32, i32) {
    %c0_i32 = arith.constant 0 : i32
    %c0_i32_0 = arith.constant 0 : i32
    %c0_i32_1 = arith.constant 0 : i32
    return %arg0, %c0_i32, %c0_i32_0 : i32, i32, i32
  }
  func.func @transform_11(%arg0: i32) -> (i32, i32, i32) {
    %c0_i32 = arith.constant 0 : i32
    %c0_i32_0 = arith.constant 0 : i32
    %c0_i32_1 = arith.constant 0 : i32
    return %arg0, %c0_i32, %c0_i32_0 : i32, i32, i32
  }
}

</mosaic_0001>

<llo_original>
// kernel: tpu_custom_call.1
$region0: #{tpu_custom_call.1}
  #allocation0 [shape = 'u32[]', space=smem, size = 0x4, offset = 0x4, fixed_abs, tag = 'smem constant byte address 0x4 - core index']
  #allocation1 [shape = 'u32[144,128]{1,0:T(1,128)}', space=vmem, size = 0x12000, scoped, tag = 'internal scratch']
  %s0 = inlined_call_operand.vmem [shape: f32[2,10,32], index: 0, kind: input, shape index: {}]
  %s1 = inlined_call_operand.vmem [shape: f32[2,16,32], index: 1, kind: input, shape index: {}]
  %s2 = inlined_call_operand.vmem [shape: f32[2,26,10], index: 2, kind: input, shape index: {}]
  %s3 = inlined_call_operand.vmem [shape: f32[2,26,10], index: 3, kind: input, shape index: {}]
  %s4 = inlined_call_operand.vmem [shape: f32[2,16,10], index: 4, kind: input, shape index: {}]
  %s5 = inlined_call_operand.vmem [shape: f32[2,16,10], index: 5, kind: input, shape index: {}]
  %s6 = inlined_call_operand.hbm [shape: f32[32,128], index: 6, kind: input, shape index: {}]
  %s7 = inlined_call_operand.vmem [shape: f32[9,32,32], index: 7, kind: input, shape index: {}]
  %s8 = inlined_call_operand.vmem [shape: f32[4,32], index: 8, kind: input, shape index: {}]
  %s9 = inlined_call_operand.vmem [shape: f32[20,32], index: 9, kind: input, shape index: {}]
  %s10 = inlined_call_operand.vmem [shape: f32[2,10,64], index: 10, kind: output, shape index: {0}]
  %s11 = inlined_call_operand.hbm [shape: f32[2,16,32], index: 11, kind: output, shape index: {1}]
  %12 = xla_tuple %s10, %s11
  %s13 = sld [smem:[#allocation0]]
  $region85: #{tpu_custom_call.1} parent=0
    _
  %s15 = ssub.s32 1, %s13
  %s16 = scalar_select 0, %s15, %s13
  $region1: #{tpu_custom_call.1} parent=0
    #allocation2 [shape = 'u8[16384]{0}', space=vmem, size = 0x4000, scoped, tag = 'input window, operand 6, single buffered']
    #allocation3 [shape = 's32[2]{0}', space=sflag, size = 0x8, scoped, tag = 'scoped memory for tpu_custom_call.1']
    #allocation4 [shape = 's32[2]{0}', space=sflag, size = 0x8, scoped, tag = 'scoped memory for tpu_custom_call.1']
    #allocation5 [shape = 'u8[16384]{0}', space=vmem, size = 0x4000, scoped, tag = 'output window, operand 1']
    %17 = vsyncpa [#allocation3], 0
    %18 = vsyncpa [#allocation4], 0
    %s19 = scalar_lea.sflag [#allocation4], 1
    %20 = vsyncpa %s19, 0
    loop: start=0, step=1, limit=4
    $region2: #{tpu_custom_call.1} parent=1 // loop_pre_header
      _
    $region3: #{tpu_custom_call.1} parent=1 // loop_header
      %s22 = sphi 0, %s26
      %p23 = scmp.ge.s32.totalorder %s22, 4
      %s32 = sphi 0, %s34
      %s35 = sphi 0, %s32
      %s36 = sphi 0, %s35
      %s52 = sphi 0, %s36
      %s58 = sphi 0, %s60
      %s61 = sphi 0, %s58
      %s62 = sphi 0, %s61
      %s78 = sphi 0, %s62
      %s84 = sphi 0, %s86
      %s87 = sphi 0, %s84
      %s88 = sphi 0, %s87
      %s104 = sphi 0, %s88
      %s110 = sphi 0, %s112
      %s113 = sphi 0, %s110
      %s114 = sphi 0, %s113
      %s130 = sphi 0, %s114
      %s136 = sphi 0, %s138
      %s139 = sphi 0, %s136
      %s140 = sphi 0, %s139
      %s156 = sphi 0, %s140
      %s162 = sphi 0, %s164
      %s165 = sphi 0, %s162
      %s166 = sphi 0, %s165
      %s182 = sphi 0, %s166
      %s186 = sphi 0, %s186
      %s188 = sphi 0, %s186
      %s189 = sphi 0, %s188
      %s203 = sphi 0, %s189
      %s207 = sphi 0, %s207
      %s209 = sphi 0, %s207
      %s210 = sphi 0, %s209
      %s224 = sphi 0, %s210
      %s228 = sphi 0, %s228
      %s230 = sphi 0, %s228
      %s231 = sphi 0, %s230
      %s245 = sphi 0, %s231
      %s249 = sphi 0, %s249
      %s251 = sphi 0, %s249
      %s252 = sphi 0, %s251
      %s266 = sphi 0, %s252
      %s272 = sphi 0, %s274
      %s275 = sphi 0, %s272
      %s276 = sphi 0, %s275
      %s292 = sphi 0, %s276
      %s298 = sphi 0, %s300
      %s301 = sphi 0, %s298
      %s302 = sphi 0, %s301
      %s318 = sphi 0, %s302
    $region4: #{tpu_custom_call.1} parent=1 // loop_header_branch
      %25 = sbr.rel (%p23) target = $region8
    $region5: #{tpu_custom_call.1} parent=1 // loop_body
      %s27 = ssub.s32 %s22, 1
      %s28 = ssub.s32 %s22, 2
      %s29 = sadd.s32 %s22, 1
      %s30 = ssub.s32 %s22, %s29
      %p31 = scmp.eq.s32.totalorder %s30, 0
      %s33 = sadd.s32 %s32, 1
      %s34 = scalar_select %p31, %s32, %s33
      %p37 = pneg %p31
      %p38 = scmp.eq.s32.totalorder %s22, 1
      %p39 = por %p37, %p38
      %p40 = scmp.ne.s32.totalorder %s32, %s35
      %p41 = scmp.eq.s32.totalorder %s22, 0
      %p42 = por %p40, %p41
      %p43 = scmp.ne.s32.totalorder %s32, %s35
      %p44 = scmp.eq.s32.totalorder %s27, 1
      %p45 = por %p43, %p44
      %p46 = scmp.ne.s32.totalorder %s35, %s36
      %p47 = scmp.eq.s32.totalorder %s27, 0
      %p48 = por %p46, %p47
      %p49 = scmp.ne.s32.totalorder %s35, %s36
      %p50 = scmp.eq.s32.totalorder %s28, 1
      %p51 = por %p49, %p50
      %p53 = scmp.ne.s32.totalorder %s36, %s52
      %p54 = scmp.eq.s32.totalorder %s28, 0
      %p55 = por %p53, %p54
      %s56 = ssub.s32 %s22, %s29
      %p57 = scmp.eq.s32.totalorder %s56, 0
      %s59 = sadd.s32 %s58, 1
      %s60 = scalar_select %p57, %s58, %s59
      %p63 = pneg %p57
      %p64 = scmp.eq.s32.totalorder %s22, 1
      %p65 = por %p63, %p64
      %p66 = scmp.ne.s32.totalorder %s58, %s61
      %p67 = scmp.eq.s32.totalorder %s22, 0
      %p68 = por %p66, %p67
      %p69 = scmp.ne.s32.totalorder %s58, %s61
      %p70 = scmp.eq.s32.totalorder %s27, 1
      %p71 = por %p69, %p70
      %p72 = scmp.ne.s32.totalorder %s61, %s62
      %p73 = scmp.eq.s32.totalorder %s27, 0
      %p74 = por %p72, %p73
      %p75 = scmp.ne.s32.totalorder %s61, %s62
      %p76 = scmp.eq.s32.totalorder %s28, 1
      %p77 = por %p75, %p76
      %p79 = scmp.ne.s32.totalorder %s62, %s78
      %p80 = scmp.eq.s32.totalorder %s28, 0
      %p81 = por %p79, %p80
      %s82 = ssub.s32 %s22, %s29
      %p83 = scmp.eq.s32.totalorder %s82, 0
      %s85 = sadd.s32 %s84, 1
      %s86 = scalar_select %p83, %s84, %s85
      %p89 = pneg %p83
      %p90 = scmp.eq.s32.totalorder %s22, 1
      %p91 = por %p89, %p90
      %p92 = scmp.ne.s32.totalorder %s84, %s87
      %p93 = scmp.eq.s32.totalorder %s22, 0
      %p94 = por %p92, %p93
      %p95 = scmp.ne.s32.totalorder %s84, %s87
      %p96 = scmp.eq.s32.totalorder %s27, 1
      %p97 = por %p95, %p96
      %p98 = scmp.ne.s32.totalorder %s87, %s88
      %p99 = scmp.eq.s32.totalorder %s27, 0
      %p100 = por %p98, %p99
      %p101 = scmp.ne.s32.totalorder %s87, %s88
      %p102 = scmp.eq.s32.totalorder %s28, 1
      %p103 = por %p101, %p102
      %p105 = scmp.ne.s32.totalorder %s88, %s104
      %p106 = scmp.eq.s32.totalorder %s28, 0
      %p107 = por %p105, %p106
      %s108 = ssub.s32 %s22, %s29
      %p109 = scmp.eq.s32.totalorder %s108, 0
      %s111 = sadd.s32 %s110, 1
      %s112 = scalar_select %p109, %s110, %s111
      %p115 = pneg %p109
      %p116 = scmp.eq.s32.totalorder %s22, 1
      %p117 = por %p115, %p116
      %p118 = scmp.ne.s32.totalorder %s110, %s113
      %p119 = scmp.eq.s32.totalorder %s22, 0
      %p120 = por %p118, %p119
      %p121 = scmp.ne.s32.totalorder %s110, %s113
      %p122 = scmp.eq.s32.totalorder %s27, 1
      %p123 = por %p121, %p122
      %p124 = scmp.ne.s32.totalorder %s113, %s114
      %p125 = scmp.eq.s32.totalorder %s27, 0
      %p126 = por %p124, %p125
      %p127 = scmp.ne.s32.totalorder %s113, %s114
      %p128 = scmp.eq.s32.totalorder %s28, 1
      %p129 = por %p127, %p128
      %p131 = scmp.ne.s32.totalorder %s114, %s130
      %p132 = scmp.eq.s32.totalorder %s28, 0
      %p133 = por %p131, %p132
      %s134 = ssub.s32 %s22, %s29
      %p135 = scmp.eq.s32.totalorder %s134, 0
      %s137 = sadd.s32 %s136, 1
      %s138 = scalar_select %p135, %s136, %s137
      %p141 = pneg %p135
      %p142 = scmp.eq.s32.totalorder %s22, 1
      %p143 = por %p141, %p142
      %p144 = scmp.ne.s32.totalorder %s136, %s139
      %p145 = scmp.eq.s32.totalorder %s22, 0
      %p146 = por %p144, %p145
      %p147 = scmp.ne.s32.totalorder %s136, %s139
      %p148 = scmp.eq.s32.totalorder %s27, 1
      %p149 = por %p147, %p148
      %p150 = scmp.ne.s32.totalorder %s139, %s140
      %p151 = scmp.eq.s32.totalorder %s27, 0
      %p152 = por %p150, %p151
      %p153 = scmp.ne.s32.totalorder %s139, %s140
      %p154 = scmp.eq.s32.totalorder %s28, 1
      %p155 = por %p153, %p154
      %p157 = scmp.ne.s32.totalorder %s140, %s156
      %p158 = scmp.eq.s32.totalorder %s28, 0
      %p159 = por %p157, %p158
      %s160 = ssub.s32 %s22, %s29
      %p161 = scmp.eq.s32.totalorder %s160, 0
      %s163 = sadd.s32 %s162, 1
      %s164 = scalar_select %p161, %s162, %s163
      %p167 = pneg %p161
      %p168 = scmp.eq.s32.totalorder %s22, 1
      %p169 = por %p167, %p168
      %p170 = scmp.ne.s32.totalorder %s162, %s165
      %p171 = scmp.eq.s32.totalorder %s22, 0
      %p172 = por %p170, %p171
      %p173 = scmp.ne.s32.totalorder %s162, %s165
      %p174 = scmp.eq.s32.totalorder %s27, 1
      %p175 = por %p173, %p174
      %p176 = scmp.ne.s32.totalorder %s165, %s166
      %p177 = scmp.eq.s32.totalorder %s27, 0
      %p178 = por %p176, %p177
      %p179 = scmp.ne.s32.totalorder %s165, %s166
      %p180 = scmp.eq.s32.totalorder %s28, 1
      %p181 = por %p179, %p180
      %p183 = scmp.ne.s32.totalorder %s166, %s182
      %p184 = scmp.eq.s32.totalorder %s28, 0
      %p185 = por %p183, %p184
      %s187 = sadd.s32 %s186, 1
      %p190 = scmp.eq.s32.totalorder %s22, 1
      %p191 = scmp.ne.s32.totalorder %s186, %s188
      %p192 = scmp.eq.s32.totalorder %s22, 0
      %p193 = por %p191, %p192
      %p194 = scmp.ne.s32.totalorder %s186, %s188
      %p195 = scmp.eq.s32.totalorder %s27, 1
      %p196 = por %p194, %p195
      %p197 = scmp.ne.s32.totalorder %s188, %s189
      %p198 = scmp.eq.s32.totalorder %s27, 0
      %p199 = por %p197, %p198
      %p200 = scmp.ne.s32.totalorder %s188, %s189
      %p201 = scmp.eq.s32.totalorder %s28, 1
      %p202 = por %p200, %p201
      %p204 = scmp.ne.s32.totalorder %s189, %s203
      %p205 = scmp.eq.s32.totalorder %s28, 0
      %p206 = por %p204, %p205
      %s208 = sadd.s32 %s207, 1
      %p211 = scmp.eq.s32.totalorder %s22, 1
      %p212 = scmp.ne.s32.totalorder %s207, %s209
      %p213 = scmp.eq.s32.totalorder %s22, 0
      %p214 = por %p212, %p213
      %p215 = scmp.ne.s32.totalorder %s207, %s209
      %p216 = scmp.eq.s32.totalorder %s27, 1
      %p217 = por %p215, %p216
      %p218 = scmp.ne.s32.totalorder %s209, %s210
      %p219 = scmp.eq.s32.totalorder %s27, 0
      %p220 = por %p218, %p219
      %p221 = scmp.ne.s32.totalorder %s209, %s210
      %p222 = scmp.eq.s32.totalorder %s28, 1
      %p223 = por %p221, %p222
      %p225 = scmp.ne.s32.totalorder %s210, %s224
      %p226 = scmp.eq.s32.totalorder %s28, 0
      %p227 = por %p225, %p226
      %s229 = sadd.s32 %s228, 1
      %p232 = scmp.eq.s32.totalorder %s22, 1
      %p233 = scmp.ne.s32.totalorder %s228, %s230
      %p234 = scmp.eq.s32.totalorder %s22, 0
      %p235 = por %p233, %p234
      %p236 = scmp.ne.s32.totalorder %s228, %s230
      %p237 = scmp.eq.s32.totalorder %s27, 1
      %p238 = por %p236, %p237
      %p239 = scmp.ne.s32.totalorder %s230, %s231
      %p240 = scmp.eq.s32.totalorder %s27, 0
      %p241 = por %p239, %p240
      %p242 = scmp.ne.s32.totalorder %s230, %s231
      %p243 = scmp.eq.s32.totalorder %s28, 1
      %p244 = por %p242, %p243
      %p246 = scmp.ne.s32.totalorder %s231, %s245
      %p247 = scmp.eq.s32.totalorder %s28, 0
      %p248 = por %p246, %p247
      %s250 = sadd.s32 %s249, 1
      %p253 = scmp.eq.s32.totalorder %s22, 1
      %p254 = scmp.ne.s32.totalorder %s249, %s251
      %p255 = scmp.eq.s32.totalorder %s22, 0
      %p256 = por %p254, %p255
      %p257 = scmp.ne.s32.totalorder %s249, %s251
      %p258 = scmp.eq.s32.totalorder %s27, 1
      %p259 = por %p257, %p258
      %p260 = scmp.ne.s32.totalorder %s251, %s252
      %p261 = scmp.eq.s32.totalorder %s27, 0
      %p262 = por %p260, %p261
      %p263 = scmp.ne.s32.totalorder %s251, %s252
      %p264 = scmp.eq.s32.totalorder %s28, 1
      %p265 = por %p263, %p264
      %p267 = scmp.ne.s32.totalorder %s252, %s266
      %p268 = scmp.eq.s32.totalorder %s28, 0
      %p269 = por %p267, %p268
      %s270 = ssub.s32 %s22, %s29
      %p271 = scmp.eq.s32.totalorder %s270, 0
      %s273 = sadd.s32 %s272, 1
      %s274 = scalar_select %p271, %s272, %s273
      %p277 = pneg %p271
      %p278 = scmp.eq.s32.totalorder %s22, 1
      %p279 = por %p277, %p278
      %p280 = scmp.ne.s32.totalorder %s272, %s275
      %p281 = scmp.eq.s32.totalorder %s22, 0
      %p282 = por %p280, %p281
      %p283 = scmp.ne.s32.totalorder %s272, %s275
      %p284 = scmp.eq.s32.totalorder %s27, 1
      %p285 = por %p283, %p284
      %p286 = scmp.ne.s32.totalorder %s275, %s276
      %p287 = scmp.eq.s32.totalorder %s27, 0
      %p288 = por %p286, %p287
      %p289 = scmp.ne.s32.totalorder %s275, %s276
      %p290 = scmp.eq.s32.totalorder %s28, 1
      %p291 = por %p289, %p290
      %p293 = scmp.ne.s32.totalorder %s276, %s292
      %p294 = scmp.eq.s32.totalorder %s28, 0
      %p295 = por %p293, %p294
      %s296 = ssub.s32 %s22, %s29
      %p297 = scmp.eq.s32.totalorder %s296, 0
      %s299 = sadd.s32 %s298, 1
      %s300 = scalar_select %p297, %s298, %s299
      %p303 = pneg %p297
      %p304 = scmp.eq.s32.totalorder %s22, 1
      %p305 = por %p303, %p304
      %p306 = scmp.ne.s32.totalorder %s298, %s301
      %p307 = scmp.eq.s32.totalorder %s22, 0
      %p308 = por %p306, %p307
      %p309 = scmp.ne.s32.totalorder %s298, %s301
      %p310 = scmp.eq.s32.totalorder %s27, 1
      %p311 = por %p309, %p310
      %p312 = scmp.ne.s32.totalorder %s301, %s302
      %p313 = scmp.eq.s32.totalorder %s27, 0
      %p314 = por %p312, %p313
      %p315 = scmp.ne.s32.totalorder %s301, %s302
      %p316 = scmp.eq.s32.totalorder %s28, 1
      %p317 = por %p315, %p316
      %p319 = scmp.ne.s32.totalorder %s302, %s318
      %p320 = scmp.eq.s32.totalorder %s28, 0
      %p321 = por %p319, %p320
      %p322 = scmp.le.s32.totalorder 1, %s22
      %p323 = scmp.lt.s32.totalorder %s22, 3
      %p324 = pnand %p322, %p323
      %p325 = pneg %p324
      // Predicated region
      $region9: #{tpu_custom_call.1} parent=5 // pred_check
        _
      $region10: #{tpu_custom_call.1} parent=5 // pred_check_branch
        %327 = sbr.rel (%p324) target = $region12
      $region11: #{tpu_custom_call.1} parent=5 // pred_region
        %s328 = ssub.s32 %s22, 1
        // Predicated region
        $region13: #{tpu_custom_call.1} parent=11 // pred_check
          %p329 = pneg %p199
        $region14: #{tpu_custom_call.1} parent=11 // pred_check_branch
          %331 = sbr.rel (%p329) target = $region16
        $region15: #{tpu_custom_call.1} parent=11 // pred_region
          %s333 = ssub.s32 512, 512
          %334 = vsyncadd [#allocation3], %s333
          %s335 = sshll.u32 [#allocation2], 4
          %s336 = int_to_ptr.vmem [resolvable:$true] %s335
          %341 = dma.hbm_to_vmem [thread:$0]  %s6, 512, %s336, [#allocation3], 128, 128, 8
        $region16: #{tpu_custom_call.1} parent=11 // pred_fallthru
          _
        // Predicated region
        $region17: #{tpu_custom_call.1} parent=11 // pred_check
          %p342 = pneg %p220
        $region18: #{tpu_custom_call.1} parent=11 // pred_check_branch
          %344 = sbr.rel (%p342) target = $region20
        $region19: #{tpu_custom_call.1} parent=11 // pred_region
          _
        $region20: #{tpu_custom_call.1} parent=11 // pred_fallthru
          _
        // Predicated region
        $region21: #{tpu_custom_call.1} parent=11 // pred_check
          %p345 = pneg %p241
        $region22: #{tpu_custom_call.1} parent=11 // pred_check_branch
          %347 = sbr.rel (%p345) target = $region24
        $region23: #{tpu_custom_call.1} parent=11 // pred_region
          _
        $region24: #{tpu_custom_call.1} parent=11 // pred_fallthru
          _
        // Predicated region
        $region25: #{tpu_custom_call.1} parent=11 // pred_check
          %p348 = pneg %p262
        $region26: #{tpu_custom_call.1} parent=11 // pred_check_branch
          %350 = sbr.rel (%p348) target = $region28
        $region27: #{tpu_custom_call.1} parent=11 // pred_region
          _
        $region28: #{tpu_custom_call.1} parent=11 // pred_fallthru
          _
      $region12: #{tpu_custom_call.1} parent=5 // pred_fallthru
        _
      %p351 = scmp.lt.s32.totalorder %s22, 2
      // Predicated region
      $region29: #{tpu_custom_call.1} parent=5 // pred_check
        %p352 = pneg %p351
      $region30: #{tpu_custom_call.1} parent=5 // pred_check_branch
        %354 = sbr.rel (%p352) target = $region32
      $region31: #{tpu_custom_call.1} parent=5 // pred_region
        // Predicated region
        $region33: #{tpu_custom_call.1} parent=31 // pred_check
          %p355 = pneg %p42
        $region34: #{tpu_custom_call.1} parent=31 // pred_check_branch
          %357 = sbr.rel (%p355) target = $region36
        $region35: #{tpu_custom_call.1} parent=31 // pred_region
          %p358 = scmp.lt.s32.totalorder %s22, 1
          %s359 = scalar_select %p358, %s22, 1
          %s360 = smul.addr %s359, 2
          %s361 = smul.addr %s360, 8
          %s362 = scalar_lea.vmem %s0, %s361
        $region36: #{tpu_custom_call.1} parent=31 // pred_fallthru
          _
        // Predicated region
        $region37: #{tpu_custom_call.1} parent=31 // pred_check
          %p363 = pneg %p68
        $region38: #{tpu_custom_call.1} parent=31 // pred_check_branch
          %365 = sbr.rel (%p363) target = $region40
        $region39: #{tpu_custom_call.1} parent=31 // pred_region
          %p366 = scmp.lt.s32.totalorder %s22, 1
          %s367 = scalar_select %p366, %s22, 1
          %s368 = smul.addr %s367, 2
          %s369 = smul.addr %s368, 8
          %s370 = scalar_lea.vmem %s1, %s369
        $region40: #{tpu_custom_call.1} parent=31 // pred_fallthru
          _
        // Predicated region
        $region41: #{tpu_custom_call.1} parent=31 // pred_check
          %p371 = pneg %p94
        $region42: #{tpu_custom_call.1} parent=31 // pred_check_branch
          %373 = sbr.rel (%p371) target = $region44
        $region43: #{tpu_custom_call.1} parent=31 // pred_region
          %p374 = scmp.lt.s32.totalorder %s22, 1
          %s375 = scalar_select %p374, %s22, 1
          %s376 = smul.addr %s375, 4
          %s377 = smul.addr %s376, 8
          %s378 = scalar_lea.vmem %s2, %s377
        $region44: #{tpu_custom_call.1} parent=31 // pred_fallthru
          _
        // Predicated region
        $region45: #{tpu_custom_call.1} parent=31 // pred_check
          %p379 = pneg %p120
        $region46: #{tpu_custom_call.1} parent=31 // pred_check_branch
          %381 = sbr.rel (%p379) target = $region48
        $region47: #{tpu_custom_call.1} parent=31 // pred_region
          %p382 = scmp.lt.s32.totalorder %s22, 1
          %s383 = scalar_select %p382, %s22, 1
          %s384 = smul.addr %s383, 4
          %s385 = smul.addr %s384, 8
          %s386 = scalar_lea.vmem %s3, %s385
        $region48: #{tpu_custom_call.1} parent=31 // pred_fallthru
          _
        // Predicated region
        $region49: #{tpu_custom_call.1} parent=31 // pred_check
          %p387 = pneg %p146
        $region50: #{tpu_custom_call.1} parent=31 // pred_check_branch
          %389 = sbr.rel (%p387) target = $region52
        $region51: #{tpu_custom_call.1} parent=31 // pred_region
          %p390 = scmp.lt.s32.totalorder %s22, 1
          %s391 = scalar_select %p390, %s22, 1
          %s392 = smul.addr %s391, 2
          %s393 = smul.addr %s392, 8
          %s394 = scalar_lea.vmem %s4, %s393
        $region52: #{tpu_custom_call.1} parent=31 // pred_fallthru
          _
        // Predicated region
        $region53: #{tpu_custom_call.1} parent=31 // pred_check
          %p395 = pneg %p172
        $region54: #{tpu_custom_call.1} parent=31 // pred_check_branch
          %397 = sbr.rel (%p395) target = $region56
        $region55: #{tpu_custom_call.1} parent=31 // pred_region
          %p398 = scmp.lt.s32.totalorder %s22, 1
          %s399 = scalar_select %p398, %s22, 1
          %s400 = smul.addr %s399, 2
          %s401 = smul.addr %s400, 8
          %s402 = scalar_lea.vmem %s5, %s401
        $region56: #{tpu_custom_call.1} parent=31 // pred_fallthru
          _
      $region32: #{tpu_custom_call.1} parent=5 // pred_fallthru
        _
      %p403 = scmp.le.s32.totalorder 1, %s22
      %p404 = scmp.lt.s32.totalorder %s22, 3
      %p405 = pnand %p403, %p404
      %p406 = pneg %p405
      // Predicated region
      $region57: #{tpu_custom_call.1} parent=5 // pred_check
        _
      $region58: #{tpu_custom_call.1} parent=5 // pred_check_branch
        %408 = sbr.rel (%p405) target = $region60
      $region59: #{tpu_custom_call.1} parent=5 // pred_region
        %s409 = ssub.s32 %s22, 1
        // Predicated region
        $region61: #{tpu_custom_call.1} parent=59 // pred_check
          %p410 = pneg %p199
        $region62: #{tpu_custom_call.1} parent=59 // pred_check_branch
          %412 = sbr.rel (%p410) target = $region64
        $region63: #{tpu_custom_call.1} parent=59 // pred_region
          %413 = dma.done [#allocation3], 512
        $region64: #{tpu_custom_call.1} parent=59 // pred_fallthru
          _
        %p414 = scmp.lt.s32.totalorder %s27, 1
        %s415 = scalar_select %p414, %s27, 1
        %s416 = smul.addr %s415, 2
        %s417 = smul.addr %s416, 8
        %s418 = scalar_lea.vmem %s0, %s417
        %p419 = pneg %p48
        %p420 = pneg %p45
        %p421 = scmp.lt.s32.totalorder %s27, 1
        %s422 = scalar_select %p421, %s27, 1
        %s423 = smul.addr %s422, 2
        %s424 = smul.addr %s423, 8
        %s425 = scalar_lea.vmem %s1, %s424
        %p426 = pneg %p74
        %p427 = pneg %p71
        %p428 = scmp.lt.s32.totalorder %s27, 1
        %s429 = scalar_select %p428, %s27, 1
        %s430 = smul.addr %s429, 4
        %s431 = smul.addr %s430, 8
        %s432 = scalar_lea.vmem %s2, %s431
        %p433 = pneg %p100
        %p434 = pneg %p97
        %p435 = scmp.lt.s32.totalorder %s27, 1
        %s436 = scalar_select %p435, %s27, 1
        %s437 = smul.addr %s436, 4
        %s438 = smul.addr %s437, 8
        %s439 = scalar_lea.vmem %s3, %s438
        %p440 = pneg %p126
        %p441 = pneg %p123
        %p442 = scmp.lt.s32.totalorder %s27, 1
        %s443 = scalar_select %p442, %s27, 1
        %s444 = smul.addr %s443, 2
        %s445 = smul.addr %s444, 8
        %s446 = scalar_lea.vmem %s4, %s445
        %p447 = pneg %p152
        %p448 = pneg %p149
        %p449 = scmp.lt.s32.totalorder %s27, 1
        %s450 = scalar_select %p449, %s27, 1
        %s451 = smul.addr %s450, 2
        %s452 = smul.addr %s451, 8
        %s453 = scalar_lea.vmem %s5, %s452
        %p454 = pneg %p178
        %p455 = pneg %p175
        %p456 = pneg %p199
        %p457 = pneg %p196
        %p458 = pneg %p220
        %p459 = pneg %p217
        %p460 = pneg %p241
        %p461 = pneg %p238
        %p462 = pneg %p262
        %p463 = pneg %p259
        %p464 = pneg %p288
        %p465 = pneg %p285
        %p466 = scmp.lt.s32.totalorder %s27, 1
        %s467 = scalar_select %p466, %s27, 1
        %s468 = smul.addr %s467, 2
        %s469 = smul.addr %s468, 8
        %s470 = scalar_lea.vmem %s10, %s469
        %p471 = pneg %p314
        %p472 = pneg %p311
        %s473 = sand.u32 %s301, 1
        %s474 = scalar_lea.sflag [#allocation4], %s473
        %s475 = sand.u32 %s301, 1
        %s476 = smul.addr %s475, 16
        %s477 = scalar_lea.vmem [#allocation5], %s476
        %p478 = scmp.lt.s32.totalorder %s27, 1
        %s479 = scalar_select %p478, %s27, 1
        %s480 = smul.addr %s479, 2
        %s481 = smul.addr %s480, 8
        %s482 = scalar_lea.vmem %s0, %s481
        %p483 = scmp.lt.s32.totalorder %s27, 1
        %s484 = scalar_select %p483, %s27, 1
        %s485 = smul.addr %s484, 2
        %s486 = smul.addr %s485, 8
        %s487 = scalar_lea.vmem %s1, %s486
        %p488 = scmp.lt.s32.totalorder %s27, 1
        %s489 = scalar_select %p488, %s27, 1
        %s490 = smul.addr %s489, 4
        %s491 = smul.addr %s490, 8
        %s492 = scalar_lea.vmem %s2, %s491
        %p493 = scmp.lt.s32.totalorder %s27, 1
        %s494 = scalar_select %p493, %s27, 1
        %s495 = smul.addr %s494, 4
        %s496 = smul.addr %s495, 8
        %s497 = scalar_lea.vmem %s3, %s496
        %p498 = scmp.lt.s32.totalorder %s27, 1
        %s499 = scalar_select %p498, %s27, 1
        %s500 = smul.addr %s499, 2
        %s501 = smul.addr %s500, 8
        %s502 = scalar_lea.vmem %s4, %s501
        %p503 = scmp.lt.s32.totalorder %s27, 1
        %s504 = scalar_select %p503, %s27, 1
        %s505 = smul.addr %s504, 2
        %s506 = smul.addr %s505, 8
        %s507 = scalar_lea.vmem %s5, %s506
        %p508 = scmp.lt.s32.totalorder %s27, 1
        %s509 = scalar_select %p508, %s27, 1
        %s510 = smul.addr %s509, 2
        %s511 = smul.addr %s510, 8
        %s512 = scalar_lea.vmem %s10, %s511
        %v513 = vld [vmem:[%s482] sm:$0xff]
        %v514 = vld [vmem:[%s482 + $0x8] sm:$0x3]
        %v515 = vld [vmem:[%s487] sm:$0xff]
        %v516 = vld [vmem:[%s487 + $0x8] sm:$0xff]
        %v517 = vld [vmem:[%s492] sm:$0xff]
        %v518 = vld [vmem:[%s492 + $0x8] sm:$0xff]
        %v519 = vld [vmem:[%s492 + $0x10] sm:$0xff]
        %v520 = vld [vmem:[%s492 + $0x18] sm:$0x3]
        %v521 = vld [vmem:[%s497] sm:$0xff]
        %v522 = vld [vmem:[%s497 + $0x8] sm:$0xff]
        %v523 = vld [vmem:[%s497 + $0x10] sm:$0xff]
        %v524 = vld [vmem:[%s497 + $0x18] sm:$0x3]
        %v525 = vld [vmem:[%s502] sm:$0xff]
        %v526 = vld [vmem:[%s502 + $0x8] sm:$0xff]
        %v527 = vld [vmem:[%s507] sm:$0xff]
        %v528 = vld [vmem:[%s507 + $0x8] sm:$0xff]
        %v529 = vld [vmem:[#allocation2] sm:$0xff]
        %v530 = vld [vmem:[#allocation2 + $0x8] sm:$0xff]
        %v531 = vld [vmem:[#allocation2 + $0x10] sm:$0xff]
        %v532 = vld [vmem:[#allocation2 + $0x18] sm:$0xff]
        %v533 = vld [vmem:[%s8] sm:$0xf]
        %v534 = vld [vmem:[%s9] sm:$0xff]
        %v535 = vld [vmem:[%s9 + $0x8] sm:$0xff]
        %v536 = vld [vmem:[%s9 + $0x10] sm:$0xf]
        %v537 = vld [vmem:[%s7] sm:$0xff]
        %v538 = vld [vmem:[%s7 + $0x8] sm:$0xff]
        %v539 = vld [vmem:[%s7 + $0x10] sm:$0xff]
        %v540 = vld [vmem:[%s7 + $0x18] sm:$0xff]
        %vm541 = vcmask 261120
        %v543 = vsel %vm541, %v513, 0
        %v546 = vsel %vm541, %v514, 0
        %548 = vmatprep.subr.mxu0 0.0
        %549 = vmatpush1.msra.mxu0 %v537
        %550 = vmatprep.subr.mxu0 0.0
        %551 = vmatpush1.msra.mxu0 %v538
        %552 = vmatprep.subr.mxu0 0.0
        %553 = vmatpush1.msra.mxu0 %v539
        %554 = vmatprep.subr.mxu0 0.0
        %555 = vmatpush1.msra.mxu0 %v540
        %556 = vmatprep.subr.mxu0 0.0
        %557 = vmatpush1.msra.mxu0 0.0
        %558 = vmatprep.subr.mxu0 0.0
        %559 = vmatpush1.msra.mxu0 0.0
        %560 = vmatprep.subr.mxu0 0.0
        %561 = vmatpush1.msra.mxu0 0.0
        %562 = vmatprep.subr.mxu0 0.0
        %563 = vmatpush1.msra.mxu0 0.0
        %564 = vmatprep.subr.mxu0 0.0
        %565 = vmatpush1.msra.mxu0 0.0
        %566 = vmatprep.subr.mxu0 0.0
        %567 = vmatpush1.msra.mxu0 0.0
        %568 = vmatprep.subr.mxu0 0.0
        %569 = vmatpush1.msra.mxu0 0.0
        %570 = vmatprep.subr.mxu0 0.0
        %571 = vmatpush1.msra.mxu0 0.0
        %572 = vmatprep.subr.mxu0 0.0
        %573 = vmatpush1.msra.mxu0 0.0
        %574 = vmatprep.subr.mxu0 0.0
        %575 = vmatpush1.msra.mxu0 0.0
        %576 = vmatprep.subr.mxu0 0.0
        %577 = vmatpush1.msra.mxu0 0.0
        %578 = vmatprep.subr.mxu0 0.0
        %579 = vmatpush1.msra.mxu0 0.0
        %580 = vmatprep.subr.mxu0 0.0
        %581 = vmatpush1.msra.mxu0 0.0
        %582 = vmatprep.subr.mxu0 0.0
        %583 = vmatpush1.msra.mxu0 0.0
        %584 = vmatprep.subr.mxu0 0.0
        %585 = vmatpush1.msra.mxu0 0.0
        %586 = vmatprep.subr.mxu0 0.0
        %587 = vmatpush1.msra.mxu0 0.0
        %588 = vmatprep.subr.mxu0 0.0
        %589 = vmatpush1.msra.mxu0 0.0
        %590 = vmatprep.subr.mxu0 0.0
        %591 = vmatpush1.msra.mxu0 0.0
        %592 = vmatprep.subr.mxu0 0.0
        %593 = vmatpush1.msra.mxu0 0.0
        %594 = vmatprep.subr.mxu0 0.0
        %595 = vmatpush1.msra.mxu0 0.0
        %596 = vmatprep.subr.mxu0 0.0
        %597 = vmatpush1.msra.mxu0 0.0
        %598 = vmatprep.subr.mxu0 0.0
        %599 = vmatpush1.msra.mxu0 0.0
        %600 = vmatprep.subr.mxu0 0.0
        %601 = vmatpush1.msra.mxu0 0.0
        %602 = vmatprep.subr.mxu0 0.0
        %603 = vmatpush1.msra.mxu0 0.0
        %604 = vmatprep.subr.mxu0 0.0
        %605 = vmatpush1.msra.mxu0 0.0
        %606 = vmatprep.subr.mxu0 0.0
        %607 = vmatpush1.msra.mxu0 0.0
        %608 = vmatprep.subr.mxu0 0.0
        %609 = vmatpush1.msra.mxu0 0.0
        %610 = vmatprep.subr.mxu0 0.0
        %611 = vmatpush1.msra.mxu0 0.0
        %612 = vmatprep.mubr.f32.mxu0 0.0
        %613 = vmatmul.mubr.f32.gmra.mrb[0].mxu0 %v543
        %v614 = vpop.f32.mrb[0].mxu0
        %v615 = vadd.f32 0.0, %v614
        %v616 = vpop.f32.mrb[0].mxu0
        %617 = vmatprep.mubr.f32.mxu0 0.0
        %618 = vmatmul.mubr.f32.gmra.mrb[0].mxu0 %v546
        %v619 = vpop.f32.mrb[0].mxu0
        %v620 = vadd.f32 0.0, %v619
        %v621 = vpop.f32.mrb[0].mxu0
        %622 = vdwg.mxu0
        %s623 = scalar_lea.vmem %s7, 256
        %v624 = vld [vmem:[%s623] sm:$0xff]
        %v625 = vld [vmem:[%s623 + $0x8] sm:$0xff]
        %v626 = vld [vmem:[%s623 + $0x10] sm:$0xff]
        %v627 = vld [vmem:[%s623 + $0x18] sm:$0xff]
        %v629 = vsel %vm541, %v615, 0
        %v632 = vsel %vm541, %v620, 0
        %634 = vmatprep.subr.mxu0 0.0
        %635 = vmatpush1.msra.mxu0 %v624
        %636 = vmatprep.subr.mxu0 0.0
        %637 = vmatpush1.msra.mxu0 %v625
        %638 = vmatprep.subr.mxu0 0.0
        %639 = vmatpush1.msra.mxu0 %v626
        %640 = vmatprep.subr.mxu0 0.0
        %641 = vmatpush1.msra.mxu0 %v627
        %642 = vmatprep.subr.mxu0 0.0
        %643 = vmatpush1.msra.mxu0 0.0
        %644 = vmatprep.subr.mxu0 0.0
        %645 = vmatpush1.msra.mxu0 0.0
        %646 = vmatprep.subr.mxu0 0.0
        %647 = vmatpush1.msra.mxu0 0.0
        %648 = vmatprep.subr.mxu0 0.0
        %649 = vmatpush1.msra.mxu0 0.0
        %650 = vmatprep.subr.mxu0 0.0
        %651 = vmatpush1.msra.mxu0 0.0
        %652 = vmatprep.subr.mxu0 0.0
        %653 = vmatpush1.msra.mxu0 0.0
        %654 = vmatprep.subr.mxu0 0.0
        %655 = vmatpush1.msra.mxu0 0.0
        %656 = vmatprep.subr.mxu0 0.0
        %657 = vmatpush1.msra.mxu0 0.0
        %658 = vmatprep.subr.mxu0 0.0
        %659 = vmatpush1.msra.mxu0 0.0
        %660 = vmatprep.subr.mxu0 0.0
        %661 = vmatpush1.msra.mxu0 0.0
        %662 = vmatprep.subr.mxu0 0.0
        %663 = vmatpush1.msra.mxu0 0.0
        %664 = vmatprep.subr.mxu0 0.0
        %665 = vmatpush1.msra.mxu0 0.0
        %666 = vmatprep.subr.mxu0 0.0
        %667 = vmatpush1.msra.mxu0 0.0
        %668 = vmatprep.subr.mxu0 0.0
        %669 = vmatpush1.msra.mxu0 0.0
        %670 = vmatprep.subr.mxu0 0.0
        %671 = vmatpush1.msra.mxu0 0.0
        %672 = vmatprep.subr.mxu0 0.0
        %673 = vmatpush1.msra.mxu0 0.0
        %674 = vmatprep.subr.mxu0 0.0
        %675 = vmatpush1.msra.mxu0 0.0
        %676 = vmatprep.subr.mxu0 0.0
        %677 = vmatpush1.msra.mxu0 0.0
        %678 = vmatprep.subr.mxu0 0.0
        %679 = vmatpush1.msra.mxu0 0.0
        %680 = vmatprep.subr.mxu0 0.0
        %681 = vmatpush1.msra.mxu0 0.0
        %682 = vmatprep.subr.mxu0 0.0
        %683 = vmatpush1.msra.mxu0 0.0
        %684 = vmatprep.subr.mxu0 0.0
        %685 = vmatpush1.msra.mxu0 0.0
        %686 = vmatprep.subr.mxu0 0.0
        %687 = vmatpush1.msra.mxu0 0.0
        %688 = vmatprep.subr.mxu0 0.0
        %689 = vmatpush1.msra.mxu0 0.0
        %690 = vmatprep.subr.mxu0 0.0
        %691 = vmatpush1.msra.mxu0 0.0
        %692 = vmatprep.subr.mxu0 0.0
        %693 = vmatpush1.msra.mxu0 0.0
        %694 = vmatprep.subr.mxu0 0.0
        %695 = vmatpush1.msra.mxu0 0.0
        %696 = vmatprep.subr.mxu0 0.0
        %697 = vmatpush1.msra.mxu0 0.0
        %698 = vmatprep.mubr.f32.mxu0 0.0
        %699 = vmatmul.mubr.f32.gmra.mrb[0].mxu0 %v629
        %v700 = vpop.f32.mrb[0].mxu0
        %v701 = vadd.f32 0.0, %v700
        %v702 = vpop.f32.mrb[0].mxu0
        %703 = vmatprep.mubr.f32.mxu0 0.0
        %704 = vmatmul.mubr.f32.gmra.mrb[0].mxu0 %v632
        %v705 = vpop.f32.mrb[0].mxu0
        %v706 = vadd.f32 0.0, %v705
        %v707 = vpop.f32.mrb[0].mxu0
        %708 = vdwg.mxu0
        %vm709 = vcmask 80896
        %v711 = vsel %vm709, %v517, 0
        %v714 = vsel %vm709, %v518, 0
        %v717 = vsel %vm709, %v519, 0
        %v720 = vsel %vm709, %v520, 0
        %vm722 = vcmask 1041408
        %v724 = vsel %vm722, %v706, 0
        %726 = vmatprep.subr.mxu0 0.0
        %727 = vmatpush1.msra.mxu0 %v701
        %728 = vmatprep.subr.mxu0 0.0
        %729 = vmatpush1.msra.mxu0 %v724
        %730 = vmatprep.subr.mxu0 0.0
        %731 = vmatpush1.msra.mxu0 0.0
        %732 = vmatprep.subr.mxu0 0.0
        %733 = vmatpush1.msra.mxu0 0.0
        %734 = vmatprep.subr.mxu0 0.0
        %735 = vmatpush1.msra.mxu0 0.0
        %736 = vmatprep.subr.mxu0 0.0
        %737 = vmatpush1.msra.mxu0 0.0
        %738 = vmatprep.subr.mxu0 0.0
        %739 = vmatpush1.msra.mxu0 0.0
        %740 = vmatprep.subr.mxu0 0.0
        %741 = vmatpush1.msra.mxu0 0.0
        %742 = vmatprep.subr.mxu0 0.0
        %743 = vmatpush1.msra.mxu0 0.0
        %744 = vmatprep.subr.mxu0 0.0
        %745 = vmatpush1.msra.mxu0 0.0
        %746 = vmatprep.subr.mxu0 0.0
        %747 = vmatpush1.msra.mxu0 0.0
        %748 = vmatprep.subr.mxu0 0.0
        %749 = vmatpush1.msra.mxu0 0.0
        %750 = vmatprep.subr.mxu0 0.0
        %751 = vmatpush1.msra.mxu0 0.0
        %752 = vmatprep.subr.mxu0 0.0
        %753 = vmatpush1.msra.mxu0 0.0
        %754 = vmatprep.subr.mxu0 0.0
        %755 = vmatpush1.msra.mxu0 0.0
        %756 = vmatprep.subr.mxu0 0.0
        %757 = vmatpush1.msra.mxu0 0.0
        %758 = vmatprep.subr.mxu0 0.0
        %759 = vmatpush1.msra.mxu0 0.0
        %760 = vmatprep.subr.mxu0 0.0
        %761 = vmatpush1.msra.mxu0 0.0
        %762 = vmatprep.subr.mxu0 0.0
        %763 = vmatpush1.msra.mxu0 0.0
        %764 = vmatprep.subr.mxu0 0.0
        %765 = vmatpush1.msra.mxu0 0.0
        %766 = vmatprep.subr.mxu0 0.0
        %767 = vmatpush1.msra.mxu0 0.0
        %768 = vmatprep.subr.mxu0 0.0
        %769 = vmatpush1.msra.mxu0 0.0
        %770 = vmatprep.subr.mxu0 0.0
        %771 = vmatpush1.msra.mxu0 0.0
        %772 = vmatprep.subr.mxu0 0.0
        %773 = vmatpush1.msra.mxu0 0.0
        %774 = vmatprep.subr.mxu0 0.0
        %775 = vmatpush1.msra.mxu0 0.0
        %776 = vmatprep.subr.mxu0 0.0
        %777 = vmatpush1.msra.mxu0 0.0
        %778 = vmatprep.subr.mxu0 0.0
        %779 = vmatpush1.msra.mxu0 0.0
        %780 = vmatprep.subr.mxu0 0.0
        %781 = vmatpush1.msra.mxu0 0.0
        %782 = vmatprep.subr.mxu0 0.0
        %783 = vmatpush1.msra.mxu0 0.0
        %784 = vmatprep.subr.mxu0 0.0
        %785 = vmatpush1.msra.mxu0 0.0
        %786 = vmatprep.subr.mxu0 0.0
        %787 = vmatpush1.msra.mxu0 0.0
        %788 = vmatprep.subr.mxu0 0.0
        %789 = vmatpush1.msra.mxu0 0.0
        %790 = vmatprep.mubr.f32.mxu0 0.0
        %791 = vmatmul.mubr.f32.gmra.mrb[0].mxu0 %v711
        %v792 = vpop.f32.mrb[0].mxu0
        %v793 = vadd.f32 0.0, %v792
        %v794 = vpop.f32.mrb[0].mxu0
        %795 = vmatprep.mubr.f32.mxu0 0.0
        %796 = vmatmul.mubr.f32.gmra.mrb[0].mxu0 %v714
        %v797 = vpop.f32.mrb[0].mxu0
        %v798 = vadd.f32 0.0, %v797
        %v799 = vpop.f32.mrb[0].mxu0
        %800 = vmatprep.mubr.f32.mxu0 0.0
        %801 = vmatmul.mubr.f32.gmra.mrb[0].mxu0 %v717
        %v802 = vpop.f32.mrb[0].mxu0
        %v803 = vadd.f32 0.0, %v802
        %v804 = vpop.f32.mrb[0].mxu0
        %805 = vmatprep.mubr.f32.mxu0 0.0
        %806 = vmatmul.mubr.f32.gmra.mrb[0].mxu0 %v720
        %v807 = vpop.f32.mrb[0].mxu0
        %v808 = vadd.f32 0.0, %v807
        %v809 = vpop.f32.mrb[0].mxu0
        %810 = vdwg.mxu0
        %v812 = vsel %vm709, %v521, 0
        %v815 = vsel %vm709, %v522, 0
        %v818 = vsel %vm709, %v523, 0
        %v821 = vsel %vm709, %v524, 0
        %823 = vmatprep.subr.mxu0 0.0
        %824 = vmatpush1.msra.mxu0 %v701
        %825 = vmatprep.subr.mxu0 0.0
        %826 = vmatpush1.msra.mxu0 %v724
        %827 = vmatprep.subr.mxu0 0.0
        %828 = vmatpush1.msra.mxu0 0.0
        %829 = vmatprep.subr.mxu0 0.0
        %830 = vmatpush1.msra.mxu0 0.0
        %831 = vmatprep.subr.mxu0 0.0
        %832 = vmatpush1.msra.mxu0 0.0
        %833 = vmatprep.subr.mxu0 0.0
        %834 = vmatpush1.msra.mxu0 0.0
        %835 = vmatprep.subr.mxu0 0.0
        %836 = vmatpush1.msra.mxu0 0.0
        %837 = vmatprep.subr.mxu0 0.0
        %838 = vmatpush1.msra.mxu0 0.0
        %839 = vmatprep.subr.mxu0 0.0
        %840 = vmatpush1.msra.mxu0 0.0
        %841 = vmatprep.subr.mxu0 0.0
        %842 = vmatpush1.msra.mxu0 0.0
        %843 = vmatprep.subr.mxu0 0.0
        %844 = vmatpush1.msra.mxu0 0.0
        %845 = vmatprep.subr.mxu0 0.0
        %846 = vmatpush1.msra.mxu0 0.0
        %847 = vmatprep.subr.mxu0 0.0
        %848 = vmatpush1.msra.mxu0 0.0
        %849 = vmatprep.subr.mxu0 0.0
        %850 = vmatpush1.msra.mxu0 0.0
        %851 = vmatprep.subr.mxu0 0.0
        %852 = vmatpush1.msra.mxu0 0.0
        %853 = vmatprep.subr.mxu0 0.0
        %854 = vmatpush1.msra.mxu0 0.0
        %855 = vmatprep.subr.mxu0 0.0
        %856 = vmatpush1.msra.mxu0 0.0
        %857 = vmatprep.subr.mxu0 0.0
        %858 = vmatpush1.msra.mxu0 0.0
        %859 = vmatprep.subr.mxu0 0.0
        %860 = vmatpush1.msra.mxu0 0.0
        %861 = vmatprep.subr.mxu0 0.0
        %862 = vmatpush1.msra.mxu0 0.0
        %863 = vmatprep.subr.mxu0 0.0
        %864 = vmatpush1.msra.mxu0 0.0
        %865 = vmatprep.subr.mxu0 0.0
        %866 = vmatpush1.msra.mxu0 0.0
        %867 = vmatprep.subr.mxu0 0.0
        %868 = vmatpush1.msra.mxu0 0.0
        %869 = vmatprep.subr.mxu0 0.0
        %870 = vmatpush1.msra.mxu0 0.0
        %871 = vmatprep.subr.mxu0 0.0
        %872 = vmatpush1.msra.mxu0 0.0
        %873 = vmatprep.subr.mxu0 0.0
        %874 = vmatpush1.msra.mxu0 0.0
        %875 = vmatprep.subr.mxu0 0.0
        %876 = vmatpush1.msra.mxu0 0.0
        %877 = vmatprep.subr.mxu0 0.0
        %878 = vmatpush1.msra.mxu0 0.0
        %879 = vmatprep.subr.mxu0 0.0
        %880 = vmatpush1.msra.mxu0 0.0
        %881 = vmatprep.subr.mxu0 0.0
        %882 = vmatpush1.msra.mxu0 0.0
        %883 = vmatprep.subr.mxu0 0.0
        %884 = vmatpush1.msra.mxu0 0.0
        %885 = vmatprep.subr.mxu0 0.0
        %886 = vmatpush1.msra.mxu0 0.0
        %887 = vmatprep.mubr.f32.mxu0 0.0
        %888 = vmatmul.mubr.f32.gmra.mrb[0].mxu0 %v812
        %v889 = vpop.f32.mrb[0].mxu0
        %v890 = vadd.f32 0.0, %v889
        %v891 = vpop.f32.mrb[0].mxu0
        %892 = vmatprep.mubr.f32.mxu0 0.0
        %893 = vmatmul.mubr.f32.gmra.mrb[0].mxu0 %v815
        %v894 = vpop.f32.mrb[0].mxu0
        %v895 = vadd.f32 0.0, %v894
        %v896 = vpop.f32.mrb[0].mxu0
        %897 = vmatprep.mubr.f32.mxu0 0.0
        %898 = vmatmul.mubr.f32.gmra.mrb[0].mxu0 %v818
        %v899 = vpop.f32.mrb[0].mxu0
        %v900 = vadd.f32 0.0, %v899
        %v901 = vpop.f32.mrb[0].mxu0
        %902 = vmatprep.mubr.f32.mxu0 0.0
        %903 = vmatmul.mubr.f32.gmra.mrb[0].mxu0 %v821
        %v904 = vpop.f32.mrb[0].mxu0
        %v905 = vadd.f32 0.0, %v904
        %v906 = vpop.f32.mrb[0].mxu0
        %907 = vdwg.mxu0
        %912 = vrot.lane.b32.xlu0 %v890, 124
        %v913 = vpop.permute.xlu0 %912
        %914 = vrot.lane.b32.xlu0 %v895, 124
        %v915 = vpop.permute.xlu0 %914
        %916 = vrot.lane.b32.xlu0 %v900, 124
        %v917 = vpop.permute.xlu0 %916
        %918 = vrot.lane.b32.xlu0 %v905, 124
        %v919 = vpop.permute.xlu0 %918
        %v924 = vadd.f32 %v793, %v913
        %v925 = vadd.f32 %v798, %v915
        %v926 = vadd.f32 %v803, %v917
        %v927 = vadd.f32 %v808, %v919
        %vm928 = vcmp.ge.f32.partialorder %v924, 0.0
        %vm929 = vcmp.ge.f32.partialorder %v925, 0.0
        %vm930 = vcmp.ge.f32.partialorder %v926, 0.0
        %vm931 = vcmp.ge.f32.partialorder %v927, 0.0
        %v932 = vmul.f32 %v924, 0.2
        %v933 = vmul.f32 %v925, 0.2
        %v934 = vmul.f32 %v926, 0.2
        %v935 = vmul.f32 %v927, 0.2
        %v936 = vsel %vm928, %v924, %v932
        %v937 = vsel %vm929, %v925, %v933
        %v938 = vsel %vm930, %v926, %v934
        %v939 = vsel %vm931, %v927, %v935
        %vm940 = vcmask 31744
        %v941 = vsel %vm940, %v936, -inf
        %v942 = vsel %vm940, %v937, -inf
        %v943 = vsel %vm940, %v938, -inf
        %vm944 = vcmask 25600
        %v945 = vsel %vm944, %v939, -inf
        %v946 = vmax.f32 %v941, %v942
        %v947 = vmax.f32 %v943, %v945
        %v948 = vmax.f32 %v946, %v947
        %v949 = vrot.slane %v948, 4
        %v950 = vmax.f32 %v948, %v949
        %v951 = vrot.slane %v950, 2
        %v952 = vmax.f32 %v950, %v951
        %v953 = vrot.slane %v952, 1
        %v954 = vmax.f32 %v952, %v953
        %v955 = vsub.f32 %v936, %v954
        %v956 = vsub.f32 %v937, %v954
        %v957 = vsub.f32 %v938, %v954
        %v958 = vsub.f32 %v939, %v954
        %v959 = vmul.f32 %v955, 1.442695
        %v960 = vpow.pop %v959
        %v961 = vmul.f32 %v956, 1.442695
        %v962 = vpow.pop %v961
        %v963 = vmul.f32 %v957, 1.442695
        %v964 = vpow.pop %v963
        %v965 = vmul.f32 %v958, 1.442695
        %v966 = vpow.pop %v965
        %967 = vxpose.xlu0.b32.start [1/16] %v521, 128
        %968 = vxpose.xlu0.b32.cont [2/16] %v522, 128
        %969 = vxpose.xlu0.b32.cont [3/16] %v523, 128
        %970 = vxpose.xlu0.b32.cont [4/16] %v524, 128
        %971 = vxpose.xlu0.b32.cont [5/16] 0.0, 128
        %972 = vxpose.xlu0.b32.cont [6/16] 0.0, 128
        %973 = vxpose.xlu0.b32.cont [7/16] 0.0, 128
        %974 = vxpose.xlu0.b32.cont [8/16] 0.0, 128
        %975 = vxpose.xlu0.b32.cont [9/16] 0.0, 128
        %976 = vxpose.xlu0.b32.cont [10/16] 0.0, 128
        %977 = vxpose.xlu0.b32.cont [11/16] 0.0, 128
        %978 = vxpose.xlu0.b32.cont [12/16] 0.0, 128
        %979 = vxpose.xlu0.b32.cont [13/16] 0.0, 128
        %980 = vxpose.xlu0.b32.cont [14/16] 0.0, 128
        %981 = vxpose.xlu0.b32.cont [15/16] 0.0, 128
        %982 = vxpose.xlu0.b32.end [16/16] 0.0, 128
        %v983 = vpop.trf.xlu0
        %v984 = vpop.trf.xlu0
        %v985 = vpop.trf.xlu0
        %v986 = vpop.trf.xlu0
        %v987 = vpop.trf.xlu0
        %v988 = vpop.trf.xlu0
        %v989 = vpop.trf.xlu0
        %v990 = vpop.trf.xlu0
        %v991 = vpop.trf.xlu0
        %v992 = vpop.trf.xlu0
        %v993 = vpop.trf.xlu0
        %v994 = vpop.trf.xlu0
        %v995 = vpop.trf.xlu0
        %v996 = vpop.trf.xlu0
        %v997 = vpop.trf.xlu0
        %v998 = vpop.trf.xlu0
        %vm999 = vcmask 211968
        %v1001 = vsel %vm999, %v983, 0
        %v1004 = vsel %vm999, %v984, 0
        %v1007 = vsel %vm722, %v966, 0
        %1009 = vmatprep.subr.mxu0 0.0
        %1010 = vmatpush1.msra.mxu0 %v960
        %1011 = vmatprep.subr.mxu0 0.0
        %1012 = vmatpush1.msra.mxu0 %v962
        %1013 = vmatprep.subr.mxu0 0.0
        %1014 = vmatpush1.msra.mxu0 %v964
        %1015 = vmatprep.subr.mxu0 0.0
        %1016 = vmatpush1.msra.mxu0 %v1007
        %1017 = vmatprep.subr.mxu0 0.0
        %1018 = vmatpush1.msra.mxu0 0.0
        %1019 = vmatprep.subr.mxu0 0.0
        %1020 = vmatpush1.msra.mxu0 0.0
        %1021 = vmatprep.subr.mxu0 0.0
        %1022 = vmatpush1.msra.mxu0 0.0
        %1023 = vmatprep.subr.mxu0 0.0
        %1024 = vmatpush1.msra.mxu0 0.0
        %1025 = vmatprep.subr.mxu0 0.0
        %1026 = vmatpush1.msra.mxu0 0.0
        %1027 = vmatprep.subr.mxu0 0.0
        %1028 = vmatpush1.msra.mxu0 0.0
        %1029 = vmatprep.subr.mxu0 0.0
        %1030 = vmatpush1.msra.mxu0 0.0
        %1031 = vmatprep.subr.mxu0 0.0
        %1032 = vmatpush1.msra.mxu0 0.0
        %1033 = vmatprep.subr.mxu0 0.0
        %1034 = vmatpush1.msra.mxu0 0.0
        %1035 = vmatprep.subr.mxu0 0.0
        %1036 = vmatpush1.msra.mxu0 0.0
        %1037 = vmatprep.subr.mxu0 0.0
        %1038 = vmatpush1.msra.mxu0 0.0
        %1039 = vmatprep.subr.mxu0 0.0
        %1040 = vmatpush1.msra.mxu0 0.0
        %1041 = vmatprep.subr.mxu0 0.0
        %1042 = vmatpush1.msra.mxu0 0.0
        %1043 = vmatprep.subr.mxu0 0.0
        %1044 = vmatpush1.msra.mxu0 0.0
        %1045 = vmatprep.subr.mxu0 0.0
        %1046 = vmatpush1.msra.mxu0 0.0
        %1047 = vmatprep.subr.mxu0 0.0
        %1048 = vmatpush1.msra.mxu0 0.0
        %1049 = vmatprep.subr.mxu0 0.0
        %1050 = vmatpush1.msra.mxu0 0.0
        %1051 = vmatprep.subr.mxu0 0.0
        %1052 = vmatpush1.msra.mxu0 0.0
        %1053 = vmatprep.subr.mxu0 0.0
        %1054 = vmatpush1.msra.mxu0 0.0
        %1055 = vmatprep.subr.mxu0 0.0
        %1056 = vmatpush1.msra.mxu0 0.0
        %1057 = vmatprep.subr.mxu0 0.0
        %1058 = vmatpush1.msra.mxu0 0.0
        %1059 = vmatprep.subr.mxu0 0.0
        %1060 = vmatpush1.msra.mxu0 0.0
        %1061 = vmatprep.subr.mxu0 0.0
        %1062 = vmatpush1.msra.mxu0 0.0
        %1063 = vmatprep.subr.mxu0 0.0
        %1064 = vmatpush1.msra.mxu0 0.0
        %1065 = vmatprep.subr.mxu0 0.0
        %1066 = vmatpush1.msra.mxu0 0.0
        %1067 = vmatprep.subr.mxu0 0.0
        %1068 = vmatpush1.msra.mxu0 0.0
        %1069 = vmatprep.subr.mxu0 0.0
        %1070 = vmatpush1.msra.mxu0 0.0
        %1071 = vmatprep.subr.mxu0 0.0
        %1072 = vmatpush1.msra.mxu0 0.0
        %1073 = vmatprep.mubr.f32.mxu0 0.0
        %1074 = vmatmul.mubr.f32.gmra.mrb[0].mxu0 %v1001
        %v1075 = vpop.f32.mrb[0].mxu0
        %v1076 = vadd.f32 0.0, %v1075
        %v1077 = vpop.f32.mrb[0].mxu0
        %1078 = vmatprep.mubr.f32.mxu0 0.0
        %1079 = vmatmul.mubr.f32.gmra.mrb[0].mxu0 %v1004
        %v1080 = vpop.f32.mrb[0].mxu0
        %v1081 = vadd.f32 0.0, %v1080
        %v1082 = vpop.f32.mrb[0].mxu0
        %1083 = vdwg.mxu0
        %v1085 = vsel %vm722, %v1081, 0
        %1087 = vmatprep.subr.mxu0 0.0
        %1088 = vmatpush1.msra.mxu0 %v1076
        %1089 = vmatprep.subr.mxu0 0.0
        %1090 = vmatpush1.msra.mxu0 %v1085
        %1091 = vmatprep.subr.mxu0 0.0
        %1092 = vmatpush1.msra.mxu0 0.0
        %1093 = vmatprep.subr.mxu0 0.0
        %1094 = vmatpush1.msra.mxu0 0.0
        %1095 = vmatprep.subr.mxu0 0.0
        %1096 = vmatpush1.msra.mxu0 0.0
        %1097 = vmatprep.subr.mxu0 0.0
        %1098 = vmatpush1.msra.mxu0 0.0
        %1099 = vmatprep.subr.mxu0 0.0
        %1100 = vmatpush1.msra.mxu0 0.0
        %1101 = vmatprep.subr.mxu0 0.0
        %1102 = vmatpush1.msra.mxu0 0.0
        %1103 = vmatprep.subr.mxu0 0.0
        %1104 = vmatpush1.msra.mxu0 0.0
        %1105 = vmatprep.subr.mxu0 0.0
        %1106 = vmatpush1.msra.mxu0 0.0
        %1107 = vmatprep.subr.mxu0 0.0
        %1108 = vmatpush1.msra.mxu0 0.0
        %1109 = vmatprep.subr.mxu0 0.0
        %1110 = vmatpush1.msra.mxu0 0.0
        %1111 = vmatprep.subr.mxu0 0.0
        %1112 = vmatpush1.msra.mxu0 0.0
        %1113 = vmatprep.subr.mxu0 0.0
        %1114 = vmatpush1.msra.mxu0 0.0
        %1115 = vmatprep.subr.mxu0 0.0
        %1116 = vmatpush1.msra.mxu0 0.0
        %1117 = vmatprep.subr.mxu0 0.0
        %1118 = vmatpush1.msra.mxu0 0.0
        %1119 = vmatprep.subr.mxu0 0.0
        %1120 = vmatpush1.msra.mxu0 0.0
        %1121 = vmatprep.subr.mxu0 0.0
        %1122 = vmatpush1.msra.mxu0 0.0
        %1123 = vmatprep.subr.mxu0 0.0
        %1124 = vmatpush1.msra.mxu0 0.0
        %1125 = vmatprep.subr.mxu0 0.0
        %1126 = vmatpush1.msra.mxu0 0.0
        %1127 = vmatprep.subr.mxu0 0.0
        %1128 = vmatpush1.msra.mxu0 0.0
        %1129 = vmatprep.subr.mxu0 0.0
        %1130 = vmatpush1.msra.mxu0 0.0
        %1131 = vmatprep.subr.mxu0 0.0
        %1132 = vmatpush1.msra.mxu0 0.0
        %1133 = vmatprep.subr.mxu0 0.0
        %1134 = vmatpush1.msra.mxu0 0.0
        %1135 = vmatprep.subr.mxu0 0.0
        %1136 = vmatpush1.msra.mxu0 0.0
        %1137 = vmatprep.subr.mxu0 0.0
        %1138 = vmatpush1.msra.mxu0 0.0
        %1139 = vmatprep.subr.mxu0 0.0
        %1140 = vmatpush1.msra.mxu0 0.0
        %1141 = vmatprep.subr.mxu0 0.0
        %1142 = vmatpush1.msra.mxu0 0.0
        %1143 = vmatprep.subr.mxu0 0.0
        %1144 = vmatpush1.msra.mxu0 0.0
        %1145 = vmatprep.subr.mxu0 0.0
        %1146 = vmatpush1.msra.mxu0 0.0
        %1147 = vmatprep.subr.mxu0 0.0
        %1148 = vmatpush1.msra.mxu0 0.0
        %1149 = vmatprep.subr.mxu0 0.0
        %1150 = vmatpush1.msra.mxu0 0.0
        %1151 = vmatprep.mubr.f32.mxu0 0.0
        %1152 = vmatmul.mubr.f32.gmra.mrb[0].mxu0 %v812
        %v1153 = vpop.f32.mrb[0].mxu0
        %v1154 = vadd.f32 1e-16, %v1153
        %v1155 = vpop.f32.mrb[0].mxu0
        %1156 = vmatprep.mubr.f32.mxu0 0.0
        %1157 = vmatmul.mubr.f32.gmra.mrb[0].mxu0 %v815
        %v1158 = vpop.f32.mrb[0].mxu0
        %v1159 = vadd.f32 1e-16, %v1158
        %v1160 = vpop.f32.mrb[0].mxu0
        %1161 = vmatprep.mubr.f32.mxu0 0.0
        %1162 = vmatmul.mubr.f32.gmra.mrb[0].mxu0 %v818
        %v1163 = vpop.f32.mrb[0].mxu0
        %v1164 = vadd.f32 1e-16, %v1163
        %v1165 = vpop.f32.mrb[0].mxu0
        %1166 = vmatprep.mubr.f32.mxu0 0.0
        %1167 = vmatmul.mubr.f32.gmra.mrb[0].mxu0 %v821
        %v1168 = vpop.f32.mrb[0].mxu0
        %v1169 = vadd.f32 1e-16, %v1168
        %v1170 = vpop.f32.mrb[0].mxu0
        %1171 = vdwg.mxu0
        %v1172 = vrcp.pop %v1154
        %v1173 = vmul.f32 %v960, %v1172
        %v1174 = vrcp.pop %v1159
        %v1175 = vmul.f32 %v962, %v1174
        %v1176 = vrcp.pop %v1164
        %v1177 = vmul.f32 %v964, %v1176
        %v1178 = vrcp.pop %v1169
        %v1179 = vmul.f32 %v966, %v1178
        %v1180 = vsel %vm722, %v620, 0
        %1182 = vmatprep.subr.mxu0 0.0
        %1183 = vmatpush1.msra.mxu0 %v615
        %1184 = vmatprep.subr.mxu0 0.0
        %1185 = vmatpush1.msra.mxu0 %v1180
        %1186 = vmatprep.subr.mxu0 0.0
        %1187 = vmatpush1.msra.mxu0 0.0
        %1188 = vmatprep.subr.mxu0 0.0
        %1189 = vmatpush1.msra.mxu0 0.0
        %1190 = vmatprep.subr.mxu0 0.0
        %1191 = vmatpush1.msra.mxu0 0.0
        %1192 = vmatprep.subr.mxu0 0.0
        %1193 = vmatpush1.msra.mxu0 0.0
        %1194 = vmatprep.subr.mxu0 0.0
        %1195 = vmatpush1.msra.mxu0 0.0
        %1196 = vmatprep.subr.mxu0 0.0
        %1197 = vmatpush1.msra.mxu0 0.0
        %1198 = vmatprep.subr.mxu0 0.0
        %1199 = vmatpush1.msra.mxu0 0.0
        %1200 = vmatprep.subr.mxu0 0.0
        %1201 = vmatpush1.msra.mxu0 0.0
        %1202 = vmatprep.subr.mxu0 0.0
        %1203 = vmatpush1.msra.mxu0 0.0
        %1204 = vmatprep.subr.mxu0 0.0
        %1205 = vmatpush1.msra.mxu0 0.0
        %1206 = vmatprep.subr.mxu0 0.0
        %1207 = vmatpush1.msra.mxu0 0.0
        %1208 = vmatprep.subr.mxu0 0.0
        %1209 = vmatpush1.msra.mxu0 0.0
        %1210 = vmatprep.subr.mxu0 0.0
        %1211 = vmatpush1.msra.mxu0 0.0
        %1212 = vmatprep.subr.mxu0 0.0
        %1213 = vmatpush1.msra.mxu0 0.0
        %1214 = vmatprep.subr.mxu0 0.0
        %1215 = vmatpush1.msra.mxu0 0.0
        %1216 = vmatprep.subr.mxu0 0.0
        %1217 = vmatpush1.msra.mxu0 0.0
        %1218 = vmatprep.subr.mxu0 0.0
        %1219 = vmatpush1.msra.mxu0 0.0
        %1220 = vmatprep.subr.mxu0 0.0
        %1221 = vmatpush1.msra.mxu0 0.0
        %1222 = vmatprep.subr.mxu0 0.0
        %1223 = vmatpush1.msra.mxu0 0.0
        %1224 = vmatprep.subr.mxu0 0.0
        %1225 = vmatpush1.msra.mxu0 0.0
        %1226 = vmatprep.subr.mxu0 0.0
        %1227 = vmatpush1.msra.mxu0 0.0
        %1228 = vmatprep.subr.mxu0 0.0
        %1229 = vmatpush1.msra.mxu0 0.0
        %1230 = vmatprep.subr.mxu0 0.0
        %1231 = vmatpush1.msra.mxu0 0.0
        %1232 = vmatprep.subr.mxu0 0.0
        %1233 = vmatpush1.msra.mxu0 0.0
        %1234 = vmatprep.subr.mxu0 0.0
        %1235 = vmatpush1.msra.mxu0 0.0
        %1236 = vmatprep.subr.mxu0 0.0
        %1237 = vmatpush1.msra.mxu0 0.0
        %1238 = vmatprep.subr.mxu0 0.0
        %1239 = vmatpush1.msra.mxu0 0.0
        %1240 = vmatprep.subr.mxu0 0.0
        %1241 = vmatpush1.msra.mxu0 0.0
        %1242 = vmatprep.subr.mxu0 0.0
        %1243 = vmatpush1.msra.mxu0 0.0
        %1244 = vmatprep.subr.mxu0 0.0
        %1245 = vmatpush1.msra.mxu0 0.0
        %1246 = vmatprep.mubr.f32.mxu0 0.0
        %1247 = vmatmul.mubr.f32.gmra.mrb[0].mxu0 %v711
        %v1248 = vpop.f32.mrb[0].mxu0
        %v1249 = vadd.f32 0.0, %v1248
        %v1250 = vpop.f32.mrb[0].mxu0
        %1251 = vmatprep.mubr.f32.mxu0 0.0
        %1252 = vmatmul.mubr.f32.gmra.mrb[0].mxu0 %v714
        %v1253 = vpop.f32.mrb[0].mxu0
        %v1254 = vadd.f32 0.0, %v1253
        %v1255 = vpop.f32.mrb[0].mxu0
        %1256 = vmatprep.mubr.f32.mxu0 0.0
        %1257 = vmatmul.mubr.f32.gmra.mrb[0].mxu0 %v717
        %v1258 = vpop.f32.mrb[0].mxu0
        %v1259 = vadd.f32 0.0, %v1258
        %v1260 = vpop.f32.mrb[0].mxu0
        %1261 = vmatprep.mubr.f32.mxu0 0.0
        %1262 = vmatmul.mubr.f32.gmra.mrb[0].mxu0 %v720
        %v1263 = vpop.f32.mrb[0].mxu0
        %v1264 = vadd.f32 0.0, %v1263
        %v1265 = vpop.f32.mrb[0].mxu0
        %1266 = vdwg.mxu0
        %v1268 = vsel %vm940, %v1173, 0
        %v1271 = vsel %vm940, %v1175, 0
        %v1274 = vsel %vm940, %v1177, 0
        %v1277 = vsel %vm940, %v1179, 0
        %vm1279 = vcmask 1043456
        %v1281 = vsel %vm1279, %v533, 0
        %1283 = vmatprep.subr.mxu0 0.0
        %1284 = vmatpush1.msra.mxu0 %v1281
        %1285 = vmatprep.subr.mxu0 0.0
        %1286 = vmatpush1.msra.mxu0 0.0
        %1287 = vmatprep.subr.mxu0 0.0
        %1288 = vmatpush1.msra.mxu0 0.0
        %1289 = vmatprep.subr.mxu0 0.0
        %1290 = vmatpush1.msra.mxu0 0.0
        %1291 = vmatprep.subr.mxu0 0.0
        %1292 = vmatpush1.msra.mxu0 0.0
        %1293 = vmatprep.subr.mxu0 0.0
        %1294 = vmatpush1.msra.mxu0 0.0
        %1295 = vmatprep.subr.mxu0 0.0
        %1296 = vmatpush1.msra.mxu0 0.0
        %1297 = vmatprep.subr.mxu0 0.0
        %1298 = vmatpush1.msra.mxu0 0.0
        %1299 = vmatprep.subr.mxu0 0.0
        %1300 = vmatpush1.msra.mxu0 0.0
        %1301 = vmatprep.subr.mxu0 0.0
        %1302 = vmatpush1.msra.mxu0 0.0
        %1303 = vmatprep.subr.mxu0 0.0
        %1304 = vmatpush1.msra.mxu0 0.0
        %1305 = vmatprep.subr.mxu0 0.0
        %1306 = vmatpush1.msra.mxu0 0.0
        %1307 = vmatprep.subr.mxu0 0.0
        %1308 = vmatpush1.msra.mxu0 0.0
        %1309 = vmatprep.subr.mxu0 0.0
        %1310 = vmatpush1.msra.mxu0 0.0
        %1311 = vmatprep.subr.mxu0 0.0
        %1312 = vmatpush1.msra.mxu0 0.0
        %1313 = vmatprep.subr.mxu0 0.0
        %1314 = vmatpush1.msra.mxu0 0.0
        %1315 = vmatprep.subr.mxu0 0.0
        %1316 = vmatpush1.msra.mxu0 0.0
        %1317 = vmatprep.subr.mxu0 0.0
        %1318 = vmatpush1.msra.mxu0 0.0
        %1319 = vmatprep.subr.mxu0 0.0
        %1320 = vmatpush1.msra.mxu0 0.0
        %1321 = vmatprep.subr.mxu0 0.0
        %1322 = vmatpush1.msra.mxu0 0.0
        %1323 = vmatprep.subr.mxu0 0.0
        %1324 = vmatpush1.msra.mxu0 0.0
        %1325 = vmatprep.subr.mxu0 0.0
        %1326 = vmatpush1.msra.mxu0 0.0
        %1327 = vmatprep.subr.mxu0 0.0
        %1328 = vmatpush1.msra.mxu0 0.0
        %1329 = vmatprep.subr.mxu0 0.0
        %1330 = vmatpush1.msra.mxu0 0.0
        %1331 = vmatprep.subr.mxu0 0.0
        %1332 = vmatpush1.msra.mxu0 0.0
        %1333 = vmatprep.subr.mxu0 0.0
        %1334 = vmatpush1.msra.mxu0 0.0
        %1335 = vmatprep.subr.mxu0 0.0
        %1336 = vmatpush1.msra.mxu0 0.0
        %1337 = vmatprep.subr.mxu0 0.0
        %1338 = vmatpush1.msra.mxu0 0.0
        %1339 = vmatprep.subr.mxu0 0.0
        %1340 = vmatpush1.msra.mxu0 0.0
        %1341 = vmatprep.subr.mxu0 0.0
        %1342 = vmatpush1.msra.mxu0 0.0
        %1343 = vmatprep.subr.mxu0 0.0
        %1344 = vmatpush1.msra.mxu0 0.0
        %1345 = vmatprep.subr.mxu0 0.0
        %1346 = vmatpush1.msra.mxu0 0.0
        %1347 = vmatprep.mubr.f32.mxu0 0.0
        %1348 = vmatmul.mubr.f32.gmra.mrb[0].mxu0 %v1268
        %v1349 = vpop.f32.mrb[0].mxu0
        %v1350 = vadd.f32 0.0, %v1349
        %v1351 = vpop.f32.mrb[0].mxu0
        %1352 = vmatprep.mubr.f32.mxu0 0.0
        %1353 = vmatmul.mubr.f32.gmra.mrb[0].mxu0 %v1271
        %v1354 = vpop.f32.mrb[0].mxu0
        %v1355 = vadd.f32 0.0, %v1354
        %v1356 = vpop.f32.mrb[0].mxu0
        %1357 = vmatprep.mubr.f32.mxu0 0.0
        %1358 = vmatmul.mubr.f32.gmra.mrb[0].mxu0 %v1274
        %v1359 = vpop.f32.mrb[0].mxu0
        %v1360 = vadd.f32 0.0, %v1359
        %v1361 = vpop.f32.mrb[0].mxu0
        %1362 = vmatprep.mubr.f32.mxu0 0.0
        %1363 = vmatmul.mubr.f32.gmra.mrb[0].mxu0 %v1277
        %v1364 = vpop.f32.mrb[0].mxu0
        %v1365 = vadd.f32 0.0, %v1364
        %v1366 = vpop.f32.mrb[0].mxu0
        %1367 = vdwg.mxu0
        %v1368 = vmul.f32 %v1249, %v1350
        %v1369 = vmul.f32 %v1254, %v1355
        %v1370 = vmul.f32 %v1259, %v1360
        %v1371 = vmul.f32 %v1264, %v1365
        %v1372 = vlaneseq
        %v1373 = vshrl.u32 %v1372, 7
        %v1374 = vsub.s32 0, %v1373
        %v1375 = vrot.slane %v534, %v1374
        %v1377 = vsel %vm722, %v1371, 0
        %1379 = vmatprep.subr.mxu0 0.0
        %1380 = vmatpush1.msra.mxu0 %v1368
        %1381 = vmatprep.subr.mxu0 0.0
        %1382 = vmatpush1.msra.mxu0 %v1369
        %1383 = vmatprep.subr.mxu0 0.0
        %1384 = vmatpush1.msra.mxu0 %v1370
        %1385 = vmatprep.subr.mxu0 0.0
        %1386 = vmatpush1.msra.mxu0 %v1377
        %1387 = vmatprep.subr.mxu0 0.0
        %1388 = vmatpush1.msra.mxu0 0.0
        %1389 = vmatprep.subr.mxu0 0.0
        %1390 = vmatpush1.msra.mxu0 0.0
        %1391 = vmatprep.subr.mxu0 0.0
        %1392 = vmatpush1.msra.mxu0 0.0
        %1393 = vmatprep.subr.mxu0 0.0
        %1394 = vmatpush1.msra.mxu0 0.0
        %1395 = vmatprep.subr.mxu0 0.0
        %1396 = vmatpush1.msra.mxu0 0.0
        %1397 = vmatprep.subr.mxu0 0.0
        %1398 = vmatpush1.msra.mxu0 0.0
        %1399 = vmatprep.subr.mxu0 0.0
        %1400 = vmatpush1.msra.mxu0 0.0
        %1401 = vmatprep.subr.mxu0 0.0
        %1402 = vmatpush1.msra.mxu0 0.0
        %1403 = vmatprep.subr.mxu0 0.0
        %1404 = vmatpush1.msra.mxu0 0.0
        %1405 = vmatprep.subr.mxu0 0.0
        %1406 = vmatpush1.msra.mxu0 0.0
        %1407 = vmatprep.subr.mxu0 0.0
        %1408 = vmatpush1.msra.mxu0 0.0
        %1409 = vmatprep.subr.mxu0 0.0
        %1410 = vmatpush1.msra.mxu0 0.0
        %1411 = vmatprep.subr.mxu0 0.0
        %1412 = vmatpush1.msra.mxu0 0.0
        %1413 = vmatprep.subr.mxu0 0.0
        %1414 = vmatpush1.msra.mxu0 0.0
        %1415 = vmatprep.subr.mxu0 0.0
        %1416 = vmatpush1.msra.mxu0 0.0
        %1417 = vmatprep.subr.mxu0 0.0
        %1418 = vmatpush1.msra.mxu0 0.0
        %1419 = vmatprep.subr.mxu0 0.0
        %1420 = vmatpush1.msra.mxu0 0.0
        %1421 = vmatprep.subr.mxu0 0.0
        %1422 = vmatpush1.msra.mxu0 0.0
        %1423 = vmatprep.subr.mxu0 0.0
        %1424 = vmatpush1.msra.mxu0 0.0
        %1425 = vmatprep.subr.mxu0 0.0
        %1426 = vmatpush1.msra.mxu0 0.0
        %1427 = vmatprep.subr.mxu0 0.0
        %1428 = vmatpush1.msra.mxu0 0.0
        %1429 = vmatprep.subr.mxu0 0.0
        %1430 = vmatpush1.msra.mxu0 0.0
        %1431 = vmatprep.subr.mxu0 0.0
        %1432 = vmatpush1.msra.mxu0 0.0
        %1433 = vmatprep.subr.mxu0 0.0
        %1434 = vmatpush1.msra.mxu0 0.0
        %1435 = vmatprep.subr.mxu0 0.0
        %1436 = vmatpush1.msra.mxu0 0.0
        %1437 = vmatprep.subr.mxu0 0.0
        %1438 = vmatpush1.msra.mxu0 0.0
        %1439 = vmatprep.subr.mxu0 0.0
        %1440 = vmatpush1.msra.mxu0 0.0
        %1441 = vmatprep.subr.mxu0 0.0
        %1442 = vmatpush1.msra.mxu0 0.0
        %1443 = vmatprep.mubr.f32.mxu0 0.0
        %1444 = vmatmul.mubr.f32.gmra.mrb[0].mxu0 %v1001
        %v1445 = vpop.f32.mrb[0].mxu0
        %v1446 = vadd.f32 %v1375, %v1445
        %v1447 = vpop.f32.mrb[0].mxu0
        %1448 = vmatprep.mubr.f32.mxu0 0.0
        %1449 = vmatmul.mubr.f32.gmra.mrb[0].mxu0 %v1004
        %v1450 = vpop.f32.mrb[0].mxu0
        %v1451 = vadd.f32 %v1375, %v1450
        %v1452 = vpop.f32.mrb[0].mxu0
        %1453 = vdwg.mxu0
        %vm1454 = vcmp.gt.f32.partialorder %v1446, 0.0
        %vm1455 = vcmp.gt.f32.partialorder %v1451, 0.0
        %v1456 = vmul.f32 %v1446, 1.442695
        %v1457 = vpow.pop %v1456
        %v1458 = vmul.f32 %v1451, 1.442695
        %v1459 = vpow.pop %v1458
        %v1460 = vsub.f32 %v1457, 1.0
        %v1461 = vsub.f32 %v1459, 1.0
        %v1462 = vsel %vm1454, %v1446, %v1460
        %v1463 = vsel %vm1455, %v1451, %v1461
        %v1465 = vsel %vm541, %v1462, 0
        %v1468 = vsel %vm541, %v1463, 0
        %1470 = vmatprep.subr.mxu0 0.0
        %1471 = vmatpush1.msra.mxu0 %v529
        %1472 = vmatprep.subr.mxu0 0.0
        %1473 = vmatpush1.msra.mxu0 %v530
        %1474 = vmatprep.subr.mxu0 0.0
        %1475 = vmatpush1.msra.mxu0 %v531
        %1476 = vmatprep.subr.mxu0 0.0
        %1477 = vmatpush1.msra.mxu0 %v532
        %1478 = vmatprep.subr.mxu0 0.0
        %1479 = vmatpush1.msra.mxu0 0.0
        %1480 = vmatprep.subr.mxu0 0.0
        %1481 = vmatpush1.msra.mxu0 0.0
        %1482 = vmatprep.subr.mxu0 0.0
        %1483 = vmatpush1.msra.mxu0 0.0
        %1484 = vmatprep.subr.mxu0 0.0
        %1485 = vmatpush1.msra.mxu0 0.0
        %1486 = vmatprep.subr.mxu0 0.0
        %1487 = vmatpush1.msra.mxu0 0.0
        %1488 = vmatprep.subr.mxu0 0.0
        %1489 = vmatpush1.msra.mxu0 0.0
        %1490 = vmatprep.subr.mxu0 0.0
        %1491 = vmatpush1.msra.mxu0 0.0
        %1492 = vmatprep.subr.mxu0 0.0
        %1493 = vmatpush1.msra.mxu0 0.0
        %1494 = vmatprep.subr.mxu0 0.0
        %1495 = vmatpush1.msra.mxu0 0.0
        %1496 = vmatprep.subr.mxu0 0.0
        %1497 = vmatpush1.msra.mxu0 0.0
        %1498 = vmatprep.subr.mxu0 0.0
        %1499 = vmatpush1.msra.mxu0 0.0
        %1500 = vmatprep.subr.mxu0 0.0
        %1501 = vmatpush1.msra.mxu0 0.0
        %1502 = vmatprep.subr.mxu0 0.0
        %1503 = vmatpush1.msra.mxu0 0.0
        %1504 = vmatprep.subr.mxu0 0.0
        %1505 = vmatpush1.msra.mxu0 0.0
        %1506 = vmatprep.subr.mxu0 0.0
        %1507 = vmatpush1.msra.mxu0 0.0
        %1508 = vmatprep.subr.mxu0 0.0
        %1509 = vmatpush1.msra.mxu0 0.0
        %1510 = vmatprep.subr.mxu0 0.0
        %1511 = vmatpush1.msra.mxu0 0.0
        %1512 = vmatprep.subr.mxu0 0.0
        %1513 = vmatpush1.msra.mxu0 0.0
        %1514 = vmatprep.subr.mxu0 0.0
        %1515 = vmatpush1.msra.mxu0 0.0
        %1516 = vmatprep.subr.mxu0 0.0
        %1517 = vmatpush1.msra.mxu0 0.0
        %1518 = vmatprep.subr.mxu0 0.0
        %1519 = vmatpush1.msra.mxu0 0.0
        %1520 = vmatprep.subr.mxu0 0.0
        %1521 = vmatpush1.msra.mxu0 0.0
        %1522 = vmatprep.subr.mxu0 0.0
        %1523 = vmatpush1.msra.mxu0 0.0
        %1524 = vmatprep.subr.mxu0 0.0
        %1525 = vmatpush1.msra.mxu0 0.0
        %1526 = vmatprep.subr.mxu0 0.0
        %1527 = vmatpush1.msra.mxu0 0.0
        %1528 = vmatprep.subr.mxu0 0.0
        %1529 = vmatpush1.msra.mxu0 0.0
        %1530 = vmatprep.subr.mxu0 0.0
        %1531 = vmatpush1.msra.mxu0 0.0
        %1532 = vmatprep.subr.mxu0 0.0
        %1533 = vmatpush1.msra.mxu0 0.0
        %1534 = vmatprep.mubr.f32.mxu0 0.0
        %1535 = vmatmul.mubr.f32.gmra.mrb[0].mxu0 %v1465
        %v1536 = vpop.f32.mrb[0].mxu0
        %v1537 = vadd.f32 0.0, %v1536
        %v1538 = vpop.f32.mrb[0].mxu0
        %1539 = vmatprep.mubr.f32.mxu0 0.0
        %1540 = vmatmul.mubr.f32.gmra.mrb[0].mxu0 %v1468
        %v1541 = vpop.f32.mrb[0].mxu0
        %v1542 = vadd.f32 0.0, %v1541
        %v1543 = vpop.f32.mrb[0].mxu0
        %1544 = vdwg.mxu0
        %v1546 = vsel %vm709, %v527, 0
        %v1549 = vsel %vm709, %v528, 0
        %v1552 = vsel %vm722, %v1542, 0
        %1554 = vmatprep.subr.mxu0 0.0
        %1555 = vmatpush1.msra.mxu0 %v1537
        %1556 = vmatprep.subr.mxu0 0.0
        %1557 = vmatpush1.msra.mxu0 %v1552
        %1558 = vmatprep.subr.mxu0 0.0
        %1559 = vmatpush1.msra.mxu0 0.0
        %1560 = vmatprep.subr.mxu0 0.0
        %1561 = vmatpush1.msra.mxu0 0.0
        %1562 = vmatprep.subr.mxu0 0.0
        %1563 = vmatpush1.msra.mxu0 0.0
        %1564 = vmatprep.subr.mxu0 0.0
        %1565 = vmatpush1.msra.mxu0 0.0
        %1566 = vmatprep.subr.mxu0 0.0
        %1567 = vmatpush1.msra.mxu0 0.0
        %1568 = vmatprep.subr.mxu0 0.0
        %1569 = vmatpush1.msra.mxu0 0.0
        %1570 = vmatprep.subr.mxu0 0.0
        %1571 = vmatpush1.msra.mxu0 0.0
        %1572 = vmatprep.subr.mxu0 0.0
        %1573 = vmatpush1.msra.mxu0 0.0
        %1574 = vmatprep.subr.mxu0 0.0
        %1575 = vmatpush1.msra.mxu0 0.0
        %1576 = vmatprep.subr.mxu0 0.0
        %1577 = vmatpush1.msra.mxu0 0.0
        %1578 = vmatprep.subr.mxu0 0.0
        %1579 = vmatpush1.msra.mxu0 0.0
        %1580 = vmatprep.subr.mxu0 0.0
        %1581 = vmatpush1.msra.mxu0 0.0
        %1582 = vmatprep.subr.mxu0 0.0
        %1583 = vmatpush1.msra.mxu0 0.0
        %1584 = vmatprep.subr.mxu0 0.0
        %1585 = vmatpush1.msra.mxu0 0.0
        %1586 = vmatprep.subr.mxu0 0.0
        %1587 = vmatpush1.msra.mxu0 0.0
        %1588 = vmatprep.subr.mxu0 0.0
        %1589 = vmatpush1.msra.mxu0 0.0
        %1590 = vmatprep.subr.mxu0 0.0
        %1591 = vmatpush1.msra.mxu0 0.0
        %1592 = vmatprep.subr.mxu0 0.0
        %1593 = vmatpush1.msra.mxu0 0.0
        %1594 = vmatprep.subr.mxu0 0.0
        %1595 = vmatpush1.msra.mxu0 0.0
        %1596 = vmatprep.subr.mxu0 0.0
        %1597 = vmatpush1.msra.mxu0 0.0
        %1598 = vmatprep.subr.mxu0 0.0
        %1599 = vmatpush1.msra.mxu0 0.0
        %1600 = vmatprep.subr.mxu0 0.0
        %1601 = vmatpush1.msra.mxu0 0.0
        %1602 = vmatprep.subr.mxu0 0.0
        %1603 = vmatpush1.msra.mxu0 0.0
        %1604 = vmatprep.subr.mxu0 0.0
        %1605 = vmatpush1.msra.mxu0 0.0
        %1606 = vmatprep.subr.mxu0 0.0
        %1607 = vmatpush1.msra.mxu0 0.0
        %1608 = vmatprep.subr.mxu0 0.0
        %1609 = vmatpush1.msra.mxu0 0.0
        %1610 = vmatprep.subr.mxu0 0.0
        %1611 = vmatpush1.msra.mxu0 0.0
        %1612 = vmatprep.subr.mxu0 0.0
        %1613 = vmatpush1.msra.mxu0 0.0
        %1614 = vmatprep.subr.mxu0 0.0
        %1615 = vmatpush1.msra.mxu0 0.0
        %1616 = vmatprep.subr.mxu0 0.0
        %1617 = vmatpush1.msra.mxu0 0.0
        %1618 = vmatprep.mubr.f32.mxu0 0.0
        %1619 = vmatmul.mubr.f32.gmra.mrb[0].mxu0 %v1546
        %v1620 = vpop.f32.mrb[0].mxu0
        %v1621 = vadd.f32 0.0, %v1620
        %v1622 = vpop.f32.mrb[0].mxu0
        %1623 = vmatprep.mubr.f32.mxu0 0.0
        %1624 = vmatmul.mubr.f32.gmra.mrb[0].mxu0 %v1549
        %v1625 = vpop.f32.mrb[0].mxu0
        %v1626 = vadd.f32 0.0, %v1625
        %v1627 = vpop.f32.mrb[0].mxu0
        %1628 = vdwg.mxu0
        %v1630 = vsel %vm709, %v525, 0
        %v1633 = vsel %vm709, %v526, 0
        %1635 = vmatprep.subr.mxu0 0.0
        %1636 = vmatpush1.msra.mxu0 %v1537
        %1637 = vmatprep.subr.mxu0 0.0
        %1638 = vmatpush1.msra.mxu0 %v1552
        %1639 = vmatprep.subr.mxu0 0.0
        %1640 = vmatpush1.msra.mxu0 0.0
        %1641 = vmatprep.subr.mxu0 0.0
        %1642 = vmatpush1.msra.mxu0 0.0
        %1643 = vmatprep.subr.mxu0 0.0
        %1644 = vmatpush1.msra.mxu0 0.0
        %1645 = vmatprep.subr.mxu0 0.0
        %1646 = vmatpush1.msra.mxu0 0.0
        %1647 = vmatprep.subr.mxu0 0.0
        %1648 = vmatpush1.msra.mxu0 0.0
        %1649 = vmatprep.subr.mxu0 0.0
        %1650 = vmatpush1.msra.mxu0 0.0
        %1651 = vmatprep.subr.mxu0 0.0
        %1652 = vmatpush1.msra.mxu0 0.0
        %1653 = vmatprep.subr.mxu0 0.0
        %1654 = vmatpush1.msra.mxu0 0.0
        %1655 = vmatprep.subr.mxu0 0.0
        %1656 = vmatpush1.msra.mxu0 0.0
        %1657 = vmatprep.subr.mxu0 0.0
        %1658 = vmatpush1.msra.mxu0 0.0
        %1659 = vmatprep.subr.mxu0 0.0
        %1660 = vmatpush1.msra.mxu0 0.0
        %1661 = vmatprep.subr.mxu0 0.0
        %1662 = vmatpush1.msra.mxu0 0.0
        %1663 = vmatprep.subr.mxu0 0.0
        %1664 = vmatpush1.msra.mxu0 0.0
        %1665 = vmatprep.subr.mxu0 0.0
        %1666 = vmatpush1.msra.mxu0 0.0
        %1667 = vmatprep.subr.mxu0 0.0
        %1668 = vmatpush1.msra.mxu0 0.0
        %1669 = vmatprep.subr.mxu0 0.0
        %1670 = vmatpush1.msra.mxu0 0.0
        %1671 = vmatprep.subr.mxu0 0.0
        %1672 = vmatpush1.msra.mxu0 0.0
        %1673 = vmatprep.subr.mxu0 0.0
        %1674 = vmatpush1.msra.mxu0 0.0
        %1675 = vmatprep.subr.mxu0 0.0
        %1676 = vmatpush1.msra.mxu0 0.0
        %1677 = vmatprep.subr.mxu0 0.0
        %1678 = vmatpush1.msra.mxu0 0.0
        %1679 = vmatprep.subr.mxu0 0.0
        %1680 = vmatpush1.msra.mxu0 0.0
        %1681 = vmatprep.subr.mxu0 0.0
        %1682 = vmatpush1.msra.mxu0 0.0
        %1683 = vmatprep.subr.mxu0 0.0
        %1684 = vmatpush1.msra.mxu0 0.0
        %1685 = vmatprep.subr.mxu0 0.0
        %1686 = vmatpush1.msra.mxu0 0.0
        %1687 = vmatprep.subr.mxu0 0.0
        %1688 = vmatpush1.msra.mxu0 0.0
        %1689 = vmatprep.subr.mxu0 0.0
        %1690 = vmatpush1.msra.mxu0 0.0
        %1691 = vmatprep.subr.mxu0 0.0
        %1692 = vmatpush1.msra.mxu0 0.0
        %1693 = vmatprep.subr.mxu0 0.0
        %1694 = vmatpush1.msra.mxu0 0.0
        %1695 = vmatprep.subr.mxu0 0.0
        %1696 = vmatpush1.msra.mxu0 0.0
        %1697 = vmatprep.subr.mxu0 0.0
        %1698 = vmatpush1.msra.mxu0 0.0
        %1699 = vmatprep.mubr.f32.mxu0 0.0
        %1700 = vmatmul.mubr.f32.gmra.mrb[0].mxu0 %v1630
        %v1701 = vpop.f32.mrb[0].mxu0
        %v1702 = vadd.f32 0.0, %v1701
        %v1703 = vpop.f32.mrb[0].mxu0
        %1704 = vmatprep.mubr.f32.mxu0 0.0
        %1705 = vmatmul.mubr.f32.gmra.mrb[0].mxu0 %v1633
        %v1706 = vpop.f32.mrb[0].mxu0
        %v1707 = vadd.f32 0.0, %v1706
        %v1708 = vpop.f32.mrb[0].mxu0
        %1709 = vdwg.mxu0
        %v1710 = vlaneseq
        %v1711 = vshrl.u32 %v1710, 7
        %v1712 = vsub.s32 4, %v1711
        %v1713 = vrot.slane %v534, %v1712
        %1715 = vrot.lane.b32.xlu0 %v1713, 96
        %v1716 = vpop.permute.xlu0 %1715
        %v1718 = vadd.f32 %v1702, %v1716
        %v1719 = vadd.f32 %v1707, %v1716
        %s1720 = scalar_lea.vmem %s7, 32
        %v1721 = vld [vmem:[%s1720] sm:$0xff]
        %v1722 = vld [vmem:[%s1720 + $0x8] sm:$0xff]
        %v1723 = vld [vmem:[%s1720 + $0x10] sm:$0xff]
        %v1724 = vld [vmem:[%s1720 + $0x18] sm:$0xff]
        %v1725 = vlaneseq
        %v1726 = vshrl.u32 %v1725, 7
        %v1727 = vsub.s32 2, %v1726
        %v1728 = vrot.slane %v534, %v1727
        %v1730 = vsel %vm541, %v515, 0
        %v1733 = vsel %vm541, %v516, 0
        %1735 = vmatprep.subr.mxu0 0.0
        %1736 = vmatpush1.msra.mxu0 %v1721
        %1737 = vmatprep.subr.mxu0 0.0
        %1738 = vmatpush1.msra.mxu0 %v1722
        %1739 = vmatprep.subr.mxu0 0.0
        %1740 = vmatpush1.msra.mxu0 %v1723
        %1741 = vmatprep.subr.mxu0 0.0
        %1742 = vmatpush1.msra.mxu0 %v1724
        %1743 = vmatprep.subr.mxu0 0.0
        %1744 = vmatpush1.msra.mxu0 0.0
        %1745 = vmatprep.subr.mxu0 0.0
        %1746 = vmatpush1.msra.mxu0 0.0
        %1747 = vmatprep.subr.mxu0 0.0
        %1748 = vmatpush1.msra.mxu0 0.0
        %1749 = vmatprep.subr.mxu0 0.0
        %1750 = vmatpush1.msra.mxu0 0.0
        %1751 = vmatprep.subr.mxu0 0.0
        %1752 = vmatpush1.msra.mxu0 0.0
        %1753 = vmatprep.subr.mxu0 0.0
        %1754 = vmatpush1.msra.mxu0 0.0
        %1755 = vmatprep.subr.mxu0 0.0
        %1756 = vmatpush1.msra.mxu0 0.0
        %1757 = vmatprep.subr.mxu0 0.0
        %1758 = vmatpush1.msra.mxu0 0.0
        %1759 = vmatprep.subr.mxu0 0.0
        %1760 = vmatpush1.msra.mxu0 0.0
        %1761 = vmatprep.subr.mxu0 0.0
        %1762 = vmatpush1.msra.mxu0 0.0
        %1763 = vmatprep.subr.mxu0 0.0
        %1764 = vmatpush1.msra.mxu0 0.0
        %1765 = vmatprep.subr.mxu0 0.0
        %1766 = vmatpush1.msra.mxu0 0.0
        %1767 = vmatprep.subr.mxu0 0.0
        %1768 = vmatpush1.msra.mxu0 0.0
        %1769 = vmatprep.subr.mxu0 0.0
        %1770 = vmatpush1.msra.mxu0 0.0
        %1771 = vmatprep.subr.mxu0 0.0
        %1772 = vmatpush1.msra.mxu0 0.0
        %1773 = vmatprep.subr.mxu0 0.0
        %1774 = vmatpush1.msra.mxu0 0.0
        %1775 = vmatprep.subr.mxu0 0.0
        %1776 = vmatpush1.msra.mxu0 0.0
        %1777 = vmatprep.subr.mxu0 0.0
        %1778 = vmatpush1.msra.mxu0 0.0
        %1779 = vmatprep.subr.mxu0 0.0
        %1780 = vmatpush1.msra.mxu0 0.0
        %1781 = vmatprep.subr.mxu0 0.0
        %1782 = vmatpush1.msra.mxu0 0.0
        %1783 = vmatprep.subr.mxu0 0.0
        %1784 = vmatpush1.msra.mxu0 0.0
        %1785 = vmatprep.subr.mxu0 0.0
        %1786 = vmatpush1.msra.mxu0 0.0
        %1787 = vmatprep.subr.mxu0 0.0
        %1788 = vmatpush1.msra.mxu0 0.0
        %1789 = vmatprep.subr.mxu0 0.0
        %1790 = vmatpush1.msra.mxu0 0.0
        %1791 = vmatprep.subr.mxu0 0.0
        %1792 = vmatpush1.msra.mxu0 0.0
        %1793 = vmatprep.subr.mxu0 0.0
        %1794 = vmatpush1.msra.mxu0 0.0
        %1795 = vmatprep.subr.mxu0 0.0
        %1796 = vmatpush1.msra.mxu0 0.0
        %1797 = vmatprep.subr.mxu0 0.0
        %1798 = vmatpush1.msra.mxu0 0.0
        %1799 = vmatprep.mubr.f32.mxu0 0.0
        %1800 = vmatmul.mubr.f32.gmra.mrb[0].mxu0 %v1730
        %v1801 = vpop.f32.mrb[0].mxu0
        %v1802 = vadd.f32 %v1728, %v1801
        %v1803 = vpop.f32.mrb[0].mxu0
        %1804 = vmatprep.mubr.f32.mxu0 0.0
        %1805 = vmatmul.mubr.f32.gmra.mrb[0].mxu0 %v1733
        %v1806 = vpop.f32.mrb[0].mxu0
        %v1807 = vadd.f32 %v1728, %v1806
        %v1808 = vpop.f32.mrb[0].mxu0
        %1809 = vdwg.mxu0
        %1812 = vrot.lane.b32.xlu0 %v1702, 96
        %v1813 = vpop.permute.xlu0 %1812
        %1814 = vrot.lane.b32.xlu0 %v1707, 96
        %v1815 = vpop.permute.xlu0 %1814
        %v1818 = vmul.f32 %v1621, %v1813
        %v1819 = vmul.f32 %v1626, %v1815
        %v1820 = vmul.f32 %v1802, %v1818
        %v1821 = vmul.f32 %v1807, %v1819
        %v1822 = vmul.f32 %v1820, 0.35355338
        %v1823 = vmul.f32 %v1821, 0.35355338
        %v1825 = vsel %vm541, %v1818, 0
        %v1828 = vsel %vm541, %v1819, 0
        %v1830 = vsel %vm541, %v533, 0
        %1832 = vmatprep.subr.mxu0 0.0
        %1833 = vmatpush1.xpose.msra.mxu0 %v1830
        %1834 = vmatprep.subr.mxu0 0.0
        %1835 = vmatpush1.xpose.msra.mxu0 0.0
        %1836 = vmatprep.subr.mxu0 0.0
        %1837 = vmatpush1.xpose.msra.mxu0 0.0
        %1838 = vmatprep.subr.mxu0 0.0
        %1839 = vmatpush1.xpose.msra.mxu0 0.0
        %1840 = vmatprep.subr.mxu0 0.0
        %1841 = vmatpush1.xpose.msra.mxu0 0.0
        %1842 = vmatprep.subr.mxu0 0.0
        %1843 = vmatpush1.xpose.msra.mxu0 0.0
        %1844 = vmatprep.subr.mxu0 0.0
        %1845 = vmatpush1.xpose.msra.mxu0 0.0
        %1846 = vmatprep.subr.mxu0 0.0
        %1847 = vmatpush1.xpose.msra.mxu0 0.0
        %1848 = vmatprep.subr.mxu0 0.0
        %1849 = vmatpush1.xpose.msra.mxu0 0.0
        %1850 = vmatprep.subr.mxu0 0.0
        %1851 = vmatpush1.xpose.msra.mxu0 0.0
        %1852 = vmatprep.subr.mxu0 0.0
        %1853 = vmatpush1.xpose.msra.mxu0 0.0
        %1854 = vmatprep.subr.mxu0 0.0
        %1855 = vmatpush1.xpose.msra.mxu0 0.0
        %1856 = vmatprep.subr.mxu0 0.0
        %1857 = vmatpush1.xpose.msra.mxu0 0.0
        %1858 = vmatprep.subr.mxu0 0.0
        %1859 = vmatpush1.xpose.msra.mxu0 0.0
        %1860 = vmatprep.subr.mxu0 0.0
        %1861 = vmatpush1.xpose.msra.mxu0 0.0
        %1862 = vmatprep.subr.mxu0 0.0
        %1863 = vmatpush1.xpose.msra.mxu0 0.0
        %1864 = vmatprep.subr.mxu0 0.0
        %1865 = vmatpush1.xpose.msra.mxu0 0.0
        %1866 = vmatprep.subr.mxu0 0.0
        %1867 = vmatpush1.xpose.msra.mxu0 0.0
        %1868 = vmatprep.subr.mxu0 0.0
        %1869 = vmatpush1.xpose.msra.mxu0 0.0
        %1870 = vmatprep.subr.mxu0 0.0
        %1871 = vmatpush1.xpose.msra.mxu0 0.0
        %1872 = vmatprep.subr.mxu0 0.0
        %1873 = vmatpush1.xpose.msra.mxu0 0.0
        %1874 = vmatprep.subr.mxu0 0.0
        %1875 = vmatpush1.xpose.msra.mxu0 0.0
        %1876 = vmatprep.subr.mxu0 0.0
        %1877 = vmatpush1.xpose.msra.mxu0 0.0
        %1878 = vmatprep.subr.mxu0 0.0
        %1879 = vmatpush1.xpose.msra.mxu0 0.0
        %1880 = vmatprep.subr.mxu0 0.0
        %1881 = vmatpush1.xpose.msra.mxu0 0.0
        %1882 = vmatprep.subr.mxu0 0.0
        %1883 = vmatpush1.xpose.msra.mxu0 0.0
        %1884 = vmatprep.subr.mxu0 0.0
        %1885 = vmatpush1.xpose.msra.mxu0 0.0
        %1886 = vmatprep.subr.mxu0 0.0
        %1887 = vmatpush1.xpose.msra.mxu0 0.0
        %1888 = vmatprep.subr.mxu0 0.0
        %1889 = vmatpush1.xpose.msra.mxu0 0.0
        %1890 = vmatprep.subr.mxu0 0.0
        %1891 = vmatpush1.xpose.msra.mxu0 0.0
        %1892 = vmatprep.subr.mxu0 0.0
        %1893 = vmatpush1.xpose.msra.mxu0 0.0
        %1894 = vmatprep.subr.mxu0 0.0
        %1895 = vmatpush1.xpose.msra.mxu0 0.0
        %1896 = vmatprep.mubr.f32.mxu0 0.0
        %1897 = vmatmul.mubr.f32.gmra.mrb[0].mxu0 %v1825
        %v1898 = vpop.f32.mrb[0].mxu0
        %v1899 = vadd.f32 0.0, %v1898
        %v1900 = vpop.f32.mrb[0].mxu0
        %1901 = vmatprep.mubr.f32.mxu0 0.0
        %1902 = vmatmul.mubr.f32.gmra.mrb[0].mxu0 %v1828
        %v1903 = vpop.f32.mrb[0].mxu0
        %v1904 = vadd.f32 0.0, %v1903
        %v1905 = vpop.f32.mrb[0].mxu0
        %1906 = vdwg.mxu0
        %v1907 = vmul.f32 %v1899, 0.35355338
        %v1908 = vmul.f32 %v1904, 0.35355338
        %v1909 = vsel %vm940, %v1907, -inf
        %v1910 = vsel %vm940, %v1908, -inf
        %v1911 = vmax.f32 %v1909, %v1910
        %v1912 = vrot.slane %v1911, 4
        %v1913 = vmax.f32 %v1911, %v1912
        %v1914 = vrot.slane %v1913, 2
        %v1915 = vmax.f32 %v1913, %v1914
        %v1916 = vrot.slane %v1915, 1
        %v1917 = vmax.f32 %v1915, %v1916
        %v1918 = vsub.f32 %v1907, %v1917
        %v1919 = vsub.f32 %v1908, %v1917
        %v1920 = vmul.f32 %v1918, 1.442695
        %v1921 = vpow.pop %v1920
        %v1922 = vmul.f32 %v1919, 1.442695
        %v1923 = vpow.pop %v1922
        %1924 = vxpose.xlu0.b32.start [1/16] %v527, 128
        %1925 = vxpose.xlu0.b32.cont [2/16] %v528, 128
        %1926 = vxpose.xlu0.b32.cont [3/16] 0.0, 128
        %1927 = vxpose.xlu0.b32.cont [4/16] 0.0, 128
        %1928 = vxpose.xlu0.b32.cont [5/16] 0.0, 128
        %1929 = vxpose.xlu0.b32.cont [6/16] 0.0, 128
        %1930 = vxpose.xlu0.b32.cont [7/16] 0.0, 128
        %1931 = vxpose.xlu0.b32.cont [8/16] 0.0, 128
        %1932 = vxpose.xlu0.b32.cont [9/16] 0.0, 128
        %1933 = vxpose.xlu0.b32.cont [10/16] 0.0, 128
        %1934 = vxpose.xlu0.b32.cont [11/16] 0.0, 128
        %1935 = vxpose.xlu0.b32.cont [12/16] 0.0, 128
        %1936 = vxpose.xlu0.b32.cont [13/16] 0.0, 128
        %1937 = vxpose.xlu0.b32.cont [14/16] 0.0, 128
        %1938 = vxpose.xlu0.b32.cont [15/16] 0.0, 128
        %1939 = vxpose.xlu0.b32.end [16/16] 0.0, 128
        %v1940 = vpop.trf.xlu0
        %v1941 = vpop.trf.xlu0
        %v1942 = vpop.trf.xlu0
        %v1943 = vpop.trf.xlu0
        %v1944 = vpop.trf.xlu0
        %v1945 = vpop.trf.xlu0
        %v1946 = vpop.trf.xlu0
        %v1947 = vpop.trf.xlu0
        %v1948 = vpop.trf.xlu0
        %v1949 = vpop.trf.xlu0
        %v1950 = vpop.trf.xlu0
        %v1951 = vpop.trf.xlu0
        %v1952 = vpop.trf.xlu0
        %v1953 = vpop.trf.xlu0
        %v1954 = vpop.trf.xlu0
        %v1955 = vpop.trf.xlu0
        %vm1956 = vcmask 130048
        %v1958 = vsel %vm1956, %v1940, 0
        %v1961 = vsel %vm1956, %v1941, 0
        %1963 = vmatprep.subr.mxu0 0.0
        %1964 = vmatpush1.msra.mxu0 %v1921
        %1965 = vmatprep.subr.mxu0 0.0
        %1966 = vmatpush1.msra.mxu0 %v1923
        %1967 = vmatprep.subr.mxu0 0.0
        %1968 = vmatpush1.msra.mxu0 0.0
        %1969 = vmatprep.subr.mxu0 0.0
        %1970 = vmatpush1.msra.mxu0 0.0
        %1971 = vmatprep.subr.mxu0 0.0
        %1972 = vmatpush1.msra.mxu0 0.0
        %1973 = vmatprep.subr.mxu0 0.0
        %1974 = vmatpush1.msra.mxu0 0.0
        %1975 = vmatprep.subr.mxu0 0.0
        %1976 = vmatpush1.msra.mxu0 0.0
        %1977 = vmatprep.subr.mxu0 0.0
        %1978 = vmatpush1.msra.mxu0 0.0
        %1979 = vmatprep.subr.mxu0 0.0
        %1980 = vmatpush1.msra.mxu0 0.0
        %1981 = vmatprep.subr.mxu0 0.0
        %1982 = vmatpush1.msra.mxu0 0.0
        %1983 = vmatprep.subr.mxu0 0.0
        %1984 = vmatpush1.msra.mxu0 0.0
        %1985 = vmatprep.subr.mxu0 0.0
        %1986 = vmatpush1.msra.mxu0 0.0
        %1987 = vmatprep.subr.mxu0 0.0
        %1988 = vmatpush1.msra.mxu0 0.0
        %1989 = vmatprep.subr.mxu0 0.0
        %1990 = vmatpush1.msra.mxu0 0.0
        %1991 = vmatprep.subr.mxu0 0.0
        %1992 = vmatpush1.msra.mxu0 0.0
        %1993 = vmatprep.subr.mxu0 0.0
        %1994 = vmatpush1.msra.mxu0 0.0
        %1995 = vmatprep.subr.mxu0 0.0
        %1996 = vmatpush1.msra.mxu0 0.0
        %1997 = vmatprep.subr.mxu0 0.0
        %1998 = vmatpush1.msra.mxu0 0.0
        %1999 = vmatprep.subr.mxu0 0.0
        %2000 = vmatpush1.msra.mxu0 0.0
        %2001 = vmatprep.subr.mxu0 0.0
        %2002 = vmatpush1.msra.mxu0 0.0
        %2003 = vmatprep.subr.mxu0 0.0
        %2004 = vmatpush1.msra.mxu0 0.0
        %2005 = vmatprep.subr.mxu0 0.0
        %2006 = vmatpush1.msra.mxu0 0.0
        %2007 = vmatprep.subr.mxu0 0.0
        %2008 = vmatpush1.msra.mxu0 0.0
        %2009 = vmatprep.subr.mxu0 0.0
        %2010 = vmatpush1.msra.mxu0 0.0
        %2011 = vmatprep.subr.mxu0 0.0
        %2012 = vmatpush1.msra.mxu0 0.0
        %2013 = vmatprep.subr.mxu0 0.0
        %2014 = vmatpush1.msra.mxu0 0.0
        %2015 = vmatprep.subr.mxu0 0.0
        %2016 = vmatpush1.msra.mxu0 0.0
        %2017 = vmatprep.subr.mxu0 0.0
        %2018 = vmatpush1.msra.mxu0 0.0
        %2019 = vmatprep.subr.mxu0 0.0
        %2020 = vmatpush1.msra.mxu0 0.0
        %2021 = vmatprep.subr.mxu0 0.0
        %2022 = vmatpush1.msra.mxu0 0.0
        %2023 = vmatprep.subr.mxu0 0.0
        %2024 = vmatpush1.msra.mxu0 0.0
        %2025 = vmatprep.subr.mxu0 0.0
        %2026 = vmatpush1.msra.mxu0 0.0
        %2027 = vmatprep.mubr.f32.mxu0 0.0
        %2028 = vmatmul.mubr.f32.gmra.mrb[0].mxu0 %v1958
        %v2029 = vpop.f32.mrb[0].mxu0
        %v2030 = vadd.f32 0.0, %v2029
        %v2031 = vpop.f32.mrb[0].mxu0
        %2032 = vmatprep.mubr.f32.mxu0 0.0
        %2033 = vmatmul.mubr.f32.gmra.mrb[0].mxu0 %v1961
        %v2034 = vpop.f32.mrb[0].mxu0
        %v2035 = vadd.f32 0.0, %v2034
        %v2036 = vpop.f32.mrb[0].mxu0
        %2037 = vdwg.mxu0
        %v2039 = vsel %vm722, %v2035, 0
        %2041 = vmatprep.subr.mxu0 0.0
        %2042 = vmatpush1.msra.mxu0 %v2030
        %2043 = vmatprep.subr.mxu0 0.0
        %2044 = vmatpush1.msra.mxu0 %v2039
        %2045 = vmatprep.subr.mxu0 0.0
        %2046 = vmatpush1.msra.mxu0 0.0
        %2047 = vmatprep.subr.mxu0 0.0
        %2048 = vmatpush1.msra.mxu0 0.0
        %2049 = vmatprep.subr.mxu0 0.0
        %2050 = vmatpush1.msra.mxu0 0.0
        %2051 = vmatprep.subr.mxu0 0.0
        %2052 = vmatpush1.msra.mxu0 0.0
        %2053 = vmatprep.subr.mxu0 0.0
        %2054 = vmatpush1.msra.mxu0 0.0
        %2055 = vmatprep.subr.mxu0 0.0
        %2056 = vmatpush1.msra.mxu0 0.0
        %2057 = vmatprep.subr.mxu0 0.0
        %2058 = vmatpush1.msra.mxu0 0.0
        %2059 = vmatprep.subr.mxu0 0.0
        %2060 = vmatpush1.msra.mxu0 0.0
        %2061 = vmatprep.subr.mxu0 0.0
        %2062 = vmatpush1.msra.mxu0 0.0
        %2063 = vmatprep.subr.mxu0 0.0
        %2064 = vmatpush1.msra.mxu0 0.0
        %2065 = vmatprep.subr.mxu0 0.0
        %2066 = vmatpush1.msra.mxu0 0.0
        %2067 = vmatprep.subr.mxu0 0.0
        %2068 = vmatpush1.msra.mxu0 0.0
        %2069 = vmatprep.subr.mxu0 0.0
        %2070 = vmatpush1.msra.mxu0 0.0
        %2071 = vmatprep.subr.mxu0 0.0
        %2072 = vmatpush1.msra.mxu0 0.0
        %2073 = vmatprep.subr.mxu0 0.0
        %2074 = vmatpush1.msra.mxu0 0.0
        %2075 = vmatprep.subr.mxu0 0.0
        %2076 = vmatpush1.msra.mxu0 0.0
        %2077 = vmatprep.subr.mxu0 0.0
        %2078 = vmatpush1.msra.mxu0 0.0
        %2079 = vmatprep.subr.mxu0 0.0
        %2080 = vmatpush1.msra.mxu0 0.0
        %2081 = vmatprep.subr.mxu0 0.0
        %2082 = vmatpush1.msra.mxu0 0.0
        %2083 = vmatprep.subr.mxu0 0.0
        %2084 = vmatpush1.msra.mxu0 0.0
        %2085 = vmatprep.subr.mxu0 0.0
        %2086 = vmatpush1.msra.mxu0 0.0
        %2087 = vmatprep.subr.mxu0 0.0
        %2088 = vmatpush1.msra.mxu0 0.0
        %2089 = vmatprep.subr.mxu0 0.0
        %2090 = vmatpush1.msra.mxu0 0.0
        %2091 = vmatprep.subr.mxu0 0.0
        %2092 = vmatpush1.msra.mxu0 0.0
        %2093 = vmatprep.subr.mxu0 0.0
        %2094 = vmatpush1.msra.mxu0 0.0
        %2095 = vmatprep.subr.mxu0 0.0
        %2096 = vmatpush1.msra.mxu0 0.0
        %2097 = vmatprep.subr.mxu0 0.0
        %2098 = vmatpush1.msra.mxu0 0.0
        %2099 = vmatprep.subr.mxu0 0.0
        %2100 = vmatpush1.msra.mxu0 0.0
        %2101 = vmatprep.subr.mxu0 0.0
        %2102 = vmatpush1.msra.mxu0 0.0
        %2103 = vmatprep.subr.mxu0 0.0
        %2104 = vmatpush1.msra.mxu0 0.0
        %2105 = vmatprep.mubr.f32.mxu0 0.0
        %2106 = vmatmul.mubr.f32.gmra.mrb[0].mxu0 %v1546
        %v2107 = vpop.f32.mrb[0].mxu0
        %v2108 = vadd.f32 1e-16, %v2107
        %v2109 = vpop.f32.mrb[0].mxu0
        %2110 = vmatprep.mubr.f32.mxu0 0.0
        %2111 = vmatmul.mubr.f32.gmra.mrb[0].mxu0 %v1549
        %v2112 = vpop.f32.mrb[0].mxu0
        %v2113 = vadd.f32 1e-16, %v2112
        %v2114 = vpop.f32.mrb[0].mxu0
        %2115 = vdwg.mxu0
        %v2116 = vrcp.pop %v2108
        %v2117 = vmul.f32 %v1921, %v2116
        %v2118 = vrcp.pop %v2113
        %v2119 = vmul.f32 %v1923, %v2118
        %v2121 = vsel %vm940, %v2117, 0
        %v2124 = vsel %vm940, %v2119, 0
        %2126 = vmatprep.subr.mxu0 0.0
        %2127 = vmatpush1.msra.mxu0 %v1281
        %2128 = vmatprep.subr.mxu0 0.0
        %2129 = vmatpush1.msra.mxu0 0.0
        %2130 = vmatprep.subr.mxu0 0.0
        %2131 = vmatpush1.msra.mxu0 0.0
        %2132 = vmatprep.subr.mxu0 0.0
        %2133 = vmatpush1.msra.mxu0 0.0
        %2134 = vmatprep.subr.mxu0 0.0
        %2135 = vmatpush1.msra.mxu0 0.0
        %2136 = vmatprep.subr.mxu0 0.0
        %2137 = vmatpush1.msra.mxu0 0.0
        %2138 = vmatprep.subr.mxu0 0.0
        %2139 = vmatpush1.msra.mxu0 0.0
        %2140 = vmatprep.subr.mxu0 0.0
        %2141 = vmatpush1.msra.mxu0 0.0
        %2142 = vmatprep.subr.mxu0 0.0
        %2143 = vmatpush1.msra.mxu0 0.0
        %2144 = vmatprep.subr.mxu0 0.0
        %2145 = vmatpush1.msra.mxu0 0.0
        %2146 = vmatprep.subr.mxu0 0.0
        %2147 = vmatpush1.msra.mxu0 0.0
        %2148 = vmatprep.subr.mxu0 0.0
        %2149 = vmatpush1.msra.mxu0 0.0
        %2150 = vmatprep.subr.mxu0 0.0
        %2151 = vmatpush1.msra.mxu0 0.0
        %2152 = vmatprep.subr.mxu0 0.0
        %2153 = vmatpush1.msra.mxu0 0.0
        %2154 = vmatprep.subr.mxu0 0.0
        %2155 = vmatpush1.msra.mxu0 0.0
        %2156 = vmatprep.subr.mxu0 0.0
        %2157 = vmatpush1.msra.mxu0 0.0
        %2158 = vmatprep.subr.mxu0 0.0
        %2159 = vmatpush1.msra.mxu0 0.0
        %2160 = vmatprep.subr.mxu0 0.0
        %2161 = vmatpush1.msra.mxu0 0.0
        %2162 = vmatprep.subr.mxu0 0.0
        %2163 = vmatpush1.msra.mxu0 0.0
        %2164 = vmatprep.subr.mxu0 0.0
        %2165 = vmatpush1.msra.mxu0 0.0
        %2166 = vmatprep.subr.mxu0 0.0
        %2167 = vmatpush1.msra.mxu0 0.0
        %2168 = vmatprep.subr.mxu0 0.0
        %2169 = vmatpush1.msra.mxu0 0.0
        %2170 = vmatprep.subr.mxu0 0.0
        %2171 = vmatpush1.msra.mxu0 0.0
        %2172 = vmatprep.subr.mxu0 0.0
        %2173 = vmatpush1.msra.mxu0 0.0
        %2174 = vmatprep.subr.mxu0 0.0
        %2175 = vmatpush1.msra.mxu0 0.0
        %2176 = vmatprep.subr.mxu0 0.0
        %2177 = vmatpush1.msra.mxu0 0.0
        %2178 = vmatprep.subr.mxu0 0.0
        %2179 = vmatpush1.msra.mxu0 0.0
        %2180 = vmatprep.subr.mxu0 0.0
        %2181 = vmatpush1.msra.mxu0 0.0
        %2182 = vmatprep.subr.mxu0 0.0
        %2183 = vmatpush1.msra.mxu0 0.0
        %2184 = vmatprep.subr.mxu0 0.0
        %2185 = vmatpush1.msra.mxu0 0.0
        %2186 = vmatprep.subr.mxu0 0.0
        %2187 = vmatpush1.msra.mxu0 0.0
        %2188 = vmatprep.subr.mxu0 0.0
        %2189 = vmatpush1.msra.mxu0 0.0
        %2190 = vmatprep.mubr.f32.mxu0 0.0
        %2191 = vmatmul.mubr.f32.gmra.mrb[0].mxu0 %v2121
        %v2192 = vpop.f32.mrb[0].mxu0
        %v2193 = vadd.f32 0.0, %v2192
        %v2194 = vpop.f32.mrb[0].mxu0
        %2195 = vmatprep.mubr.f32.mxu0 0.0
        %2196 = vmatmul.mubr.f32.gmra.mrb[0].mxu0 %v2124
        %v2197 = vpop.f32.mrb[0].mxu0
        %v2198 = vadd.f32 0.0, %v2197
        %v2199 = vpop.f32.mrb[0].mxu0
        %2200 = vdwg.mxu0
        %v2201 = vxor.u32 %v1718, 2147483648
        %v2202 = vxor.u32 %v1719, 2147483648
        %v2203 = vmul.f32 %v2201, 1.442695
        %v2204 = vpow.pop %v2203
        %v2205 = vmul.f32 %v2202, 1.442695
        %v2206 = vpow.pop %v2205
        %v2207 = vadd.f32 %v2204, 1.0
        %v2208 = vadd.f32 %v2206, 1.0
        %v2209 = vrcp.pop %v2207
        %v2210 = vmul.f32 1.0, %v2209
        %v2211 = vrcp.pop %v2208
        %v2212 = vmul.f32 1.0, %v2211
        %2215 = vrot.lane.b32.xlu0 %v2210, 96
        %v2216 = vpop.permute.xlu0 %2215
        %2217 = vrot.lane.b32.xlu0 %v2212, 96
        %v2218 = vpop.permute.xlu0 %2217
        %v2221 = vmul.f32 %v1702, %v2216
        %v2222 = vmul.f32 %v1707, %v2218
        %2225 = vrot.lane.b32.xlu0 %v2221, 64
        %v2226 = vpop.permute.xlu0 %2225
        %2227 = vrot.lane.b32.xlu0 %v2222, 64
        %v2228 = vpop.permute.xlu0 %2227
        %v2231 = vmul.f32 %v2193, %v2226
        %v2232 = vmul.f32 %v2198, %v2228
        %2233 = vmatprep.subr.mxu0 0.0
        %2234 = vmatpush1.msra.mxu0 %v2231
        %2235 = vmatprep.subr.mxu0 0.0
        %2236 = vmatpush1.msra.mxu0 %v2232
        %2237 = vmatprep.subr.mxu0 0.0
        %2238 = vmatpush1.msra.mxu0 0.0
        %2239 = vmatprep.subr.mxu0 0.0
        %2240 = vmatpush1.msra.mxu0 0.0
        %2241 = vmatprep.subr.mxu0 0.0
        %2242 = vmatpush1.msra.mxu0 0.0
        %2243 = vmatprep.subr.mxu0 0.0
        %2244 = vmatpush1.msra.mxu0 0.0
        %2245 = vmatprep.subr.mxu0 0.0
        %2246 = vmatpush1.msra.mxu0 0.0
        %2247 = vmatprep.subr.mxu0 0.0
        %2248 = vmatpush1.msra.mxu0 0.0
        %2249 = vmatprep.subr.mxu0 0.0
        %2250 = vmatpush1.msra.mxu0 0.0
        %2251 = vmatprep.subr.mxu0 0.0
        %2252 = vmatpush1.msra.mxu0 0.0
        %2253 = vmatprep.subr.mxu0 0.0
        %2254 = vmatpush1.msra.mxu0 0.0
        %2255 = vmatprep.subr.mxu0 0.0
        %2256 = vmatpush1.msra.mxu0 0.0
        %2257 = vmatprep.subr.mxu0 0.0
        %2258 = vmatpush1.msra.mxu0 0.0
        %2259 = vmatprep.subr.mxu0 0.0
        %2260 = vmatpush1.msra.mxu0 0.0
        %2261 = vmatprep.subr.mxu0 0.0
        %2262 = vmatpush1.msra.mxu0 0.0
        %2263 = vmatprep.subr.mxu0 0.0
        %2264 = vmatpush1.msra.mxu0 0.0
        %2265 = vmatprep.subr.mxu0 0.0
        %2266 = vmatpush1.msra.mxu0 0.0
        %2267 = vmatprep.subr.mxu0 0.0
        %2268 = vmatpush1.msra.mxu0 0.0
        %2269 = vmatprep.subr.mxu0 0.0
        %2270 = vmatpush1.msra.mxu0 0.0
        %2271 = vmatprep.subr.mxu0 0.0
        %2272 = vmatpush1.msra.mxu0 0.0
        %2273 = vmatprep.subr.mxu0 0.0
        %2274 = vmatpush1.msra.mxu0 0.0
        %2275 = vmatprep.subr.mxu0 0.0
        %2276 = vmatpush1.msra.mxu0 0.0
        %2277 = vmatprep.subr.mxu0 0.0
        %2278 = vmatpush1.msra.mxu0 0.0
        %2279 = vmatprep.subr.mxu0 0.0
        %2280 = vmatpush1.msra.mxu0 0.0
        %2281 = vmatprep.subr.mxu0 0.0
        %2282 = vmatpush1.msra.mxu0 0.0
        %2283 = vmatprep.subr.mxu0 0.0
        %2284 = vmatpush1.msra.mxu0 0.0
        %2285 = vmatprep.subr.mxu0 0.0
        %2286 = vmatpush1.msra.mxu0 0.0
        %2287 = vmatprep.subr.mxu0 0.0
        %2288 = vmatpush1.msra.mxu0 0.0
        %2289 = vmatprep.subr.mxu0 0.0
        %2290 = vmatpush1.msra.mxu0 0.0
        %2291 = vmatprep.subr.mxu0 0.0
        %2292 = vmatpush1.msra.mxu0 0.0
        %2293 = vmatprep.subr.mxu0 0.0
        %2294 = vmatpush1.msra.mxu0 0.0
        %2295 = vmatprep.subr.mxu0 0.0
        %2296 = vmatpush1.msra.mxu0 0.0
        %2297 = vmatprep.mubr.f32.mxu0 0.0
        %2298 = vmatmul.mubr.f32.gmra.mrb[0].mxu0 %v1958
        %v2299 = vpop.f32.mrb[0].mxu0
        %v2300 = vadd.f32 0.0, %v2299
        %v2301 = vpop.f32.mrb[0].mxu0
        %2302 = vmatprep.mubr.f32.mxu0 0.0
        %2303 = vmatmul.mubr.f32.gmra.mrb[0].mxu0 %v1961
        %v2304 = vpop.f32.mrb[0].mxu0
        %v2305 = vadd.f32 0.0, %v2304
        %v2306 = vpop.f32.mrb[0].mxu0
        %2307 = vdwg.mxu0
        %2308 = vxpose.xlu0.b32.start [1/16] %v525, 128
        %2309 = vxpose.xlu0.b32.cont [2/16] %v526, 128
        %2310 = vxpose.xlu0.b32.cont [3/16] 0.0, 128
        %2311 = vxpose.xlu0.b32.cont [4/16] 0.0, 128
        %2312 = vxpose.xlu0.b32.cont [5/16] 0.0, 128
        %2313 = vxpose.xlu0.b32.cont [6/16] 0.0, 128
        %2314 = vxpose.xlu0.b32.cont [7/16] 0.0, 128
        %2315 = vxpose.xlu0.b32.cont [8/16] 0.0, 128
        %2316 = vxpose.xlu0.b32.cont [9/16] 0.0, 128
        %2317 = vxpose.xlu0.b32.cont [10/16] 0.0, 128
        %2318 = vxpose.xlu0.b32.cont [11/16] 0.0, 128
        %2319 = vxpose.xlu0.b32.cont [12/16] 0.0, 128
        %2320 = vxpose.xlu0.b32.cont [13/16] 0.0, 128
        %2321 = vxpose.xlu0.b32.cont [14/16] 0.0, 128
        %2322 = vxpose.xlu0.b32.cont [15/16] 0.0, 128
        %2323 = vxpose.xlu0.b32.end [16/16] 0.0, 128
        %v2324 = vpop.trf.xlu0
        %v2325 = vpop.trf.xlu0
        %v2326 = vpop.trf.xlu0
        %v2327 = vpop.trf.xlu0
        %v2328 = vpop.trf.xlu0
        %v2329 = vpop.trf.xlu0
        %v2330 = vpop.trf.xlu0
        %v2331 = vpop.trf.xlu0
        %v2332 = vpop.trf.xlu0
        %v2333 = vpop.trf.xlu0
        %v2334 = vpop.trf.xlu0
        %v2335 = vpop.trf.xlu0
        %v2336 = vpop.trf.xlu0
        %v2337 = vpop.trf.xlu0
        %v2338 = vpop.trf.xlu0
        %v2339 = vpop.trf.xlu0
        %v2341 = vsel %vm1956, %v2324, 0
        %v2344 = vsel %vm1956, %v2325, 0
        %2346 = vmatprep.subr.mxu0 0.0
        %2347 = vmatpush1.msra.mxu0 %v2117
        %2348 = vmatprep.subr.mxu0 0.0
        %2349 = vmatpush1.msra.mxu0 %v2119
        %2350 = vmatprep.subr.mxu0 0.0
        %2351 = vmatpush1.msra.mxu0 0.0
        %2352 = vmatprep.subr.mxu0 0.0
        %2353 = vmatpush1.msra.mxu0 0.0
        %2354 = vmatprep.subr.mxu0 0.0
        %2355 = vmatpush1.msra.mxu0 0.0
        %2356 = vmatprep.subr.mxu0 0.0
        %2357 = vmatpush1.msra.mxu0 0.0
        %2358 = vmatprep.subr.mxu0 0.0
        %2359 = vmatpush1.msra.mxu0 0.0
        %2360 = vmatprep.subr.mxu0 0.0
        %2361 = vmatpush1.msra.mxu0 0.0
        %2362 = vmatprep.subr.mxu0 0.0
        %2363 = vmatpush1.msra.mxu0 0.0
        %2364 = vmatprep.subr.mxu0 0.0
        %2365 = vmatpush1.msra.mxu0 0.0
        %2366 = vmatprep.subr.mxu0 0.0
        %2367 = vmatpush1.msra.mxu0 0.0
        %2368 = vmatprep.subr.mxu0 0.0
        %2369 = vmatpush1.msra.mxu0 0.0
        %2370 = vmatprep.subr.mxu0 0.0
        %2371 = vmatpush1.msra.mxu0 0.0
        %2372 = vmatprep.subr.mxu0 0.0
        %2373 = vmatpush1.msra.mxu0 0.0
        %2374 = vmatprep.subr.mxu0 0.0
        %2375 = vmatpush1.msra.mxu0 0.0
        %2376 = vmatprep.subr.mxu0 0.0
        %2377 = vmatpush1.msra.mxu0 0.0
        %2378 = vmatprep.subr.mxu0 0.0
        %2379 = vmatpush1.msra.mxu0 0.0
        %2380 = vmatprep.subr.mxu0 0.0
        %2381 = vmatpush1.msra.mxu0 0.0
        %2382 = vmatprep.subr.mxu0 0.0
        %2383 = vmatpush1.msra.mxu0 0.0
        %2384 = vmatprep.subr.mxu0 0.0
        %2385 = vmatpush1.msra.mxu0 0.0
        %2386 = vmatprep.subr.mxu0 0.0
        %2387 = vmatpush1.msra.mxu0 0.0
        %2388 = vmatprep.subr.mxu0 0.0
        %2389 = vmatpush1.msra.mxu0 0.0
        %2390 = vmatprep.subr.mxu0 0.0
        %2391 = vmatpush1.msra.mxu0 0.0
        %2392 = vmatprep.subr.mxu0 0.0
        %2393 = vmatpush1.msra.mxu0 0.0
        %2394 = vmatprep.subr.mxu0 0.0
        %2395 = vmatpush1.msra.mxu0 0.0
        %2396 = vmatprep.subr.mxu0 0.0
        %2397 = vmatpush1.msra.mxu0 0.0
        %2398 = vmatprep.subr.mxu0 0.0
        %2399 = vmatpush1.msra.mxu0 0.0
        %2400 = vmatprep.subr.mxu0 0.0
        %2401 = vmatpush1.msra.mxu0 0.0
        %2402 = vmatprep.subr.mxu0 0.0
        %2403 = vmatpush1.msra.mxu0 0.0
        %2404 = vmatprep.subr.mxu0 0.0
        %2405 = vmatpush1.msra.mxu0 0.0
        %2406 = vmatprep.subr.mxu0 0.0
        %2407 = vmatpush1.msra.mxu0 0.0
        %2408 = vmatprep.subr.mxu0 0.0
        %2409 = vmatpush1.msra.mxu0 0.0
        %2410 = vmatprep.mubr.f32.mxu0 0.0
        %2411 = vmatmul.mubr.f32.gmra.mrb[0].mxu0 %v2341
        %v2412 = vpop.f32.mrb[0].mxu0
        %v2413 = vadd.f32 0.0, %v2412
        %v2414 = vpop.f32.mrb[0].mxu0
        %2415 = vmatprep.mubr.f32.mxu0 0.0
        %2416 = vmatmul.mubr.f32.gmra.mrb[0].mxu0 %v2344
        %v2417 = vpop.f32.mrb[0].mxu0
        %v2418 = vadd.f32 0.0, %v2417
        %v2419 = vpop.f32.mrb[0].mxu0
        %2420 = vdwg.mxu0
        %v2421 = vsel %vm940, %v2413, 0.0
        %2422 = vadd.xlane.f32.xlu0 %v2421
        %v2423 = vpop.xlane.xlu0 %2422
        %v2424 = vsel %vm944, %v2418, 0.0
        %2425 = vadd.xlane.f32.xlu0 %v2424
        %v2426 = vpop.xlane.xlu0 %2425
        %v2427 = vrcp.pop 4.0
        %v2428 = vmul.f32 %v2423, %v2427
        %v2429 = vmul.f32 %v2426, %v2427
        %s2430 = scalar_lea.vmem %s7, 64
        %v2431 = vld [vmem:[%s2430] sm:$0xff]
        %v2432 = vld [vmem:[%s2430 + $0x8] sm:$0xff]
        %v2433 = vld [vmem:[%s2430 + $0x10] sm:$0xff]
        %v2434 = vld [vmem:[%s2430 + $0x18] sm:$0xff]
        %v2435 = vlaneseq
        %v2436 = vshrl.u32 %v2435, 7
        %v2437 = vsub.s32 1, %v2436
        %v2438 = vrot.slane %v534, %v2437
        %v2440 = vsel %vm541, %v2300, 0
        %v2443 = vsel %vm541, %v2305, 0
        %2445 = vmatprep.subr.mxu0 0.0
        %2446 = vmatpush1.msra.mxu0 %v2431
        %2447 = vmatprep.subr.mxu0 0.0
        %2448 = vmatpush1.msra.mxu0 %v2432
        %2449 = vmatprep.subr.mxu0 0.0
        %2450 = vmatpush1.msra.mxu0 %v2433
        %2451 = vmatprep.subr.mxu0 0.0
        %2452 = vmatpush1.msra.mxu0 %v2434
        %2453 = vmatprep.subr.mxu0 0.0
        %2454 = vmatpush1.msra.mxu0 0.0
        %2455 = vmatprep.subr.mxu0 0.0
        %2456 = vmatpush1.msra.mxu0 0.0
        %2457 = vmatprep.subr.mxu0 0.0
        %2458 = vmatpush1.msra.mxu0 0.0
        %2459 = vmatprep.subr.mxu0 0.0
        %2460 = vmatpush1.msra.mxu0 0.0
        %2461 = vmatprep.subr.mxu0 0.0
        %2462 = vmatpush1.msra.mxu0 0.0
        %2463 = vmatprep.subr.mxu0 0.0
        %2464 = vmatpush1.msra.mxu0 0.0
        %2465 = vmatprep.subr.mxu0 0.0
        %2466 = vmatpush1.msra.mxu0 0.0
        %2467 = vmatprep.subr.mxu0 0.0
        %2468 = vmatpush1.msra.mxu0 0.0
        %2469 = vmatprep.subr.mxu0 0.0
        %2470 = vmatpush1.msra.mxu0 0.0
        %2471 = vmatprep.subr.mxu0 0.0
        %2472 = vmatpush1.msra.mxu0 0.0
        %2473 = vmatprep.subr.mxu0 0.0
        %2474 = vmatpush1.msra.mxu0 0.0
        %2475 = vmatprep.subr.mxu0 0.0
        %2476 = vmatpush1.msra.mxu0 0.0
        %2477 = vmatprep.subr.mxu0 0.0
        %2478 = vmatpush1.msra.mxu0 0.0
        %2479 = vmatprep.subr.mxu0 0.0
        %2480 = vmatpush1.msra.mxu0 0.0
        %2481 = vmatprep.subr.mxu0 0.0
        %2482 = vmatpush1.msra.mxu0 0.0
        %2483 = vmatprep.subr.mxu0 0.0
        %2484 = vmatpush1.msra.mxu0 0.0
        %2485 = vmatprep.subr.mxu0 0.0
        %2486 = vmatpush1.msra.mxu0 0.0
        %2487 = vmatprep.subr.mxu0 0.0
        %2488 = vmatpush1.msra.mxu0 0.0
        %2489 = vmatprep.subr.mxu0 0.0
        %2490 = vmatpush1.msra.mxu0 0.0
        %2491 = vmatprep.subr.mxu0 0.0
        %2492 = vmatpush1.msra.mxu0 0.0
        %2493 = vmatprep.subr.mxu0 0.0
        %2494 = vmatpush1.msra.mxu0 0.0
        %2495 = vmatprep.subr.mxu0 0.0
        %2496 = vmatpush1.msra.mxu0 0.0
        %2497 = vmatprep.subr.mxu0 0.0
        %2498 = vmatpush1.msra.mxu0 0.0
        %2499 = vmatprep.subr.mxu0 0.0
        %2500 = vmatpush1.msra.mxu0 0.0
        %2501 = vmatprep.subr.mxu0 0.0
        %2502 = vmatpush1.msra.mxu0 0.0
        %2503 = vmatprep.subr.mxu0 0.0
        %2504 = vmatpush1.msra.mxu0 0.0
        %2505 = vmatprep.subr.mxu0 0.0
        %2506 = vmatpush1.msra.mxu0 0.0
        %2507 = vmatprep.subr.mxu0 0.0
        %2508 = vmatpush1.msra.mxu0 0.0
        %2509 = vmatprep.mubr.f32.mxu0 0.0
        %2510 = vmatmul.mubr.f32.gmra.mrb[0].mxu0 %v2440
        %v2511 = vpop.f32.mrb[0].mxu0
        %v2512 = vadd.f32 %v2438, %v2511
        %v2513 = vpop.f32.mrb[0].mxu0
        %2514 = vmatprep.mubr.f32.mxu0 0.0
        %2515 = vmatmul.mubr.f32.gmra.mrb[0].mxu0 %v2443
        %v2516 = vpop.f32.mrb[0].mxu0
        %v2517 = vadd.f32 %v2438, %v2516
        %v2518 = vpop.f32.mrb[0].mxu0
        %2519 = vdwg.mxu0
        %v2520 = vadd.f32 %v2512, %v1462
        %v2521 = vadd.f32 %v2517, %v1463
        %v2522 = vsel %vm541, %v2520, 0.0
        %2523 = vadd.xlane.f32.xlu0 %v2522
        %v2524 = vpop.xlane.xlu0 %2523
        %vm2525 = vcmask 254976
        %v2526 = vsel %vm2525, %v2521, 0.0
        %2527 = vadd.xlane.f32.xlu0 %v2526
        %v2528 = vpop.xlane.xlu0 %2527
        %v2529 = vrcp.pop 32.0
        %v2530 = vmul.f32 %v2524, %v2529
        %v2531 = vmul.f32 %v2528, %v2529
        %v2532 = vsub.f32 %v2520, %v2530
        %v2533 = vsub.f32 %v2521, %v2531
        %v2534 = vmul.f32 %v2532, %v2532
        %v2535 = vmul.f32 %v2533, %v2533
        %v2536 = vsel %vm541, %v2534, 0.0
        %2537 = vadd.xlane.f32.xlu0 %v2536
        %v2538 = vpop.xlane.xlu0 %2537
        %v2539 = vsel %vm2525, %v2535, 0.0
        %2540 = vadd.xlane.f32.xlu0 %v2539
        %v2541 = vpop.xlane.xlu0 %2540
        %v2542 = vmul.f32 %v2538, %v2529
        %v2543 = vmul.f32 %v2541, %v2529
        %v2544 = vadd.f32 %v2542, 1e-05
        %v2545 = vadd.f32 %v2543, 1e-05
        %v2546 = vrsqrt.pop %v2544
        %v2547 = vmul.f32 %v2544, %v2546
        %vm2548 = vcmp.eq.f32.partialorder %v2544, inf
        %v2549 = vsel %vm2548, %v2544, %v2547
        %vm2550 = vcmp.eq.f32.partialorder %v2544, 0.0
        %v2551 = vand.u32 %v2544, 2147483648
        %v2552 = vsel %vm2550, %v2551, %v2549
        %v2553 = vrsqrt.pop %v2545
        %v2554 = vmul.f32 %v2545, %v2553
        %vm2555 = vcmp.eq.f32.partialorder %v2545, inf
        %v2556 = vsel %vm2555, %v2545, %v2554
        %vm2557 = vcmp.eq.f32.partialorder %v2545, 0.0
        %v2558 = vand.u32 %v2545, 2147483648
        %v2559 = vsel %vm2557, %v2558, %v2556
        %v2560 = vrcp.pop %v2552
        %v2561 = vmul.f32 %v2532, %v2560
        %v2562 = vrcp.pop %v2559
        %v2563 = vmul.f32 %v2533, %v2562
        %v2564 = vlaneseq
        %v2565 = vshrl.u32 %v2564, 7
        %v2566 = vsub.s32 2, %v2565
        %v2567 = vrot.slane %v535, %v2566
        %v2568 = vmul.f32 %v2561, %v2567
        %v2569 = vmul.f32 %v2563, %v2567
        %v2570 = vlaneseq
        %v2571 = vshrl.u32 %v2570, 7
        %v2572 = vsub.s32 3, %v2571
        %v2573 = vrot.slane %v535, %v2572
        %v2574 = vadd.f32 %v2568, %v2573
        %v2575 = vadd.f32 %v2569, %v2573
        %s2576 = scalar_lea.vmem %s7, 128
        %v2577 = vld [vmem:[%s2576] sm:$0xff]
        %v2578 = vld [vmem:[%s2576 + $0x8] sm:$0xff]
        %v2579 = vld [vmem:[%s2576 + $0x10] sm:$0xff]
        %v2580 = vld [vmem:[%s2576 + $0x18] sm:$0xff]
        %v2581 = vlaneseq
        %v2582 = vshrl.u32 %v2581, 7
        %v2583 = vsub.s32 6, %v2582
        %v2584 = vrot.slane %v534, %v2583
        %v2586 = vsel %vm541, %v2574, 0
        %v2589 = vsel %vm541, %v2575, 0
        %2591 = vmatprep.subr.mxu0 0.0
        %2592 = vmatpush1.msra.mxu0 %v2577
        %2593 = vmatprep.subr.mxu0 0.0
        %2594 = vmatpush1.msra.mxu0 %v2578
        %2595 = vmatprep.subr.mxu0 0.0
        %2596 = vmatpush1.msra.mxu0 %v2579
        %2597 = vmatprep.subr.mxu0 0.0
        %2598 = vmatpush1.msra.mxu0 %v2580
        %2599 = vmatprep.subr.mxu0 0.0
        %2600 = vmatpush1.msra.mxu0 0.0
        %2601 = vmatprep.subr.mxu0 0.0
        %2602 = vmatpush1.msra.mxu0 0.0
        %2603 = vmatprep.subr.mxu0 0.0
        %2604 = vmatpush1.msra.mxu0 0.0
        %2605 = vmatprep.subr.mxu0 0.0
        %2606 = vmatpush1.msra.mxu0 0.0
        %2607 = vmatprep.subr.mxu0 0.0
        %2608 = vmatpush1.msra.mxu0 0.0
        %2609 = vmatprep.subr.mxu0 0.0
        %2610 = vmatpush1.msra.mxu0 0.0
        %2611 = vmatprep.subr.mxu0 0.0
        %2612 = vmatpush1.msra.mxu0 0.0
        %2613 = vmatprep.subr.mxu0 0.0
        %2614 = vmatpush1.msra.mxu0 0.0
        %2615 = vmatprep.subr.mxu0 0.0
        %2616 = vmatpush1.msra.mxu0 0.0
        %2617 = vmatprep.subr.mxu0 0.0
        %2618 = vmatpush1.msra.mxu0 0.0
        %2619 = vmatprep.subr.mxu0 0.0
        %2620 = vmatpush1.msra.mxu0 0.0
        %2621 = vmatprep.subr.mxu0 0.0
        %2622 = vmatpush1.msra.mxu0 0.0
        %2623 = vmatprep.subr.mxu0 0.0
        %2624 = vmatpush1.msra.mxu0 0.0
        %2625 = vmatprep.subr.mxu0 0.0
        %2626 = vmatpush1.msra.mxu0 0.0
        %2627 = vmatprep.subr.mxu0 0.0
        %2628 = vmatpush1.msra.mxu0 0.0
        %2629 = vmatprep.subr.mxu0 0.0
        %2630 = vmatpush1.msra.mxu0 0.0
        %2631 = vmatprep.subr.mxu0 0.0
        %2632 = vmatpush1.msra.mxu0 0.0
        %2633 = vmatprep.subr.mxu0 0.0
        %2634 = vmatpush1.msra.mxu0 0.0
        %2635 = vmatprep.subr.mxu0 0.0
        %2636 = vmatpush1.msra.mxu0 0.0
        %2637 = vmatprep.subr.mxu0 0.0
        %2638 = vmatpush1.msra.mxu0 0.0
        %2639 = vmatprep.subr.mxu0 0.0
        %2640 = vmatpush1.msra.mxu0 0.0
        %2641 = vmatprep.subr.mxu0 0.0
        %2642 = vmatpush1.msra.mxu0 0.0
        %2643 = vmatprep.subr.mxu0 0.0
        %2644 = vmatpush1.msra.mxu0 0.0
        %2645 = vmatprep.subr.mxu0 0.0
        %2646 = vmatpush1.msra.mxu0 0.0
        %2647 = vmatprep.subr.mxu0 0.0
        %2648 = vmatpush1.msra.mxu0 0.0
        %2649 = vmatprep.subr.mxu0 0.0
        %2650 = vmatpush1.msra.mxu0 0.0
        %2651 = vmatprep.subr.mxu0 0.0
        %2652 = vmatpush1.msra.mxu0 0.0
        %2653 = vmatprep.subr.mxu0 0.0
        %2654 = vmatpush1.msra.mxu0 0.0
        %2655 = vmatprep.mubr.f32.mxu0 0.0
        %2656 = vmatmul.mubr.f32.gmra.mrb[0].mxu0 %v2586
        %v2657 = vpop.f32.mrb[0].mxu0
        %v2658 = vadd.f32 %v2584, %v2657
        %v2659 = vpop.f32.mrb[0].mxu0
        %2660 = vmatprep.mubr.f32.mxu0 0.0
        %2661 = vmatmul.mubr.f32.gmra.mrb[0].mxu0 %v2589
        %v2662 = vpop.f32.mrb[0].mxu0
        %v2663 = vadd.f32 %v2584, %v2662
        %v2664 = vpop.f32.mrb[0].mxu0
        %2665 = vdwg.mxu0
        %v2666 = vmax.f32 %v2658, 0.0
        %v2667 = vmax.f32 %v2663, 0.0
        %s2668 = scalar_lea.vmem %s7, 160
        %v2669 = vld [vmem:[%s2668] sm:$0xff]
        %v2670 = vld [vmem:[%s2668 + $0x8] sm:$0xff]
        %v2671 = vld [vmem:[%s2668 + $0x10] sm:$0xff]
        %v2672 = vld [vmem:[%s2668 + $0x18] sm:$0xff]
        %v2674 = vsel %vm541, %v2666, 0
        %v2677 = vsel %vm541, %v2667, 0
        %2679 = vmatprep.subr.mxu0 0.0
        %2680 = vmatpush1.msra.mxu0 %v2669
        %2681 = vmatprep.subr.mxu0 0.0
        %2682 = vmatpush1.msra.mxu0 %v2670
        %2683 = vmatprep.subr.mxu0 0.0
        %2684 = vmatpush1.msra.mxu0 %v2671
        %2685 = vmatprep.subr.mxu0 0.0
        %2686 = vmatpush1.msra.mxu0 %v2672
        %2687 = vmatprep.subr.mxu0 0.0
        %2688 = vmatpush1.msra.mxu0 0.0
        %2689 = vmatprep.subr.mxu0 0.0
        %2690 = vmatpush1.msra.mxu0 0.0
        %2691 = vmatprep.subr.mxu0 0.0
        %2692 = vmatpush1.msra.mxu0 0.0
        %2693 = vmatprep.subr.mxu0 0.0
        %2694 = vmatpush1.msra.mxu0 0.0
        %2695 = vmatprep.subr.mxu0 0.0
        %2696 = vmatpush1.msra.mxu0 0.0
        %2697 = vmatprep.subr.mxu0 0.0
        %2698 = vmatpush1.msra.mxu0 0.0
        %2699 = vmatprep.subr.mxu0 0.0
        %2700 = vmatpush1.msra.mxu0 0.0
        %2701 = vmatprep.subr.mxu0 0.0
        %2702 = vmatpush1.msra.mxu0 0.0
        %2703 = vmatprep.subr.mxu0 0.0
        %2704 = vmatpush1.msra.mxu0 0.0
        %2705 = vmatprep.subr.mxu0 0.0
        %2706 = vmatpush1.msra.mxu0 0.0
        %2707 = vmatprep.subr.mxu0 0.0
        %2708 = vmatpush1.msra.mxu0 0.0
        %2709 = vmatprep.subr.mxu0 0.0
        %2710 = vmatpush1.msra.mxu0 0.0
        %2711 = vmatprep.subr.mxu0 0.0
        %2712 = vmatpush1.msra.mxu0 0.0
        %2713 = vmatprep.subr.mxu0 0.0
        %2714 = vmatpush1.msra.mxu0 0.0
        %2715 = vmatprep.subr.mxu0 0.0
        %2716 = vmatpush1.msra.mxu0 0.0
        %2717 = vmatprep.subr.mxu0 0.0
        %2718 = vmatpush1.msra.mxu0 0.0
        %2719 = vmatprep.subr.mxu0 0.0
        %2720 = vmatpush1.msra.mxu0 0.0
        %2721 = vmatprep.subr.mxu0 0.0
        %2722 = vmatpush1.msra.mxu0 0.0
        %2723 = vmatprep.subr.mxu0 0.0
        %2724 = vmatpush1.msra.mxu0 0.0
        %2725 = vmatprep.subr.mxu0 0.0
        %2726 = vmatpush1.msra.mxu0 0.0
        %2727 = vmatprep.subr.mxu0 0.0
        %2728 = vmatpush1.msra.mxu0 0.0
        %2729 = vmatprep.subr.mxu0 0.0
        %2730 = vmatpush1.msra.mxu0 0.0
        %2731 = vmatprep.subr.mxu0 0.0
        %2732 = vmatpush1.msra.mxu0 0.0
        %2733 = vmatprep.subr.mxu0 0.0
        %2734 = vmatpush1.msra.mxu0 0.0
        %2735 = vmatprep.subr.mxu0 0.0
        %2736 = vmatpush1.msra.mxu0 0.0
        %2737 = vmatprep.subr.mxu0 0.0
        %2738 = vmatpush1.msra.mxu0 0.0
        %2739 = vmatprep.subr.mxu0 0.0
        %2740 = vmatpush1.msra.mxu0 0.0
        %2741 = vmatprep.subr.mxu0 0.0
        %2742 = vmatpush1.msra.mxu0 0.0
        %2743 = vmatprep.mubr.f32.mxu0 0.0
        %2744 = vmatmul.mubr.f32.gmra.mrb[0].mxu0 %v2674
        %v2745 = vpop.f32.mrb[0].mxu0
        %v2746 = vadd.f32 0.0, %v2745
        %v2747 = vpop.f32.mrb[0].mxu0
        %2748 = vmatprep.mubr.f32.mxu0 0.0
        %2749 = vmatmul.mubr.f32.gmra.mrb[0].mxu0 %v2677
        %v2750 = vpop.f32.mrb[0].mxu0
        %v2751 = vadd.f32 0.0, %v2750
        %v2752 = vpop.f32.mrb[0].mxu0
        %2753 = vdwg.mxu0
        %v2754 = vadd.f32 %v2574, %v2746
        %v2755 = vadd.f32 %v2575, %v2751
        %v2756 = vlaneseq
        %v2757 = vshrl.u32 %v2756, 7
        %v2758 = vsub.s32 7, %v2757
        %v2759 = vrot.slane %v534, %v2758
        %v2760 = vadd.f32 %v2754, %v2759
        %v2761 = vadd.f32 %v2755, %v2759
        %v2762 = vsel %vm541, %v2760, 0.0
        %2763 = vadd.xlane.f32.xlu0 %v2762
        %v2764 = vpop.xlane.xlu0 %2763
        %v2765 = vsel %vm2525, %v2761, 0.0
        %2766 = vadd.xlane.f32.xlu0 %v2765
        %v2767 = vpop.xlane.xlu0 %2766
        %v2768 = vmul.f32 %v2764, %v2529
        %v2769 = vmul.f32 %v2767, %v2529
        %v2770 = vsub.f32 %v2760, %v2768
        %v2771 = vsub.f32 %v2761, %v2769
        %v2772 = vmul.f32 %v2770, %v2770
        %v2773 = vmul.f32 %v2771, %v2771
        %v2774 = vsel %vm541, %v2772, 0.0
        %2775 = vadd.xlane.f32.xlu0 %v2774
        %v2776 = vpop.xlane.xlu0 %2775
        %v2777 = vsel %vm2525, %v2773, 0.0
        %2778 = vadd.xlane.f32.xlu0 %v2777
        %v2779 = vpop.xlane.xlu0 %2778
        %v2780 = vmul.f32 %v2776, %v2529
        %v2781 = vmul.f32 %v2779, %v2529
        %v2782 = vadd.f32 %v2780, 1e-05
        %v2783 = vadd.f32 %v2781, 1e-05
        %v2784 = vrsqrt.pop %v2782
        %v2785 = vmul.f32 %v2782, %v2784
        %vm2786 = vcmp.eq.f32.partialorder %v2782, inf
        %v2787 = vsel %vm2786, %v2782, %v2785
        %vm2788 = vcmp.eq.f32.partialorder %v2782, 0.0
        %v2789 = vand.u32 %v2782, 2147483648
        %v2790 = vsel %vm2788, %v2789, %v2787
        %v2791 = vrsqrt.pop %v2783
        %v2792 = vmul.f32 %v2783, %v2791
        %vm2793 = vcmp.eq.f32.partialorder %v2783, inf
        %v2794 = vsel %vm2793, %v2783, %v2792
        %vm2795 = vcmp.eq.f32.partialorder %v2783, 0.0
        %v2796 = vand.u32 %v2783, 2147483648
        %v2797 = vsel %vm2795, %v2796, %v2794
        %v2798 = vrcp.pop %v2790
        %v2799 = vmul.f32 %v2770, %v2798
        %v2800 = vrcp.pop %v2797
        %v2801 = vmul.f32 %v2771, %v2800
        %v2802 = vlaneseq
        %v2803 = vshrl.u32 %v2802, 7
        %v2804 = vsub.s32 4, %v2803
        %v2805 = vrot.slane %v535, %v2804
        %v2806 = vmul.f32 %v2799, %v2805
        %v2807 = vmul.f32 %v2801, %v2805
        %v2808 = vlaneseq
        %v2809 = vshrl.u32 %v2808, 7
        %v2810 = vsub.s32 5, %v2809
        %v2811 = vrot.slane %v535, %v2810
        %v2812 = vadd.f32 %v2806, %v2811
        %v2813 = vadd.f32 %v2807, %v2811
        %s2814 = scalar_lea.vmem %s7, 96
        %v2815 = vld [vmem:[%s2814] sm:$0xff]
        %v2816 = vld [vmem:[%s2814 + $0x8] sm:$0xff]
        %v2817 = vld [vmem:[%s2814 + $0x10] sm:$0xff]
        %v2818 = vld [vmem:[%s2814 + $0x18] sm:$0xff]
        %v2819 = vlaneseq
        %v2820 = vshrl.u32 %v2819, 7
        %v2821 = vsub.s32 3, %v2820
        %v2822 = vrot.slane %v534, %v2821
        %v2824 = vsel %vm541, %v1822, 0
        %v2827 = vsel %vm541, %v1823, 0
        %2829 = vmatprep.subr.mxu0 0.0
        %2830 = vmatpush1.msra.mxu0 %v2815
        %2831 = vmatprep.subr.mxu0 0.0
        %2832 = vmatpush1.msra.mxu0 %v2816
        %2833 = vmatprep.subr.mxu0 0.0
        %2834 = vmatpush1.msra.mxu0 %v2817
        %2835 = vmatprep.subr.mxu0 0.0
        %2836 = vmatpush1.msra.mxu0 %v2818
        %2837 = vmatprep.subr.mxu0 0.0
        %2838 = vmatpush1.msra.mxu0 0.0
        %2839 = vmatprep.subr.mxu0 0.0
        %2840 = vmatpush1.msra.mxu0 0.0
        %2841 = vmatprep.subr.mxu0 0.0
        %2842 = vmatpush1.msra.mxu0 0.0
        %2843 = vmatprep.subr.mxu0 0.0
        %2844 = vmatpush1.msra.mxu0 0.0
        %2845 = vmatprep.subr.mxu0 0.0
        %2846 = vmatpush1.msra.mxu0 0.0
        %2847 = vmatprep.subr.mxu0 0.0
        %2848 = vmatpush1.msra.mxu0 0.0
        %2849 = vmatprep.subr.mxu0 0.0
        %2850 = vmatpush1.msra.mxu0 0.0
        %2851 = vmatprep.subr.mxu0 0.0
        %2852 = vmatpush1.msra.mxu0 0.0
        %2853 = vmatprep.subr.mxu0 0.0
        %2854 = vmatpush1.msra.mxu0 0.0
        %2855 = vmatprep.subr.mxu0 0.0
        %2856 = vmatpush1.msra.mxu0 0.0
        %2857 = vmatprep.subr.mxu0 0.0
        %2858 = vmatpush1.msra.mxu0 0.0
        %2859 = vmatprep.subr.mxu0 0.0
        %2860 = vmatpush1.msra.mxu0 0.0
        %2861 = vmatprep.subr.mxu0 0.0
        %2862 = vmatpush1.msra.mxu0 0.0
        %2863 = vmatprep.subr.mxu0 0.0
        %2864 = vmatpush1.msra.mxu0 0.0
        %2865 = vmatprep.subr.mxu0 0.0
        %2866 = vmatpush1.msra.mxu0 0.0
        %2867 = vmatprep.subr.mxu0 0.0
        %2868 = vmatpush1.msra.mxu0 0.0
        %2869 = vmatprep.subr.mxu0 0.0
        %2870 = vmatpush1.msra.mxu0 0.0
        %2871 = vmatprep.subr.mxu0 0.0
        %2872 = vmatpush1.msra.mxu0 0.0
        %2873 = vmatprep.subr.mxu0 0.0
        %2874 = vmatpush1.msra.mxu0 0.0
        %2875 = vmatprep.subr.mxu0 0.0
        %2876 = vmatpush1.msra.mxu0 0.0
        %2877 = vmatprep.subr.mxu0 0.0
        %2878 = vmatpush1.msra.mxu0 0.0
        %2879 = vmatprep.subr.mxu0 0.0
        %2880 = vmatpush1.msra.mxu0 0.0
        %2881 = vmatprep.subr.mxu0 0.0
        %2882 = vmatpush1.msra.mxu0 0.0
        %2883 = vmatprep.subr.mxu0 0.0
        %2884 = vmatpush1.msra.mxu0 0.0
        %2885 = vmatprep.subr.mxu0 0.0
        %2886 = vmatpush1.msra.mxu0 0.0
        %2887 = vmatprep.subr.mxu0 0.0
        %2888 = vmatpush1.msra.mxu0 0.0
        %2889 = vmatprep.subr.mxu0 0.0
        %2890 = vmatpush1.msra.mxu0 0.0
        %2891 = vmatprep.subr.mxu0 0.0
        %2892 = vmatpush1.msra.mxu0 0.0
        %2893 = vmatprep.mubr.f32.mxu0 0.0
        %2894 = vmatmul.mubr.f32.gmra.mrb[0].mxu0 %v2824
        %v2895 = vpop.f32.mrb[0].mxu0
        %v2896 = vadd.f32 %v2822, %v2895
        %v2897 = vpop.f32.mrb[0].mxu0
        %2898 = vmatprep.mubr.f32.mxu0 0.0
        %2899 = vmatmul.mubr.f32.gmra.mrb[0].mxu0 %v2827
        %v2900 = vpop.f32.mrb[0].mxu0
        %v2901 = vadd.f32 %v2822, %v2900
        %v2902 = vpop.f32.mrb[0].mxu0
        %2903 = vdwg.mxu0
        %v2904 = vadd.f32 %v2896, %v515
        %v2905 = vadd.f32 %v2901, %v516
        %v2906 = vsel %vm541, %v2904, 0.0
        %2907 = vadd.xlane.f32.xlu0 %v2906
        %v2908 = vpop.xlane.xlu0 %2907
        %v2909 = vsel %vm541, %v2905, 0.0
        %2910 = vadd.xlane.f32.xlu0 %v2909
        %v2911 = vpop.xlane.xlu0 %2910
        %v2912 = vmul.f32 %v2908, %v2529
        %v2913 = vmul.f32 %v2911, %v2529
        %v2914 = vsub.f32 %v2904, %v2912
        %v2915 = vsub.f32 %v2905, %v2913
        %v2916 = vmul.f32 %v2914, %v2914
        %v2917 = vmul.f32 %v2915, %v2915
        %v2918 = vsel %vm541, %v2916, 0.0
        %2919 = vadd.xlane.f32.xlu0 %v2918
        %v2920 = vpop.xlane.xlu0 %2919
        %v2921 = vsel %vm541, %v2917, 0.0
        %2922 = vadd.xlane.f32.xlu0 %v2921
        %v2923 = vpop.xlane.xlu0 %2922
        %v2924 = vmul.f32 %v2920, %v2529
        %v2925 = vmul.f32 %v2923, %v2529
        %v2926 = vadd.f32 %v2924, 1e-05
        %v2927 = vadd.f32 %v2925, 1e-05
        %v2928 = vrsqrt.pop %v2926
        %v2929 = vmul.f32 %v2926, %v2928
        %vm2930 = vcmp.eq.f32.partialorder %v2926, inf
        %v2931 = vsel %vm2930, %v2926, %v2929
        %vm2932 = vcmp.eq.f32.partialorder %v2926, 0.0
        %v2933 = vand.u32 %v2926, 2147483648
        %v2934 = vsel %vm2932, %v2933, %v2931
        %v2935 = vrsqrt.pop %v2927
        %v2936 = vmul.f32 %v2927, %v2935
        %vm2937 = vcmp.eq.f32.partialorder %v2927, inf
        %v2938 = vsel %vm2937, %v2927, %v2936
        %vm2939 = vcmp.eq.f32.partialorder %v2927, 0.0
        %v2940 = vand.u32 %v2927, 2147483648
        %v2941 = vsel %vm2939, %v2940, %v2938
        %v2942 = vrcp.pop %v2934
        %v2943 = vmul.f32 %v2914, %v2942
        %v2944 = vrcp.pop %v2941
        %v2945 = vmul.f32 %v2915, %v2944
        %v2946 = vlaneseq
        %v2947 = vshrl.u32 %v2946, 7
        %v2948 = vsub.s32 6, %v2947
        %v2949 = vrot.slane %v535, %v2948
        %v2950 = vmul.f32 %v2943, %v2949
        %v2951 = vmul.f32 %v2945, %v2949
        %v2952 = vlaneseq
        %v2953 = vshrl.u32 %v2952, 7
        %v2954 = vsub.s32 7, %v2953
        %v2955 = vrot.slane %v535, %v2954
        %v2956 = vadd.f32 %v2950, %v2955
        %v2957 = vadd.f32 %v2951, %v2955
        %s2958 = scalar_lea.vmem %s7, 192
        %v2959 = vld [vmem:[%s2958] sm:$0xff]
        %v2960 = vld [vmem:[%s2958 + $0x8] sm:$0xff]
        %v2961 = vld [vmem:[%s2958 + $0x10] sm:$0xff]
        %v2962 = vld [vmem:[%s2958 + $0x18] sm:$0xff]
        %v2963 = vlaneseq
        %v2964 = vshrl.u32 %v2963, 7
        %v2965 = vsub.s32 0, %v2964
        %v2966 = vrot.slane %v535, %v2965
        %v2968 = vsel %vm541, %v2956, 0
        %v2971 = vsel %vm541, %v2957, 0
        %2973 = vmatprep.subr.mxu0 0.0
        %2974 = vmatpush1.msra.mxu0 %v2959
        %2975 = vmatprep.subr.mxu0 0.0
        %2976 = vmatpush1.msra.mxu0 %v2960
        %2977 = vmatprep.subr.mxu0 0.0
        %2978 = vmatpush1.msra.mxu0 %v2961
        %2979 = vmatprep.subr.mxu0 0.0
        %2980 = vmatpush1.msra.mxu0 %v2962
        %2981 = vmatprep.subr.mxu0 0.0
        %2982 = vmatpush1.msra.mxu0 0.0
        %2983 = vmatprep.subr.mxu0 0.0
        %2984 = vmatpush1.msra.mxu0 0.0
        %2985 = vmatprep.subr.mxu0 0.0
        %2986 = vmatpush1.msra.mxu0 0.0
        %2987 = vmatprep.subr.mxu0 0.0
        %2988 = vmatpush1.msra.mxu0 0.0
        %2989 = vmatprep.subr.mxu0 0.0
        %2990 = vmatpush1.msra.mxu0 0.0
        %2991 = vmatprep.subr.mxu0 0.0
        %2992 = vmatpush1.msra.mxu0 0.0
        %2993 = vmatprep.subr.mxu0 0.0
        %2994 = vmatpush1.msra.mxu0 0.0
        %2995 = vmatprep.subr.mxu0 0.0
        %2996 = vmatpush1.msra.mxu0 0.0
        %2997 = vmatprep.subr.mxu0 0.0
        %2998 = vmatpush1.msra.mxu0 0.0
        %2999 = vmatprep.subr.mxu0 0.0
        %3000 = vmatpush1.msra.mxu0 0.0
        %3001 = vmatprep.subr.mxu0 0.0
        %3002 = vmatpush1.msra.mxu0 0.0
        %3003 = vmatprep.subr.mxu0 0.0
        %3004 = vmatpush1.msra.mxu0 0.0
        %3005 = vmatprep.subr.mxu0 0.0
        %3006 = vmatpush1.msra.mxu0 0.0
        %3007 = vmatprep.subr.mxu0 0.0
        %3008 = vmatpush1.msra.mxu0 0.0
        %3009 = vmatprep.subr.mxu0 0.0
        %3010 = vmatpush1.msra.mxu0 0.0
        %3011 = vmatprep.subr.mxu0 0.0
        %3012 = vmatpush1.msra.mxu0 0.0
        %3013 = vmatprep.subr.mxu0 0.0
        %3014 = vmatpush1.msra.mxu0 0.0
        %3015 = vmatprep.subr.mxu0 0.0
        %3016 = vmatpush1.msra.mxu0 0.0
        %3017 = vmatprep.subr.mxu0 0.0
        %3018 = vmatpush1.msra.mxu0 0.0
        %3019 = vmatprep.subr.mxu0 0.0
        %3020 = vmatpush1.msra.mxu0 0.0
        %3021 = vmatprep.subr.mxu0 0.0
        %3022 = vmatpush1.msra.mxu0 0.0
        %3023 = vmatprep.subr.mxu0 0.0
        %3024 = vmatpush1.msra.mxu0 0.0
        %3025 = vmatprep.subr.mxu0 0.0
        %3026 = vmatpush1.msra.mxu0 0.0
        %3027 = vmatprep.subr.mxu0 0.0
        %3028 = vmatpush1.msra.mxu0 0.0
        %3029 = vmatprep.subr.mxu0 0.0
        %3030 = vmatpush1.msra.mxu0 0.0
        %3031 = vmatprep.subr.mxu0 0.0
        %3032 = vmatpush1.msra.mxu0 0.0
        %3033 = vmatprep.subr.mxu0 0.0
        %3034 = vmatpush1.msra.mxu0 0.0
        %3035 = vmatprep.subr.mxu0 0.0
        %3036 = vmatpush1.msra.mxu0 0.0
        %3037 = vmatprep.mubr.f32.mxu0 0.0
        %3038 = vmatmul.mubr.f32.gmra.mrb[0].mxu0 %v2968
        %v3039 = vpop.f32.mrb[0].mxu0
        %v3040 = vadd.f32 %v2966, %v3039
        %v3041 = vpop.f32.mrb[0].mxu0
        %3042 = vmatprep.mubr.f32.mxu0 0.0
        %3043 = vmatmul.mubr.f32.gmra.mrb[0].mxu0 %v2971
        %v3044 = vpop.f32.mrb[0].mxu0
        %v3045 = vadd.f32 %v2966, %v3044
        %v3046 = vpop.f32.mrb[0].mxu0
        %3047 = vdwg.mxu0
        %v3048 = vmax.f32 %v3040, 0.0
        %v3049 = vmax.f32 %v3045, 0.0
        %s3050 = scalar_lea.vmem %s7, 224
        %v3051 = vld [vmem:[%s3050] sm:$0xff]
        %v3052 = vld [vmem:[%s3050 + $0x8] sm:$0xff]
        %v3053 = vld [vmem:[%s3050 + $0x10] sm:$0xff]
        %v3054 = vld [vmem:[%s3050 + $0x18] sm:$0xff]
        %v3056 = vsel %vm541, %v3048, 0
        %v3059 = vsel %vm541, %v3049, 0
        %3061 = vmatprep.subr.mxu0 0.0
        %3062 = vmatpush1.msra.mxu0 %v3051
        %3063 = vmatprep.subr.mxu0 0.0
        %3064 = vmatpush1.msra.mxu0 %v3052
        %3065 = vmatprep.subr.mxu0 0.0
        %3066 = vmatpush1.msra.mxu0 %v3053
        %3067 = vmatprep.subr.mxu0 0.0
        %3068 = vmatpush1.msra.mxu0 %v3054
        %3069 = vmatprep.subr.mxu0 0.0
        %3070 = vmatpush1.msra.mxu0 0.0
        %3071 = vmatprep.subr.mxu0 0.0
        %3072 = vmatpush1.msra.mxu0 0.0
        %3073 = vmatprep.subr.mxu0 0.0
        %3074 = vmatpush1.msra.mxu0 0.0
        %3075 = vmatprep.subr.mxu0 0.0
        %3076 = vmatpush1.msra.mxu0 0.0
        %3077 = vmatprep.subr.mxu0 0.0
        %3078 = vmatpush1.msra.mxu0 0.0
        %3079 = vmatprep.subr.mxu0 0.0
        %3080 = vmatpush1.msra.mxu0 0.0
        %3081 = vmatprep.subr.mxu0 0.0
        %3082 = vmatpush1.msra.mxu0 0.0
        %3083 = vmatprep.subr.mxu0 0.0
        %3084 = vmatpush1.msra.mxu0 0.0
        %3085 = vmatprep.subr.mxu0 0.0
        %3086 = vmatpush1.msra.mxu0 0.0
        %3087 = vmatprep.subr.mxu0 0.0
        %3088 = vmatpush1.msra.mxu0 0.0
        %3089 = vmatprep.subr.mxu0 0.0
        %3090 = vmatpush1.msra.mxu0 0.0
        %3091 = vmatprep.subr.mxu0 0.0
        %3092 = vmatpush1.msra.mxu0 0.0
        %3093 = vmatprep.subr.mxu0 0.0
        %3094 = vmatpush1.msra.mxu0 0.0
        %3095 = vmatprep.subr.mxu0 0.0
        %3096 = vmatpush1.msra.mxu0 0.0
        %3097 = vmatprep.subr.mxu0 0.0
        %3098 = vmatpush1.msra.mxu0 0.0
        %3099 = vmatprep.subr.mxu0 0.0
        %3100 = vmatpush1.msra.mxu0 0.0
        %3101 = vmatprep.subr.mxu0 0.0
        %3102 = vmatpush1.msra.mxu0 0.0
        %3103 = vmatprep.subr.mxu0 0.0
        %3104 = vmatpush1.msra.mxu0 0.0
        %3105 = vmatprep.subr.mxu0 0.0
        %3106 = vmatpush1.msra.mxu0 0.0
        %3107 = vmatprep.subr.mxu0 0.0
        %3108 = vmatpush1.msra.mxu0 0.0
        %3109 = vmatprep.subr.mxu0 0.0
        %3110 = vmatpush1.msra.mxu0 0.0
        %3111 = vmatprep.subr.mxu0 0.0
        %3112 = vmatpush1.msra.mxu0 0.0
        %3113 = vmatprep.subr.mxu0 0.0
        %3114 = vmatpush1.msra.mxu0 0.0
        %3115 = vmatprep.subr.mxu0 0.0
        %3116 = vmatpush1.msra.mxu0 0.0
        %3117 = vmatprep.subr.mxu0 0.0
        %3118 = vmatpush1.msra.mxu0 0.0
        %3119 = vmatprep.subr.mxu0 0.0
        %3120 = vmatpush1.msra.mxu0 0.0
        %3121 = vmatprep.subr.mxu0 0.0
        %3122 = vmatpush1.msra.mxu0 0.0
        %3123 = vmatprep.subr.mxu0 0.0
        %3124 = vmatpush1.msra.mxu0 0.0
        %3125 = vmatprep.mubr.f32.mxu0 0.0
        %3126 = vmatmul.mubr.f32.gmra.mrb[0].mxu0 %v3056
        %v3127 = vpop.f32.mrb[0].mxu0
        %v3128 = vadd.f32 0.0, %v3127
        %v3129 = vpop.f32.mrb[0].mxu0
        %3130 = vmatprep.mubr.f32.mxu0 0.0
        %3131 = vmatmul.mubr.f32.gmra.mrb[0].mxu0 %v3059
        %v3132 = vpop.f32.mrb[0].mxu0
        %v3133 = vadd.f32 0.0, %v3132
        %v3134 = vpop.f32.mrb[0].mxu0
        %3135 = vdwg.mxu0
        %v3136 = vadd.f32 %v2956, %v3128
        %v3137 = vadd.f32 %v2957, %v3133
        %v3138 = vlaneseq
        %v3139 = vshrl.u32 %v3138, 7
        %v3140 = vsub.s32 1, %v3139
        %v3141 = vrot.slane %v535, %v3140
        %v3142 = vadd.f32 %v3136, %v3141
        %v3143 = vadd.f32 %v3137, %v3141
        %v3144 = vsel %vm541, %v3142, 0.0
        %3145 = vadd.xlane.f32.xlu0 %v3144
        %v3146 = vpop.xlane.xlu0 %3145
        %v3147 = vsel %vm541, %v3143, 0.0
        %3148 = vadd.xlane.f32.xlu0 %v3147
        %v3149 = vpop.xlane.xlu0 %3148
        %v3150 = vmul.f32 %v3146, %v2529
        %v3151 = vmul.f32 %v3149, %v2529
        %v3152 = vsub.f32 %v3142, %v3150
        %v3153 = vsub.f32 %v3143, %v3151
        %v3154 = vmul.f32 %v3152, %v3152
        %v3155 = vmul.f32 %v3153, %v3153
        %v3156 = vsel %vm541, %v3154, 0.0
        %3157 = vadd.xlane.f32.xlu0 %v3156
        %v3158 = vpop.xlane.xlu0 %3157
        %v3159 = vsel %vm541, %v3155, 0.0
        %3160 = vadd.xlane.f32.xlu0 %v3159
        %v3161 = vpop.xlane.xlu0 %3160
        %v3162 = vmul.f32 %v3158, %v2529
        %v3163 = vmul.f32 %v3161, %v2529
        %v3164 = vadd.f32 %v3162, 1e-05
        %v3165 = vadd.f32 %v3163, 1e-05
        %v3166 = vrsqrt.pop %v3164
        %v3167 = vmul.f32 %v3164, %v3166
        %vm3168 = vcmp.eq.f32.partialorder %v3164, inf
        %v3169 = vsel %vm3168, %v3164, %v3167
        %vm3170 = vcmp.eq.f32.partialorder %v3164, 0.0
        %v3171 = vand.u32 %v3164, 2147483648
        %v3172 = vsel %vm3170, %v3171, %v3169
        %v3173 = vrsqrt.pop %v3165
        %v3174 = vmul.f32 %v3165, %v3173
        %vm3175 = vcmp.eq.f32.partialorder %v3165, inf
        %v3176 = vsel %vm3175, %v3165, %v3174
        %vm3177 = vcmp.eq.f32.partialorder %v3165, 0.0
        %v3178 = vand.u32 %v3165, 2147483648
        %v3179 = vsel %vm3177, %v3178, %v3176
        %v3180 = vrcp.pop %v3172
        %v3181 = vmul.f32 %v3152, %v3180
        %v3182 = vrcp.pop %v3179
        %v3183 = vmul.f32 %v3153, %v3182
        %v3184 = vlaneseq
        %v3185 = vshrl.u32 %v3184, 7
        %v3186 = vsub.s32 0, %v3185
        %v3187 = vrot.slane %v536, %v3186
        %v3188 = vmul.f32 %v3181, %v3187
        %v3189 = vmul.f32 %v3183, %v3187
        %v3190 = vlaneseq
        %v3191 = vshrl.u32 %v3190, 7
        %v3192 = vsub.s32 1, %v3191
        %v3193 = vrot.slane %v536, %v3192
        %v3194 = vadd.f32 %v3188, %v3193
        %v3195 = vadd.f32 %v3189, %v3193
        %3196 = vst.msk [vmem:[%s477] sm:$0xff] %vm541, %v3194
        %3197 = vst.msk [vmem:[%s477 + $0x8] sm:$0xff] %vm541, %v3195
        %v3198 = vsel %vm541, %v2812, 0.0
        %v3199 = vsel %vm2525, %v2813, 0.0
        %v3200 = vadd.f32 %v3198, %v3199
        %3201 = vadd.xlane.f32.xlu0 %v3200
        %v3202 = vpop.xlane.xlu0 %3201
        %v3203 = vrot.slane %v3202, 4
        %v3204 = vadd.f32 %v3202, %v3203
        %v3205 = vrot.slane %v3204, 2
        %v3206 = vadd.f32 %v3204, %v3205
        %v3207 = vrot.slane %v3206, 1
        %v3208 = vadd.f32 %v3206, %v3207
        %s3209 = vtos %v3208
        %v3210 = vstv %s3209
        %v3211 = vrcp.pop 320.0
        %v3212 = vmul.f32 %v3210, %v3211
        %v3213 = vsub.f32 %v2812, %v3212
        %v3214 = vsub.f32 %v2813, %v3212
        %v3215 = vmul.f32 %v3213, %v3213
        %v3216 = vmul.f32 %v3214, %v3214
        %v3217 = vsel %vm541, %v3215, 0.0
        %v3218 = vsel %vm2525, %v3216, 0.0
        %v3219 = vadd.f32 %v3217, %v3218
        %3220 = vadd.xlane.f32.xlu0 %v3219
        %v3221 = vpop.xlane.xlu0 %3220
        %v3222 = vrot.slane %v3221, 4
        %v3223 = vadd.f32 %v3221, %v3222
        %v3224 = vrot.slane %v3223, 2
        %v3225 = vadd.f32 %v3223, %v3224
        %v3226 = vrot.slane %v3225, 1
        %v3227 = vadd.f32 %v3225, %v3226
        %s3228 = vtos %v3227
        %v3229 = vstv %s3228
        %v3230 = vmul.f32 %v3229, %v3211
        %v3231 = vadd.f32 %v3230, 1e-05
        %v3232 = vrsqrt.pop %v3231
        %v3233 = vmul.f32 %v3231, %v3232
        %vm3234 = vcmp.eq.f32.partialorder %v3231, inf
        %v3235 = vsel %vm3234, %v3231, %v3233
        %vm3236 = vcmp.eq.f32.partialorder %v3231, 0.0
        %v3237 = vand.u32 %v3231, 2147483648
        %v3238 = vsel %vm3236, %v3237, %v3235
        %v3239 = vrcp.pop %v3238
        %v3240 = vmul.f32 %v3213, %v3239
        %v3241 = vmul.f32 %v3214, %v3239
        %v3242 = vlaneseq
        %v3243 = vshrl.u32 %v3242, 7
        %v3244 = vsub.s32 2, %v3243
        %v3245 = vrot.slane %v536, %v3244
        %v3246 = vmul.f32 %v3240, %v3245
        %v3247 = vmul.f32 %v3241, %v3245
        %v3248 = vlaneseq
        %v3249 = vshrl.u32 %v3248, 7
        %v3250 = vsub.s32 3, %v3249
        %v3251 = vrot.slane %v536, %v3250
        %v3252 = vadd.f32 %v3246, %v3251
        %v3253 = vadd.f32 %v3247, %v3251
        %vm3254 = vcmp.gt.f32.partialorder %v3252, 0.0
        %vm3255 = vcmp.gt.f32.partialorder %v3253, 0.0
        %v3256 = vmul.f32 %v3252, 1.442695
        %v3257 = vpow.pop %v3256
        %v3258 = vmul.f32 %v3253, 1.442695
        %v3259 = vpow.pop %v3258
        %v3260 = vsub.f32 %v3257, 1.0
        %v3261 = vsub.f32 %v3259, 1.0
        %v3262 = vsel %vm3254, %v3252, %v3260
        %v3263 = vsel %vm3255, %v3253, %v3261
        %v3264 = vsel %vm541, %v3262, %v2428
        %v3265 = vsel %vm541, %v3263, %v2429
        %vm3266 = vcmask 523264
        %3267 = vst.msk [vmem:[%s512] sm:$0xff] %vm3266, %v3264
        %vm3268 = vcmask 517120
        %3269 = vst.msk [vmem:[%s512 + $0x8] sm:$0x3] %vm3268, %v3265
        %p3270 = scmp.lt.s32.totalorder %s27, 1
        %s3271 = scalar_select %p3270, %s27, 1
        %s3272 = smul.addr %s3271, 2
        %s3273 = smul.addr %s3272, 8
        %s3274 = scalar_lea.vmem %s10, %s3273
        %s3275 = sand.u32 %s301, 1
        %s3276 = scalar_lea.sflag [#allocation4], %s3275
        %s3277 = sand.u32 %s301, 1
        %s3278 = smul.addr %s3277, 16
        %s3279 = scalar_lea.vmem [#allocation5], %s3278
        // Predicated region
        $region65: #{tpu_custom_call.1} parent=59 // pred_check
          %p3280 = pneg %p285
        $region66: #{tpu_custom_call.1} parent=59 // pred_check_branch
          %3282 = sbr.rel (%p3280) target = $region68
        $region67: #{tpu_custom_call.1} parent=59 // pred_region
          _
        $region68: #{tpu_custom_call.1} parent=59 // pred_fallthru
          _
        // Predicated region
        $region69: #{tpu_custom_call.1} parent=59 // pred_check
          %p3283 = pneg %p311
        $region70: #{tpu_custom_call.1} parent=59 // pred_check_branch
          %3285 = sbr.rel (%p3283) target = $region72
        $region71: #{tpu_custom_call.1} parent=59 // pred_region
          %s3287 = ssub.s32 256, 256
          %3288 = vsyncadd %s3276, %s3287
          %s3289 = smul.addr %s27, 2
          %s3290 = smul.addr %s3289, 128
          %s3291 = scalar_lea.hbm %s11, %s3290
          %s3292 = sshll.u32 %s3279, 4
          %s3293 = int_to_ptr.vmem [resolvable:$true] %s3292
          %3298 = dma.vmem_to_hbm [thread:$0]  %s3293, 256, %s3291, %s3276, 128, 128, 8
        $region72: #{tpu_custom_call.1} parent=59 // pred_fallthru
          _
      $region60: #{tpu_custom_call.1} parent=5 // pred_fallthru
        _
      %p3299 = scmp.le.s32.totalorder 2, %s22
      // Predicated region
      $region73: #{tpu_custom_call.1} parent=5 // pred_check
        %p3300 = pneg %p3299
      $region74: #{tpu_custom_call.1} parent=5 // pred_check_branch
        %3302 = sbr.rel (%p3300) target = $region76
      $region75: #{tpu_custom_call.1} parent=5 // pred_region
        %s3303 = ssub.s32 %s22, 2
        // Predicated region
        $region77: #{tpu_custom_call.1} parent=75 // pred_check
          %p3304 = pneg %p291
        $region78: #{tpu_custom_call.1} parent=75 // pred_check_branch
          %3306 = sbr.rel (%p3304) target = $region80
        $region79: #{tpu_custom_call.1} parent=75 // pred_region
          %p3307 = scmp.lt.s32.totalorder %s28, 1
          %s3308 = scalar_select %p3307, %s28, 1
          %s3309 = smul.addr %s3308, 2
          %s3310 = smul.addr %s3309, 8
          %s3311 = scalar_lea.vmem %s10, %s3310
        $region80: #{tpu_custom_call.1} parent=75 // pred_fallthru
          _
        // Predicated region
        $region81: #{tpu_custom_call.1} parent=75 // pred_check
          %p3312 = pneg %p317
        $region82: #{tpu_custom_call.1} parent=75 // pred_check_branch
          %3314 = sbr.rel (%p3312) target = $region84
        $region83: #{tpu_custom_call.1} parent=75 // pred_region
          %s3315 = sand.u32 %s302, 1
          %s3316 = scalar_lea.sflag [#allocation4], %s3315
          %s3317 = sand.u32 %s302, 1
          %s3318 = smul.addr %s3317, 16
          %s3319 = scalar_lea.vmem [#allocation5], %s3318
          %3320 = dma.done %s3316, 256
        $region84: #{tpu_custom_call.1} parent=75 // pred_fallthru
          _
      $region76: #{tpu_custom_call.1} parent=5 // pred_fallthru
        _
    $region6: #{tpu_custom_call.1} parent=1 // loop_footer
      %s26 = sadd.s32 1, %s22
    $region7: #{tpu_custom_call.1} parent=1 // loop_footer_branch
      %21 = sbr.rel target = $region3
    $region8: #{tpu_custom_call.1} parent=1 // loop_exit
      _
    %3321 = vsyncpa [#allocation3], 1
    %s3322 = scalar_lea.sflag [#allocation3], 1
    %3323 = vsyncpa %s3322, 1
    %3324 = vsyncpa [#allocation4], 1
    %s3325 = scalar_lea.sflag [#allocation4], 1
    %3326 = vsyncpa %s3325, 1

</llo_original>
